<compile_context>
chip_gen: v5e
topology: v5e:2x2
jax: 0.10.0
libtpu: 0.0.40
codegen_flags: <defaults>
</compile_context>

<pallas_src>
import jax
import jax.numpy as jnp
from jax.experimental import pallas as pl
from jax.experimental.pallas import tpu as pltpu

NT_DIMS = (((1,), (1,)), ((), ()))   # contract last dims:   A @ B^T
TN_DIMS = (((0,), (0,)), ((), ()))   # contract first dims:  A^T @ B
CQ_PAD = 8                           # PAM q/k channel dim padded up from inter//8


# ------------------------------- fused kernel --------------------------------

def _make_danet_kernel(W, inter):
    def kernel(x_ref, masks_ref, w5a_ref, w5c_ref, w51_ref, w52_ref,
               bnsc_ref, bnsh_ref, wqkv_ref, bqkv_ref, w8_ref, b8_ref,
               gam_ref, o_ref):
        x = x_ref[0]                     # (Cin, HW) f32
        masks = masks_ref[...]           # (9, HW)  f32 {0,1} per-tap validity

        def shift_flat(a, s):
            # out[:, i] = a[:, i + s] (wrapping); wrapped lanes are masked after.
            if s == 0:
                return a
            return jnp.concatenate([a[:, s:], a[:, :s]], axis=1)

        def conv3x3_bn_relu(act, w_ref, bn_row):
            # act: (c_in, HW) f32;  w_ref: (inter, 9*c_in) bf16.
            taps = []
            for t in range(9):
                ry, rx = t // 3 - 1, t % 3 - 1
                taps.append(shift_flat(act, ry * W + rx) * masks[t:t + 1, :])
            cols = jnp.concatenate(taps, axis=0).astype(jnp.bfloat16)     # (9*c_in, HW)
            y = jnp.dot(w_ref[...], cols, preferred_element_type=jnp.float32)
            scale = bnsc_ref[bn_row:bn_row + inter, :]                    # (inter, 1)
            shift = bnsh_ref[bn_row:bn_row + inter, :]
            return jnp.maximum(y * scale + shift, 0.0)                    # (inter, HW) f32

        # ---------------- position-attention branch ----------------
        feat1 = conv3x3_bn_relu(x, w5a_ref, 0)
        qkv = jnp.dot(wqkv_ref[...], feat1,
                      preferred_element_type=jnp.float32) + bqkv_ref[...]
        q = qkv[0:CQ_PAD]                     # padded rows are exactly zero
        k = qkv[CQ_PAD:2 * CQ_PAD]
        v = qkv[2 * CQ_PAD:]                  # (inter, HW)
        energy = jax.lax.dot_general(q, k, TN_DIMS,
                                     preferred_element_type=jnp.float32)  # (HW, HW)
        p = jnp.exp(energy - jnp.max(energy, axis=-1, keepdims=True))
        att = p * pl.reciprocal(jnp.sum(p, axis=-1, keepdims=True), approx=True)
        pam = jax.lax.dot_general(v, att, NT_DIMS,
                                  preferred_element_type=jnp.float32)     # (inter, HW)
        sa_feat = gam_ref[0] * pam + feat1
        sa_conv = conv3x3_bn_relu(sa_feat, w51_ref, 2 * inter)

        # ---------------- channel-attention branch ----------------
        feat2 = conv3x3_bn_relu(x, w5c_ref, inter)
        energy_c = jax.lax.dot_general(feat2, feat2, NT_DIMS,
                                       preferred_element_type=jnp.float32)  # (inter, inter)
        energy_n = jnp.max(energy_c, axis=-1, keepdims=True) - energy_c
        pc = jnp.exp(energy_n - jnp.max(energy_n, axis=-1, keepdims=True))
        att_c = pc * pl.reciprocal(jnp.sum(pc, axis=-1, keepdims=True), approx=True)
        cam = jnp.dot(att_c, feat2, preferred_element_type=jnp.float32)     # (inter, HW)
        sc_feat = gam_ref[1] * cam + feat2
        sc_conv = conv3x3_bn_relu(sc_feat, w52_ref, 3 * inter)

        # ---------------- fuse + final 1x1 conv (conv8) ----------------
        feat_sum = sa_conv + sc_conv
        o_ref[0] = jnp.dot(w8_ref[...], feat_sum,
                           preferred_element_type=jnp.float32) + b8_ref[...]

    return kernel


# ----------------------------- host-side packing ------------------------------

def _tap_masks(H, W):
    h = jnp.arange(H * W, dtype=jnp.int32) // W
    w = jnp.arange(H * W, dtype=jnp.int32) % W
    rows = []
    for t in range(9):
        ry, rx = t // 3 - 1, t % 3 - 1
        valid = (h + ry >= 0) & (h + ry < H) & (w + rx >= 0) & (w + rx < W)
        rows.append(valid.astype(jnp.float32))
    return jnp.stack(rows, axis=0)                         # (9, HW)


def _pack_conv_weight(w_hwio):
    kh, kw, ci, co = w_hwio.shape
    w = jnp.transpose(w_hwio.reshape(kh * kw, ci, co), (2, 0, 1))
    return w.reshape(co, kh * kw * ci).astype(jnp.bfloat16)   # (Cout, 9*Cin)


def _pack_qkv(p, inter):
    cq = p["wq"].shape[0]
    rows = 2 * CQ_PAD + inter
    w = jnp.zeros((rows, inter), jnp.float32)
    w = w.at[:cq].set(p["wq"]).at[CQ_PAD:CQ_PAD + cq].set(p["wk"])
    w = w.at[2 * CQ_PAD:].set(p["wv"])
    b = jnp.zeros((rows,), jnp.float32)
    b = b.at[:cq].set(p["bq"]).at[CQ_PAD:CQ_PAD + cq].set(p["bk"])
    b = b.at[2 * CQ_PAD:].set(p["bv"])
    return w, b.reshape(rows, 1)


def danet_head_forward(x_nchw, p):
    B, cin, H, W = x_nchw.shape
    inter = p["w5a"].shape[-1]
    out_ch = p["w8"].shape[0]
    HW = H * W

    x_flat = x_nchw.reshape(B, cin, HW)                    # NCHW -> (B, C, HW), no transpose
    masks = _tap_masks(H, W)
    w5a, w5c = _pack_conv_weight(p["w5a"]), _pack_conv_weight(p["w5c"])
    w51, w52 = _pack_conv_weight(p["w51"]), _pack_conv_weight(p["w52"])
    bn_scale = jnp.concatenate([p["bn5a"][0], p["bn5c"][0],
                                p["bn51"][0], p["bn52"][0]]).reshape(-1, 1)
    bn_shift = jnp.concatenate([p["bn5a"][1], p["bn5c"][1],
                                p["bn51"][1], p["bn52"][1]]).reshape(-1, 1)
    w_qkv, b_qkv = _pack_qkv(p, inter)
    w8 = p["w8"].astype(jnp.float32)
    b8 = p["b8"].reshape(out_ch, 1)
    gammas = jnp.stack([p["gamma_pam"], p["gamma_cam"]]).astype(jnp.float32)

    rep = lambda b: (0, 0)
    out = pl.pallas_call(
        _make_danet_kernel(W, inter),
        out_shape=jax.ShapeDtypeStruct((B, out_ch, HW), jnp.float32),
        grid=(B,),
        in_specs=[
            pl.BlockSpec((1, cin, HW), lambda b: (b, 0, 0)),      # x (per batch)
            pl.BlockSpec((9, HW), rep),                           # 3x3 tap masks
            pl.BlockSpec((inter, 9 * cin), rep),                  # w5a (bf16)
            pl.BlockSpec((inter, 9 * cin), rep),                  # w5c (bf16)
            pl.BlockSpec((inter, 9 * inter), rep),                # w51 (bf16)
            pl.BlockSpec((inter, 9 * inter), rep),                # w52 (bf16)
            pl.BlockSpec((4 * inter, 1), rep),                    # folded BN scales
            pl.BlockSpec((4 * inter, 1), rep),                    # folded BN shifts
            pl.BlockSpec((2 * CQ_PAD + inter, inter), rep),       # fused q|k|v weight
            pl.BlockSpec((2 * CQ_PAD + inter, 1), rep),           # fused q|k|v bias
            pl.BlockSpec((out_ch, inter), rep),                   # w8 (conv8 1x1)
            pl.BlockSpec((out_ch, 1), rep),                       # b8
            pl.BlockSpec(memory_space=pltpu.MemorySpace.SMEM),    # [gamma_pam, gamma_cam]
        ],
        out_specs=pl.BlockSpec((1, out_ch, HW), lambda b: (b, 0, 0)),
        compiler_params=pltpu.CompilerParams(
            dimension_semantics=("parallel",),
            vmem_limit_bytes=32 * 1024 * 1024,
        ),
    )(x_flat, masks, w5a, w5c, w51, w52, bn_scale, bn_shift,
      w_qkv, b_qkv, w8, b8, gammas)

    return out.reshape(B, out_ch, H, W)                    # NCHW


# --------------------------- parameters & reference ---------------------------

def init_params(key, in_ch, out_ch):
    inter = in_ch // 4
    cq = max(inter // 8, 1)
    ks = iter(jax.random.split(key, 24))

    def nrm(k, shape):
        return 0.1 * jax.random.normal(k, shape, jnp.float32)

    def bn(k, c):
        k1, k2, k3, k4 = jax.random.split(k, 4)
        gamma = 1.0 + 0.1 * jax.random.normal(k1, (c,), jnp.float32)
        beta = 0.1 * jax.random.normal(k2, (c,), jnp.float32)
        mean = 0.1 * jax.random.normal(k3, (c,), jnp.float32)
        var = jax.random.uniform(k4, (c,), jnp.float32, minval=0.5, maxval=1.5)
        scale = gamma / jnp.sqrt(var + 1e-5)
        return scale, beta - mean * scale

    p = {}
    p["w5a"], p["bn5a"] = nrm(next(ks), (3, 3, in_ch, inter)), bn(next(ks), inter)
    p["w5c"], p["bn5c"] = nrm(next(ks), (3, 3, in_ch, inter)), bn(next(ks), inter)
    p["wq"], p["bq"] = nrm(next(ks), (cq, inter)), nrm(next(ks), (cq,))
    p["wk"], p["bk"] = nrm(next(ks), (cq, inter)), nrm(next(ks), (cq,))
    p["wv"], p["bv"] = nrm(next(ks), (inter, inter)), nrm(next(ks), (inter,))
    p["gamma_pam"] = jnp.float32(0.5)   # torch inits 0; nonzero so attention is exercised
    p["gamma_cam"] = jnp.float32(0.5)
    p["w51"], p["bn51"] = nrm(next(ks), (3, 3, inter, inter)), bn(next(ks), inter)
    p["w52"], p["bn52"] = nrm(next(ks), (3, 3, inter, inter)), bn(next(ks), inter)
    p["w8"], p["b8"] = nrm(next(ks), (out_ch, inter)), nrm(next(ks), (out_ch,))
    return p


_HI = jax.lax.Precision.HIGHEST


def ref_forward(x_nchw, p, conv_dtype=jnp.float32):
    """Pure-JAX reference.  conv_dtype=bf16 emulates the kernel's bf16 conv matmuls."""
    prec = _HI if conv_dtype == jnp.float32 else jax.lax.Precision.DEFAULT
    x = jnp.transpose(x_nchw, (0, 2, 3, 1))                       # NHWC

    def conv_bn_relu(a, w, scale, shift):
        y = jax.lax.conv_general_dilated(
            a.astype(conv_dtype), w.astype(conv_dtype), (1, 1), ((1, 1), (1, 1)),
            dimension_numbers=("NHWC", "HWIO", "NHWC"),
            preferred_element_type=jnp.float32, precision=prec)
        return jnp.maximum(y * scale + shift, 0.0)

    B, H, W, _ = x.shape
    feat1 = conv_bn_relu(x, p["w5a"], *p["bn5a"])
    C = feat1.shape[-1]
    f1 = feat1.reshape(B, H * W, C)
    q = jnp.einsum("bnc,qc->bnq", f1, p["wq"], precision=_HI) + p["bq"]
    k = jnp.einsum("bnc,qc->bnq", f1, p["wk"], precision=_HI) + p["bk"]
    v = jnp.einsum("bnc,vc->bnv", f1, p["wv"], precision=_HI) + p["bv"]
    att = jax.nn.softmax(jnp.einsum("bnq,bmq->bnm", q, k, precision=_HI), axis=-1)
    sa = p["gamma_pam"] * jnp.einsum("bnm,bmc->bnc", att, v, precision=_HI) + f1
    sa_conv = conv_bn_relu(sa.reshape(B, H, W, C), p["w51"], *p["bn51"])

    feat2 = conv_bn_relu(x, p["w5c"], *p["bn5c"])
    f2 = feat2.reshape(B, H * W, C)
    energy = jnp.einsum("bnc,bnd->bcd", f2, f2, precision=_HI)
    energy_new = jnp.max(energy, axis=-1, keepdims=True) - energy
    att_c = jax.nn.softmax(energy_new, axis=-1)
    sc = p["gamma_cam"] * jnp.einsum("bcd,bnd->bnc", att_c, f2, precision=_HI) + f2
    sc_conv = conv_bn_relu(sc.reshape(B, H, W, C), p["w52"], *p["bn52"])

    feat_sum = sa_conv + sc_conv
    out = jnp.einsum("bhwc,oc->bhwo", feat_sum, p["w8"], precision=_HI) + p["b8"]
    return jnp.transpose(out, (0, 3, 1, 2))


# ------------------------------------ main ------------------------------------

if __name__ == "__main__":
    B, Cin, H, W = 2, 64, 16, 16      # inter_channels = 16, PAM q/k dim = 2 (padded to 8)
    out_ch = 8
    kx, kp = jax.random.split(jax.random.PRNGKey(0))
    x = jax.random.normal(kx, (B, Cin, H, W), jnp.float32)
    params = init_params(kp, Cin, out_ch)

    fwd = jax.jit(danet_head_forward)
    y = jax.block_until_ready(fwd(x, params))
    assert y.shape == (B, out_ch, H, W) and y.dtype == jnp.float32

    # Tight check vs a reference matching the kernel's bf16 conv-matmul precision,
    # loose check vs the full-f32 reference (bf16 MXU inputs => ~1e-2 level drift).
    y_bf16 = ref_forward(x, params, conv_dtype=jnp.bfloat16)
    y_f32 = ref_forward(x, params, conv_dtype=jnp.float32)
    err_bf16 = float(jnp.max(jnp.abs(y - y_bf16)))
    err_f32 = float(jnp.max(jnp.abs(y - y_f32)))
    assert err_bf16 < 3e-2, f"mismatch vs bf16-conv reference: {err_bf16}"
    assert err_f32 < 2e-1, f"mismatch vs f32 reference: {err_f32}"
    print("KERNEL_OK")
</pallas_src>

<mosaic_0001>
module attributes {stable_mosaic.version = 11 : i64} {
  func.func @kernel(%arg0: i32, %arg1: memref<1x64x256xf32, #tpu.memory_space<vmem>>, %arg2: memref<9x256xf32, #tpu.memory_space<vmem>>, %arg3: memref<16x576xbf16, #tpu.memory_space<vmem>>, %arg4: memref<16x576xbf16, #tpu.memory_space<vmem>>, %arg5: memref<16x144xbf16, #tpu.memory_space<vmem>>, %arg6: memref<16x144xbf16, #tpu.memory_space<vmem>>, %arg7: memref<64x1xf32, #tpu.memory_space<vmem>>, %arg8: memref<64x1xf32, #tpu.memory_space<vmem>>, %arg9: memref<32x16xf32, #tpu.memory_space<vmem>>, %arg10: memref<32x1xf32, #tpu.memory_space<vmem>>, %arg11: memref<8x16xf32, #tpu.memory_space<vmem>>, %arg12: memref<8x1xf32, #tpu.memory_space<vmem>>, %arg13: memref<2xf32, #tpu.memory_space<smem>>, %arg14: memref<1x8x256xf32, #tpu.memory_space<vmem>>) attributes {dimension_semantics = [#tpu.dimension_semantics<parallel>], iteration_bounds = array<i64: 2>, scalar_prefetch = 0 : i64, scratch_operands = 0 : i64, tpu.core_type = #tpu.core_type<tc>, window_params = [{transform_indices = @transform_0, window_bounds = array<i64: 1, 64, 256>}, {pipeline_mode = #tpu.pipeline_mode<synchronous>, transform_indices = @transform_1, window_bounds = array<i64: 9, 256>}, {pipeline_mode = #tpu.pipeline_mode<synchronous>, transform_indices = @transform_2, window_bounds = array<i64: 16, 576>}, {pipeline_mode = #tpu.pipeline_mode<synchronous>, transform_indices = @transform_3, window_bounds = array<i64: 16, 576>}, {pipeline_mode = #tpu.pipeline_mode<synchronous>, transform_indices = @transform_4, window_bounds = array<i64: 16, 144>}, {pipeline_mode = #tpu.pipeline_mode<synchronous>, transform_indices = @transform_5, window_bounds = array<i64: 16, 144>}, {pipeline_mode = #tpu.pipeline_mode<synchronous>, transform_indices = @transform_6, window_bounds = array<i64: 64, 1>}, {pipeline_mode = #tpu.pipeline_mode<synchronous>, transform_indices = @transform_7, window_bounds = array<i64: 64, 1>}, {pipeline_mode = #tpu.pipeline_mode<synchronous>, transform_indices = @transform_8, window_bounds = array<i64: 32, 16>}, {pipeline_mode = #tpu.pipeline_mode<synchronous>, transform_indices = @transform_9, window_bounds = array<i64: 32, 1>}, {pipeline_mode = #tpu.pipeline_mode<synchronous>, transform_indices = @transform_10, window_bounds = array<i64: 8, 16>}, {pipeline_mode = #tpu.pipeline_mode<synchronous>, transform_indices = @transform_11, window_bounds = array<i64: 8, 1>}, {transform_indices = @transform_12, window_bounds = array<i64: 2>}, {transform_indices = @transform_13, window_bounds = array<i64: 1, 8, 256>}]} {
    %c0 = arith.constant 0 : index
    %c0_0 = arith.constant 0 : index
    %c0_1 = arith.constant 0 : index
    %0 = vector.load %arg1[%c0, %c0_0, %c0_1] : memref<1x64x256xf32, #tpu.memory_space<vmem>>, vector<1x64x256xf32>
    %1 = vector.shape_cast %0 : vector<1x64x256xf32> to vector<64x256xf32>
    %c0_2 = arith.constant 0 : index
    %c0_3 = arith.constant 0 : index
    %2 = vector.load %arg2[%c0_2, %c0_3] : memref<9x256xf32, #tpu.memory_space<vmem>>, vector<9x256xf32>
    %3 = vector.extract_strided_slice %1 {offsets = [0, 239], sizes = [64, 17], strides = [1, 1]} : vector<64x256xf32> to vector<64x17xf32>
    %4 = vector.extract_strided_slice %1 {offsets = [0, 0], sizes = [64, 239], strides = [1, 1]} : vector<64x256xf32> to vector<64x239xf32>
    %5 = tpu.concatenate %3, %4 in 1 : vector<64x17xf32>, vector<64x239xf32> -> vector<64x256xf32>
    %6 = vector.extract_strided_slice %2 {offsets = [0, 0], sizes = [1, 256], strides = [1, 1]} : vector<9x256xf32> to vector<1x256xf32>
    %7 = vector.broadcast %6 : vector<1x256xf32> to vector<64x256xf32>
    %8 = arith.mulf %5, %7 : vector<64x256xf32>
    %9 = vector.extract_strided_slice %1 {offsets = [0, 240], sizes = [64, 16], strides = [1, 1]} : vector<64x256xf32> to vector<64x16xf32>
    %10 = vector.extract_strided_slice %1 {offsets = [0, 0], sizes = [64, 240], strides = [1, 1]} : vector<64x256xf32> to vector<64x240xf32>
    %11 = tpu.concatenate %9, %10 in 1 : vector<64x16xf32>, vector<64x240xf32> -> vector<64x256xf32>
    %12 = vector.extract_strided_slice %2 {offsets = [1, 0], sizes = [1, 256], strides = [1, 1]} : vector<9x256xf32> to vector<1x256xf32>
    %13 = vector.broadcast %12 : vector<1x256xf32> to vector<64x256xf32>
    %14 = arith.mulf %11, %13 : vector<64x256xf32>
    %15 = vector.extract_strided_slice %1 {offsets = [0, 241], sizes = [64, 15], strides = [1, 1]} : vector<64x256xf32> to vector<64x15xf32>
    %16 = vector.extract_strided_slice %1 {offsets = [0, 0], sizes = [64, 241], strides = [1, 1]} : vector<64x256xf32> to vector<64x241xf32>
    %17 = tpu.concatenate %15, %16 in 1 : vector<64x15xf32>, vector<64x241xf32> -> vector<64x256xf32>
    %18 = vector.extract_strided_slice %2 {offsets = [2, 0], sizes = [1, 256], strides = [1, 1]} : vector<9x256xf32> to vector<1x256xf32>
    %19 = vector.broadcast %18 : vector<1x256xf32> to vector<64x256xf32>
    %20 = arith.mulf %17, %19 : vector<64x256xf32>
    %21 = vector.extract_strided_slice %1 {offsets = [0, 255], sizes = [64, 1], strides = [1, 1]} : vector<64x256xf32> to vector<64x1xf32>
    %22 = vector.extract_strided_slice %1 {offsets = [0, 0], sizes = [64, 255], strides = [1, 1]} : vector<64x256xf32> to vector<64x255xf32>
    %23 = tpu.concatenate %21, %22 in 1 : vector<64x1xf32>, vector<64x255xf32> -> vector<64x256xf32>
    %24 = vector.extract_strided_slice %2 {offsets = [3, 0], sizes = [1, 256], strides = [1, 1]} : vector<9x256xf32> to vector<1x256xf32>
    %25 = vector.broadcast %24 : vector<1x256xf32> to vector<64x256xf32>
    %26 = arith.mulf %23, %25 : vector<64x256xf32>
    %27 = vector.extract_strided_slice %2 {offsets = [4, 0], sizes = [1, 256], strides = [1, 1]} : vector<9x256xf32> to vector<1x256xf32>
    %28 = vector.broadcast %27 : vector<1x256xf32> to vector<64x256xf32>
    %29 = arith.mulf %1, %28 : vector<64x256xf32>
    %30 = vector.extract_strided_slice %1 {offsets = [0, 1], sizes = [64, 255], strides = [1, 1]} : vector<64x256xf32> to vector<64x255xf32>
    %31 = vector.extract_strided_slice %1 {offsets = [0, 0], sizes = [64, 1], strides = [1, 1]} : vector<64x256xf32> to vector<64x1xf32>
    %32 = tpu.concatenate %30, %31 in 1 : vector<64x255xf32>, vector<64x1xf32> -> vector<64x256xf32>
    %33 = vector.extract_strided_slice %2 {offsets = [5, 0], sizes = [1, 256], strides = [1, 1]} : vector<9x256xf32> to vector<1x256xf32>
    %34 = vector.broadcast %33 : vector<1x256xf32> to vector<64x256xf32>
    %35 = arith.mulf %32, %34 : vector<64x256xf32>
    %36 = vector.extract_strided_slice %1 {offsets = [0, 15], sizes = [64, 241], strides = [1, 1]} : vector<64x256xf32> to vector<64x241xf32>
    %37 = vector.extract_strided_slice %1 {offsets = [0, 0], sizes = [64, 15], strides = [1, 1]} : vector<64x256xf32> to vector<64x15xf32>
    %38 = tpu.concatenate %36, %37 in 1 : vector<64x241xf32>, vector<64x15xf32> -> vector<64x256xf32>
    %39 = vector.extract_strided_slice %2 {offsets = [6, 0], sizes = [1, 256], strides = [1, 1]} : vector<9x256xf32> to vector<1x256xf32>
    %40 = vector.broadcast %39 : vector<1x256xf32> to vector<64x256xf32>
    %41 = arith.mulf %38, %40 : vector<64x256xf32>
    %42 = vector.extract_strided_slice %1 {offsets = [0, 16], sizes = [64, 240], strides = [1, 1]} : vector<64x256xf32> to vector<64x240xf32>
    %43 = vector.extract_strided_slice %1 {offsets = [0, 0], sizes = [64, 16], strides = [1, 1]} : vector<64x256xf32> to vector<64x16xf32>
    %44 = tpu.concatenate %42, %43 in 1 : vector<64x240xf32>, vector<64x16xf32> -> vector<64x256xf32>
    %45 = vector.extract_strided_slice %2 {offsets = [7, 0], sizes = [1, 256], strides = [1, 1]} : vector<9x256xf32> to vector<1x256xf32>
    %46 = vector.broadcast %45 : vector<1x256xf32> to vector<64x256xf32>
    %47 = arith.mulf %44, %46 : vector<64x256xf32>
    %48 = vector.extract_strided_slice %1 {offsets = [0, 17], sizes = [64, 239], strides = [1, 1]} : vector<64x256xf32> to vector<64x239xf32>
    %49 = vector.extract_strided_slice %1 {offsets = [0, 0], sizes = [64, 17], strides = [1, 1]} : vector<64x256xf32> to vector<64x17xf32>
    %50 = tpu.concatenate %48, %49 in 1 : vector<64x239xf32>, vector<64x17xf32> -> vector<64x256xf32>
    %51 = vector.extract_strided_slice %2 {offsets = [8, 0], sizes = [1, 256], strides = [1, 1]} : vector<9x256xf32> to vector<1x256xf32>
    %52 = vector.broadcast %51 : vector<1x256xf32> to vector<64x256xf32>
    %53 = arith.mulf %50, %52 : vector<64x256xf32>
    %54 = tpu.concatenate %8, %14, %20, %26, %29, %35, %41, %47, %53 in 0 : vector<64x256xf32>, vector<64x256xf32>, vector<64x256xf32>, vector<64x256xf32>, vector<64x256xf32>, vector<64x256xf32>, vector<64x256xf32>, vector<64x256xf32>, vector<64x256xf32> -> vector<576x256xf32>
    %55 = arith.truncf %54 : vector<576x256xf32> to vector<576x256xbf16>
    %c0_4 = arith.constant 0 : index
    %c0_5 = arith.constant 0 : index
    %56 = vector.load %arg3[%c0_4, %c0_5] : memref<16x576xbf16, #tpu.memory_space<vmem>>, vector<16x576xbf16>
    %cst = arith.constant dense<0.000000e+00> : vector<16x256xf32>
    %57 = tpu.matmul %56, %55, %cst {dimension_numbers = #tpu.dot_dimension_numbers<[1], [0], [0], [1], [0, 0, 1, 1], [], []>} : vector<16x576xbf16>, vector<576x256xbf16>, vector<16x256xf32> -> vector<16x256xf32>
    %c0_6 = arith.constant 0 : index
    %c0_7 = arith.constant 0 : index
    %58 = vector.load %arg7[%c0_6, %c0_7] : memref<64x1xf32, #tpu.memory_space<vmem>>, vector<16x1xf32>
    %c0_8 = arith.constant 0 : index
    %c0_9 = arith.constant 0 : index
    %59 = vector.load %arg8[%c0_8, %c0_9] : memref<64x1xf32, #tpu.memory_space<vmem>>, vector<16x1xf32>
    %60 = vector.broadcast %58 : vector<16x1xf32> to vector<16x256xf32>
    %61 = arith.mulf %57, %60 : vector<16x256xf32>
    %62 = vector.broadcast %59 : vector<16x1xf32> to vector<16x256xf32>
    %63 = arith.addf %61, %62 : vector<16x256xf32>
    %cst_10 = arith.constant 0.000000e+00 : f32
    %64 = vector.broadcast %cst_10 : f32 to vector<16x256xf32>
    %65 = arith.maximumf %63, %64 : vector<16x256xf32>
    %c0_11 = arith.constant 0 : index
    %c0_12 = arith.constant 0 : index
    %66 = vector.load %arg9[%c0_11, %c0_12] : memref<32x16xf32, #tpu.memory_space<vmem>>, vector<32x16xf32>
    %cst_13 = arith.constant dense<0.000000e+00> : vector<32x256xf32>
    %67 = tpu.matmul %66, %65, %cst_13 {dimension_numbers = #tpu.dot_dimension_numbers<[1], [0], [0], [1], [0, 0, 1, 1], [], []>} : vector<32x16xf32>, vector<16x256xf32>, vector<32x256xf32> -> vector<32x256xf32>
    %c0_14 = arith.constant 0 : index
    %c0_15 = arith.constant 0 : index
    %68 = vector.load %arg10[%c0_14, %c0_15] : memref<32x1xf32, #tpu.memory_space<vmem>>, vector<32x1xf32>
    %69 = vector.broadcast %68 : vector<32x1xf32> to vector<32x256xf32>
    %70 = arith.addf %67, %69 : vector<32x256xf32>
    %71 = vector.extract_strided_slice %70 {offsets = [0, 0], sizes = [8, 256], strides = [1, 1]} : vector<32x256xf32> to vector<8x256xf32>
    %72 = vector.extract_strided_slice %70 {offsets = [8, 0], sizes = [8, 256], strides = [1, 1]} : vector<32x256xf32> to vector<8x256xf32>
    %73 = vector.extract_strided_slice %70 {offsets = [16, 0], sizes = [16, 256], strides = [1, 1]} : vector<32x256xf32> to vector<16x256xf32>
    %cst_16 = arith.constant dense<0.000000e+00> : vector<256x256xf32>
    %74 = tpu.matmul %71, %72, %cst_16 {dimension_numbers = #tpu.dot_dimension_numbers<[0], [0], [1], [1], [0, 1, 1, 1], [], []>} : vector<8x256xf32>, vector<8x256xf32>, vector<256x256xf32> -> vector<256x256xf32>
    %cst_17 = arith.constant dense<0xFF800000> : vector<256xf32>
    %75 = vector.multi_reduction <maximumf>, %74, %cst_17 [1] : vector<256x256xf32> to vector<256xf32>
    %76 = vector.shape_cast %75 : vector<256xf32> to vector<256x1xf32>
    %77 = vector.broadcast %76 : vector<256x1xf32> to vector<256x256xf32>
    %78 = arith.subf %74, %77 : vector<256x256xf32>
    %79 = math.exp %78 : vector<256x256xf32>
    %cst_18 = arith.constant dense<0.000000e+00> : vector<256xf32>
    %80 = vector.multi_reduction <add>, %79, %cst_18 [1] : vector<256x256xf32> to vector<256xf32>
    %81 = vector.shape_cast %80 : vector<256xf32> to vector<256x1xf32>
    %82 = tpu.reciprocal %81 {approx = true} : vector<256x1xf32> -> vector<256x1xf32>
    %83 = vector.broadcast %82 : vector<256x1xf32> to vector<256x256xf32>
    %84 = arith.mulf %79, %83 : vector<256x256xf32>
    %cst_19 = arith.constant dense<0.000000e+00> : vector<16x256xf32>
    %85 = tpu.matmul %73, %84, %cst_19 {dimension_numbers = #tpu.dot_dimension_numbers<[1], [1], [0], [0], [0, 0, 1, 0], [], []>} : vector<16x256xf32>, vector<256x256xf32>, vector<16x256xf32> -> vector<16x256xf32>
    %c0_20 = arith.constant 0 : index
    %86 = memref.load %arg13[%c0_20] : memref<2xf32, #tpu.memory_space<smem>>
    %87 = vector.broadcast %86 : f32 to vector<16x256xf32>
    %88 = arith.mulf %87, %85 : vector<16x256xf32>
    %89 = arith.addf %88, %65 : vector<16x256xf32>
    %90 = vector.extract_strided_slice %89 {offsets = [0, 239], sizes = [16, 17], strides = [1, 1]} : vector<16x256xf32> to vector<16x17xf32>
    %91 = vector.extract_strided_slice %89 {offsets = [0, 0], sizes = [16, 239], strides = [1, 1]} : vector<16x256xf32> to vector<16x239xf32>
    %92 = tpu.concatenate %90, %91 in 1 : vector<16x17xf32>, vector<16x239xf32> -> vector<16x256xf32>
    %93 = vector.extract_strided_slice %2 {offsets = [0, 0], sizes = [1, 256], strides = [1, 1]} : vector<9x256xf32> to vector<1x256xf32>
    %94 = vector.broadcast %93 : vector<1x256xf32> to vector<16x256xf32>
    %95 = arith.mulf %92, %94 : vector<16x256xf32>
    %96 = vector.extract_strided_slice %89 {offsets = [0, 240], sizes = [16, 16], strides = [1, 1]} : vector<16x256xf32> to vector<16x16xf32>
    %97 = vector.extract_strided_slice %89 {offsets = [0, 0], sizes = [16, 240], strides = [1, 1]} : vector<16x256xf32> to vector<16x240xf32>
    %98 = tpu.concatenate %96, %97 in 1 : vector<16x16xf32>, vector<16x240xf32> -> vector<16x256xf32>
    %99 = vector.extract_strided_slice %2 {offsets = [1, 0], sizes = [1, 256], strides = [1, 1]} : vector<9x256xf32> to vector<1x256xf32>
    %100 = vector.broadcast %99 : vector<1x256xf32> to vector<16x256xf32>
    %101 = arith.mulf %98, %100 : vector<16x256xf32>
    %102 = vector.extract_strided_slice %89 {offsets = [0, 241], sizes = [16, 15], strides = [1, 1]} : vector<16x256xf32> to vector<16x15xf32>
    %103 = vector.extract_strided_slice %89 {offsets = [0, 0], sizes = [16, 241], strides = [1, 1]} : vector<16x256xf32> to vector<16x241xf32>
    %104 = tpu.concatenate %102, %103 in 1 : vector<16x15xf32>, vector<16x241xf32> -> vector<16x256xf32>
    %105 = vector.extract_strided_slice %2 {offsets = [2, 0], sizes = [1, 256], strides = [1, 1]} : vector<9x256xf32> to vector<1x256xf32>
    %106 = vector.broadcast %105 : vector<1x256xf32> to vector<16x256xf32>
    %107 = arith.mulf %104, %106 : vector<16x256xf32>
    %108 = vector.extract_strided_slice %89 {offsets = [0, 255], sizes = [16, 1], strides = [1, 1]} : vector<16x256xf32> to vector<16x1xf32>
    %109 = vector.extract_strided_slice %89 {offsets = [0, 0], sizes = [16, 255], strides = [1, 1]} : vector<16x256xf32> to vector<16x255xf32>
    %110 = tpu.concatenate %108, %109 in 1 : vector<16x1xf32>, vector<16x255xf32> -> vector<16x256xf32>
    %111 = vector.extract_strided_slice %2 {offsets = [3, 0], sizes = [1, 256], strides = [1, 1]} : vector<9x256xf32> to vector<1x256xf32>
    %112 = vector.broadcast %111 : vector<1x256xf32> to vector<16x256xf32>
    %113 = arith.mulf %110, %112 : vector<16x256xf32>
    %114 = vector.extract_strided_slice %2 {offsets = [4, 0], sizes = [1, 256], strides = [1, 1]} : vector<9x256xf32> to vector<1x256xf32>
    %115 = vector.broadcast %114 : vector<1x256xf32> to vector<16x256xf32>
    %116 = arith.mulf %89, %115 : vector<16x256xf32>
    %117 = vector.extract_strided_slice %89 {offsets = [0, 1], sizes = [16, 255], strides = [1, 1]} : vector<16x256xf32> to vector<16x255xf32>
    %118 = vector.extract_strided_slice %89 {offsets = [0, 0], sizes = [16, 1], strides = [1, 1]} : vector<16x256xf32> to vector<16x1xf32>
    %119 = tpu.concatenate %117, %118 in 1 : vector<16x255xf32>, vector<16x1xf32> -> vector<16x256xf32>
    %120 = vector.extract_strided_slice %2 {offsets = [5, 0], sizes = [1, 256], strides = [1, 1]} : vector<9x256xf32> to vector<1x256xf32>
    %121 = vector.broadcast %120 : vector<1x256xf32> to vector<16x256xf32>
    %122 = arith.mulf %119, %121 : vector<16x256xf32>
    %123 = vector.extract_strided_slice %89 {offsets = [0, 15], sizes = [16, 241], strides = [1, 1]} : vector<16x256xf32> to vector<16x241xf32>
    %124 = vector.extract_strided_slice %89 {offsets = [0, 0], sizes = [16, 15], strides = [1, 1]} : vector<16x256xf32> to vector<16x15xf32>
    %125 = tpu.concatenate %123, %124 in 1 : vector<16x241xf32>, vector<16x15xf32> -> vector<16x256xf32>
    %126 = vector.extract_strided_slice %2 {offsets = [6, 0], sizes = [1, 256], strides = [1, 1]} : vector<9x256xf32> to vector<1x256xf32>
    %127 = vector.broadcast %126 : vector<1x256xf32> to vector<16x256xf32>
    %128 = arith.mulf %125, %127 : vector<16x256xf32>
    %129 = vector.extract_strided_slice %89 {offsets = [0, 16], sizes = [16, 240], strides = [1, 1]} : vector<16x256xf32> to vector<16x240xf32>
    %130 = vector.extract_strided_slice %89 {offsets = [0, 0], sizes = [16, 16], strides = [1, 1]} : vector<16x256xf32> to vector<16x16xf32>
    %131 = tpu.concatenate %129, %130 in 1 : vector<16x240xf32>, vector<16x16xf32> -> vector<16x256xf32>
    %132 = vector.extract_strided_slice %2 {offsets = [7, 0], sizes = [1, 256], strides = [1, 1]} : vector<9x256xf32> to vector<1x256xf32>
    %133 = vector.broadcast %132 : vector<1x256xf32> to vector<16x256xf32>
    %134 = arith.mulf %131, %133 : vector<16x256xf32>
    %135 = vector.extract_strided_slice %89 {offsets = [0, 17], sizes = [16, 239], strides = [1, 1]} : vector<16x256xf32> to vector<16x239xf32>
    %136 = vector.extract_strided_slice %89 {offsets = [0, 0], sizes = [16, 17], strides = [1, 1]} : vector<16x256xf32> to vector<16x17xf32>
    %137 = tpu.concatenate %135, %136 in 1 : vector<16x239xf32>, vector<16x17xf32> -> vector<16x256xf32>
    %138 = vector.extract_strided_slice %2 {offsets = [8, 0], sizes = [1, 256], strides = [1, 1]} : vector<9x256xf32> to vector<1x256xf32>
    %139 = vector.broadcast %138 : vector<1x256xf32> to vector<16x256xf32>
    %140 = arith.mulf %137, %139 : vector<16x256xf32>
    %141 = tpu.concatenate %95, %101, %107, %113, %116, %122, %128, %134, %140 in 0 : vector<16x256xf32>, vector<16x256xf32>, vector<16x256xf32>, vector<16x256xf32>, vector<16x256xf32>, vector<16x256xf32>, vector<16x256xf32>, vector<16x256xf32>, vector<16x256xf32> -> vector<144x256xf32>
    %142 = arith.truncf %141 : vector<144x256xf32> to vector<144x256xbf16>
    %c0_21 = arith.constant 0 : index
    %c0_22 = arith.constant 0 : index
    %143 = vector.load %arg5[%c0_21, %c0_22] : memref<16x144xbf16, #tpu.memory_space<vmem>>, vector<16x144xbf16>
    %cst_23 = arith.constant dense<0.000000e+00> : vector<16x256xf32>
    %144 = tpu.matmul %143, %142, %cst_23 {dimension_numbers = #tpu.dot_dimension_numbers<[1], [0], [0], [1], [0, 0, 1, 1], [], []>} : vector<16x144xbf16>, vector<144x256xbf16>, vector<16x256xf32> -> vector<16x256xf32>
    %c32 = arith.constant 32 : index
    %c0_24 = arith.constant 0 : index
    %145 = vector.load %arg7[%c32, %c0_24] : memref<64x1xf32, #tpu.memory_space<vmem>>, vector<16x1xf32>
    %c32_25 = arith.constant 32 : index
    %c0_26 = arith.constant 0 : index
    %146 = vector.load %arg8[%c32_25, %c0_26] : memref<64x1xf32, #tpu.memory_space<vmem>>, vector<16x1xf32>
    %147 = vector.broadcast %145 : vector<16x1xf32> to vector<16x256xf32>
    %148 = arith.mulf %144, %147 : vector<16x256xf32>
    %149 = vector.broadcast %146 : vector<16x1xf32> to vector<16x256xf32>
    %150 = arith.addf %148, %149 : vector<16x256xf32>
    %cst_27 = arith.constant 0.000000e+00 : f32
    %151 = vector.broadcast %cst_27 : f32 to vector<16x256xf32>
    %152 = arith.maximumf %150, %151 : vector<16x256xf32>
    %153 = vector.extract_strided_slice %1 {offsets = [0, 239], sizes = [64, 17], strides = [1, 1]} : vector<64x256xf32> to vector<64x17xf32>
    %154 = vector.extract_strided_slice %1 {offsets = [0, 0], sizes = [64, 239], strides = [1, 1]} : vector<64x256xf32> to vector<64x239xf32>
    %155 = tpu.concatenate %153, %154 in 1 : vector<64x17xf32>, vector<64x239xf32> -> vector<64x256xf32>
    %156 = vector.extract_strided_slice %2 {offsets = [0, 0], sizes = [1, 256], strides = [1, 1]} : vector<9x256xf32> to vector<1x256xf32>
    %157 = vector.broadcast %156 : vector<1x256xf32> to vector<64x256xf32>
    %158 = arith.mulf %155, %157 : vector<64x256xf32>
    %159 = vector.extract_strided_slice %1 {offsets = [0, 240], sizes = [64, 16], strides = [1, 1]} : vector<64x256xf32> to vector<64x16xf32>
    %160 = vector.extract_strided_slice %1 {offsets = [0, 0], sizes = [64, 240], strides = [1, 1]} : vector<64x256xf32> to vector<64x240xf32>
    %161 = tpu.concatenate %159, %160 in 1 : vector<64x16xf32>, vector<64x240xf32> -> vector<64x256xf32>
    %162 = vector.extract_strided_slice %2 {offsets = [1, 0], sizes = [1, 256], strides = [1, 1]} : vector<9x256xf32> to vector<1x256xf32>
    %163 = vector.broadcast %162 : vector<1x256xf32> to vector<64x256xf32>
    %164 = arith.mulf %161, %163 : vector<64x256xf32>
    %165 = vector.extract_strided_slice %1 {offsets = [0, 241], sizes = [64, 15], strides = [1, 1]} : vector<64x256xf32> to vector<64x15xf32>
    %166 = vector.extract_strided_slice %1 {offsets = [0, 0], sizes = [64, 241], strides = [1, 1]} : vector<64x256xf32> to vector<64x241xf32>
    %167 = tpu.concatenate %165, %166 in 1 : vector<64x15xf32>, vector<64x241xf32> -> vector<64x256xf32>
    %168 = vector.extract_strided_slice %2 {offsets = [2, 0], sizes = [1, 256], strides = [1, 1]} : vector<9x256xf32> to vector<1x256xf32>
    %169 = vector.broadcast %168 : vector<1x256xf32> to vector<64x256xf32>
    %170 = arith.mulf %167, %169 : vector<64x256xf32>
    %171 = vector.extract_strided_slice %1 {offsets = [0, 255], sizes = [64, 1], strides = [1, 1]} : vector<64x256xf32> to vector<64x1xf32>
    %172 = vector.extract_strided_slice %1 {offsets = [0, 0], sizes = [64, 255], strides = [1, 1]} : vector<64x256xf32> to vector<64x255xf32>
    %173 = tpu.concatenate %171, %172 in 1 : vector<64x1xf32>, vector<64x255xf32> -> vector<64x256xf32>
    %174 = vector.extract_strided_slice %2 {offsets = [3, 0], sizes = [1, 256], strides = [1, 1]} : vector<9x256xf32> to vector<1x256xf32>
    %175 = vector.broadcast %174 : vector<1x256xf32> to vector<64x256xf32>
    %176 = arith.mulf %173, %175 : vector<64x256xf32>
    %177 = vector.extract_strided_slice %2 {offsets = [4, 0], sizes = [1, 256], strides = [1, 1]} : vector<9x256xf32> to vector<1x256xf32>
    %178 = vector.broadcast %177 : vector<1x256xf32> to vector<64x256xf32>
    %179 = arith.mulf %1, %178 : vector<64x256xf32>
    %180 = vector.extract_strided_slice %1 {offsets = [0, 1], sizes = [64, 255], strides = [1, 1]} : vector<64x256xf32> to vector<64x255xf32>
    %181 = vector.extract_strided_slice %1 {offsets = [0, 0], sizes = [64, 1], strides = [1, 1]} : vector<64x256xf32> to vector<64x1xf32>
    %182 = tpu.concatenate %180, %181 in 1 : vector<64x255xf32>, vector<64x1xf32> -> vector<64x256xf32>
    %183 = vector.extract_strided_slice %2 {offsets = [5, 0], sizes = [1, 256], strides = [1, 1]} : vector<9x256xf32> to vector<1x256xf32>
    %184 = vector.broadcast %183 : vector<1x256xf32> to vector<64x256xf32>
    %185 = arith.mulf %182, %184 : vector<64x256xf32>
    %186 = vector.extract_strided_slice %1 {offsets = [0, 15], sizes = [64, 241], strides = [1, 1]} : vector<64x256xf32> to vector<64x241xf32>
    %187 = vector.extract_strided_slice %1 {offsets = [0, 0], sizes = [64, 15], strides = [1, 1]} : vector<64x256xf32> to vector<64x15xf32>
    %188 = tpu.concatenate %186, %187 in 1 : vector<64x241xf32>, vector<64x15xf32> -> vector<64x256xf32>
    %189 = vector.extract_strided_slice %2 {offsets = [6, 0], sizes = [1, 256], strides = [1, 1]} : vector<9x256xf32> to vector<1x256xf32>
    %190 = vector.broadcast %189 : vector<1x256xf32> to vector<64x256xf32>
    %191 = arith.mulf %188, %190 : vector<64x256xf32>
    %192 = vector.extract_strided_slice %1 {offsets = [0, 16], sizes = [64, 240], strides = [1, 1]} : vector<64x256xf32> to vector<64x240xf32>
    %193 = vector.extract_strided_slice %1 {offsets = [0, 0], sizes = [64, 16], strides = [1, 1]} : vector<64x256xf32> to vector<64x16xf32>
    %194 = tpu.concatenate %192, %193 in 1 : vector<64x240xf32>, vector<64x16xf32> -> vector<64x256xf32>
    %195 = vector.extract_strided_slice %2 {offsets = [7, 0], sizes = [1, 256], strides = [1, 1]} : vector<9x256xf32> to vector<1x256xf32>
    %196 = vector.broadcast %195 : vector<1x256xf32> to vector<64x256xf32>
    %197 = arith.mulf %194, %196 : vector<64x256xf32>
    %198 = vector.extract_strided_slice %1 {offsets = [0, 17], sizes = [64, 239], strides = [1, 1]} : vector<64x256xf32> to vector<64x239xf32>
    %199 = vector.extract_strided_slice %1 {offsets = [0, 0], sizes = [64, 17], strides = [1, 1]} : vector<64x256xf32> to vector<64x17xf32>
    %200 = tpu.concatenate %198, %199 in 1 : vector<64x239xf32>, vector<64x17xf32> -> vector<64x256xf32>
    %201 = vector.extract_strided_slice %2 {offsets = [8, 0], sizes = [1, 256], strides = [1, 1]} : vector<9x256xf32> to vector<1x256xf32>
    %202 = vector.broadcast %201 : vector<1x256xf32> to vector<64x256xf32>
    %203 = arith.mulf %200, %202 : vector<64x256xf32>
    %204 = tpu.concatenate %158, %164, %170, %176, %179, %185, %191, %197, %203 in 0 : vector<64x256xf32>, vector<64x256xf32>, vector<64x256xf32>, vector<64x256xf32>, vector<64x256xf32>, vector<64x256xf32>, vector<64x256xf32>, vector<64x256xf32>, vector<64x256xf32> -> vector<576x256xf32>
    %205 = arith.truncf %204 : vector<576x256xf32> to vector<576x256xbf16>
    %c0_28 = arith.constant 0 : index
    %c0_29 = arith.constant 0 : index
    %206 = vector.load %arg4[%c0_28, %c0_29] : memref<16x576xbf16, #tpu.memory_space<vmem>>, vector<16x576xbf16>
    %cst_30 = arith.constant dense<0.000000e+00> : vector<16x256xf32>
    %207 = tpu.matmul %206, %205, %cst_30 {dimension_numbers = #tpu.dot_dimension_numbers<[1], [0], [0], [1], [0, 0, 1, 1], [], []>} : vector<16x576xbf16>, vector<576x256xbf16>, vector<16x256xf32> -> vector<16x256xf32>
    %c16 = arith.constant 16 : index
    %c0_31 = arith.constant 0 : index
    %208 = vector.load %arg7[%c16, %c0_31] : memref<64x1xf32, #tpu.memory_space<vmem>>, vector<16x1xf32>
    %c16_32 = arith.constant 16 : index
    %c0_33 = arith.constant 0 : index
    %209 = vector.load %arg8[%c16_32, %c0_33] : memref<64x1xf32, #tpu.memory_space<vmem>>, vector<16x1xf32>
    %210 = vector.broadcast %208 : vector<16x1xf32> to vector<16x256xf32>
    %211 = arith.mulf %207, %210 : vector<16x256xf32>
    %212 = vector.broadcast %209 : vector<16x1xf32> to vector<16x256xf32>
    %213 = arith.addf %211, %212 : vector<16x256xf32>
    %cst_34 = arith.constant 0.000000e+00 : f32
    %214 = vector.broadcast %cst_34 : f32 to vector<16x256xf32>
    %215 = arith.maximumf %213, %214 : vector<16x256xf32>
    %cst_35 = arith.constant dense<0.000000e+00> : vector<16x16xf32>
    %216 = tpu.matmul %215, %215, %cst_35 {dimension_numbers = #tpu.dot_dimension_numbers<[1], [1], [0], [0], [0, 0, 1, 0], [], []>} : vector<16x256xf32>, vector<16x256xf32>, vector<16x16xf32> -> vector<16x16xf32>
    %cst_36 = arith.constant dense<0xFF800000> : vector<16xf32>
    %217 = vector.multi_reduction <maximumf>, %216, %cst_36 [1] : vector<16x16xf32> to vector<16xf32>
    %218 = vector.shape_cast %217 : vector<16xf32> to vector<16x1xf32>
    %219 = vector.broadcast %218 : vector<16x1xf32> to vector<16x16xf32>
    %220 = arith.subf %219, %216 : vector<16x16xf32>
    %cst_37 = arith.constant dense<0xFF800000> : vector<16xf32>
    %221 = vector.multi_reduction <maximumf>, %220, %cst_37 [1] : vector<16x16xf32> to vector<16xf32>
    %222 = vector.shape_cast %221 : vector<16xf32> to vector<16x1xf32>
    %223 = vector.broadcast %222 : vector<16x1xf32> to vector<16x16xf32>
    %224 = arith.subf %220, %223 : vector<16x16xf32>
    %225 = math.exp %224 : vector<16x16xf32>
    %cst_38 = arith.constant dense<0.000000e+00> : vector<16xf32>
    %226 = vector.multi_reduction <add>, %225, %cst_38 [1] : vector<16x16xf32> to vector<16xf32>
    %227 = vector.shape_cast %226 : vector<16xf32> to vector<16x1xf32>
    %228 = tpu.reciprocal %227 {approx = true} : vector<16x1xf32> -> vector<16x1xf32>
    %229 = vector.broadcast %228 : vector<16x1xf32> to vector<16x16xf32>
    %230 = arith.mulf %225, %229 : vector<16x16xf32>
    %cst_39 = arith.constant dense<0.000000e+00> : vector<16x256xf32>
    %231 = tpu.matmul %230, %215, %cst_39 {dimension_numbers = #tpu.dot_dimension_numbers<[1], [0], [0], [1], [0, 0, 1, 1], [], []>} : vector<16x16xf32>, vector<16x256xf32>, vector<16x256xf32> -> vector<16x256xf32>
    %c1 = arith.constant 1 : index
    %232 = memref.load %arg13[%c1] : memref<2xf32, #tpu.memory_space<smem>>
    %233 = vector.broadcast %232 : f32 to vector<16x256xf32>
    %234 = arith.mulf %233, %231 : vector<16x256xf32>
    %235 = arith.addf %234, %215 : vector<16x256xf32>
    %236 = vector.extract_strided_slice %235 {offsets = [0, 239], sizes = [16, 17], strides = [1, 1]} : vector<16x256xf32> to vector<16x17xf32>
    %237 = vector.extract_strided_slice %235 {offsets = [0, 0], sizes = [16, 239], strides = [1, 1]} : vector<16x256xf32> to vector<16x239xf32>
    %238 = tpu.concatenate %236, %237 in 1 : vector<16x17xf32>, vector<16x239xf32> -> vector<16x256xf32>
    %239 = vector.extract_strided_slice %2 {offsets = [0, 0], sizes = [1, 256], strides = [1, 1]} : vector<9x256xf32> to vector<1x256xf32>
    %240 = vector.broadcast %239 : vector<1x256xf32> to vector<16x256xf32>
    %241 = arith.mulf %238, %240 : vector<16x256xf32>
    %242 = vector.extract_strided_slice %235 {offsets = [0, 240], sizes = [16, 16], strides = [1, 1]} : vector<16x256xf32> to vector<16x16xf32>
    %243 = vector.extract_strided_slice %235 {offsets = [0, 0], sizes = [16, 240], strides = [1, 1]} : vector<16x256xf32> to vector<16x240xf32>
    %244 = tpu.concatenate %242, %243 in 1 : vector<16x16xf32>, vector<16x240xf32> -> vector<16x256xf32>
    %245 = vector.extract_strided_slice %2 {offsets = [1, 0], sizes = [1, 256], strides = [1, 1]} : vector<9x256xf32> to vector<1x256xf32>
    %246 = vector.broadcast %245 : vector<1x256xf32> to vector<16x256xf32>
    %247 = arith.mulf %244, %246 : vector<16x256xf32>
    %248 = vector.extract_strided_slice %235 {offsets = [0, 241], sizes = [16, 15], strides = [1, 1]} : vector<16x256xf32> to vector<16x15xf32>
    %249 = vector.extract_strided_slice %235 {offsets = [0, 0], sizes = [16, 241], strides = [1, 1]} : vector<16x256xf32> to vector<16x241xf32>
    %250 = tpu.concatenate %248, %249 in 1 : vector<16x15xf32>, vector<16x241xf32> -> vector<16x256xf32>
    %251 = vector.extract_strided_slice %2 {offsets = [2, 0], sizes = [1, 256], strides = [1, 1]} : vector<9x256xf32> to vector<1x256xf32>
    %252 = vector.broadcast %251 : vector<1x256xf32> to vector<16x256xf32>
    %253 = arith.mulf %250, %252 : vector<16x256xf32>
    %254 = vector.extract_strided_slice %235 {offsets = [0, 255], sizes = [16, 1], strides = [1, 1]} : vector<16x256xf32> to vector<16x1xf32>
    %255 = vector.extract_strided_slice %235 {offsets = [0, 0], sizes = [16, 255], strides = [1, 1]} : vector<16x256xf32> to vector<16x255xf32>
    %256 = tpu.concatenate %254, %255 in 1 : vector<16x1xf32>, vector<16x255xf32> -> vector<16x256xf32>
    %257 = vector.extract_strided_slice %2 {offsets = [3, 0], sizes = [1, 256], strides = [1, 1]} : vector<9x256xf32> to vector<1x256xf32>
    %258 = vector.broadcast %257 : vector<1x256xf32> to vector<16x256xf32>
    %259 = arith.mulf %256, %258 : vector<16x256xf32>
    %260 = vector.extract_strided_slice %2 {offsets = [4, 0], sizes = [1, 256], strides = [1, 1]} : vector<9x256xf32> to vector<1x256xf32>
    %261 = vector.broadcast %260 : vector<1x256xf32> to vector<16x256xf32>
    %262 = arith.mulf %235, %261 : vector<16x256xf32>
    %263 = vector.extract_strided_slice %235 {offsets = [0, 1], sizes = [16, 255], strides = [1, 1]} : vector<16x256xf32> to vector<16x255xf32>
    %264 = vector.extract_strided_slice %235 {offsets = [0, 0], sizes = [16, 1], strides = [1, 1]} : vector<16x256xf32> to vector<16x1xf32>
    %265 = tpu.concatenate %263, %264 in 1 : vector<16x255xf32>, vector<16x1xf32> -> vector<16x256xf32>
    %266 = vector.extract_strided_slice %2 {offsets = [5, 0], sizes = [1, 256], strides = [1, 1]} : vector<9x256xf32> to vector<1x256xf32>
    %267 = vector.broadcast %266 : vector<1x256xf32> to vector<16x256xf32>
    %268 = arith.mulf %265, %267 : vector<16x256xf32>
    %269 = vector.extract_strided_slice %235 {offsets = [0, 15], sizes = [16, 241], strides = [1, 1]} : vector<16x256xf32> to vector<16x241xf32>
    %270 = vector.extract_strided_slice %235 {offsets = [0, 0], sizes = [16, 15], strides = [1, 1]} : vector<16x256xf32> to vector<16x15xf32>
    %271 = tpu.concatenate %269, %270 in 1 : vector<16x241xf32>, vector<16x15xf32> -> vector<16x256xf32>
    %272 = vector.extract_strided_slice %2 {offsets = [6, 0], sizes = [1, 256], strides = [1, 1]} : vector<9x256xf32> to vector<1x256xf32>
    %273 = vector.broadcast %272 : vector<1x256xf32> to vector<16x256xf32>
    %274 = arith.mulf %271, %273 : vector<16x256xf32>
    %275 = vector.extract_strided_slice %235 {offsets = [0, 16], sizes = [16, 240], strides = [1, 1]} : vector<16x256xf32> to vector<16x240xf32>
    %276 = vector.extract_strided_slice %235 {offsets = [0, 0], sizes = [16, 16], strides = [1, 1]} : vector<16x256xf32> to vector<16x16xf32>
    %277 = tpu.concatenate %275, %276 in 1 : vector<16x240xf32>, vector<16x16xf32> -> vector<16x256xf32>
    %278 = vector.extract_strided_slice %2 {offsets = [7, 0], sizes = [1, 256], strides = [1, 1]} : vector<9x256xf32> to vector<1x256xf32>
    %279 = vector.broadcast %278 : vector<1x256xf32> to vector<16x256xf32>
    %280 = arith.mulf %277, %279 : vector<16x256xf32>
    %281 = vector.extract_strided_slice %235 {offsets = [0, 17], sizes = [16, 239], strides = [1, 1]} : vector<16x256xf32> to vector<16x239xf32>
    %282 = vector.extract_strided_slice %235 {offsets = [0, 0], sizes = [16, 17], strides = [1, 1]} : vector<16x256xf32> to vector<16x17xf32>
    %283 = tpu.concatenate %281, %282 in 1 : vector<16x239xf32>, vector<16x17xf32> -> vector<16x256xf32>
    %284 = vector.extract_strided_slice %2 {offsets = [8, 0], sizes = [1, 256], strides = [1, 1]} : vector<9x256xf32> to vector<1x256xf32>
    %285 = vector.broadcast %284 : vector<1x256xf32> to vector<16x256xf32>
    %286 = arith.mulf %283, %285 : vector<16x256xf32>
    %287 = tpu.concatenate %241, %247, %253, %259, %262, %268, %274, %280, %286 in 0 : vector<16x256xf32>, vector<16x256xf32>, vector<16x256xf32>, vector<16x256xf32>, vector<16x256xf32>, vector<16x256xf32>, vector<16x256xf32>, vector<16x256xf32>, vector<16x256xf32> -> vector<144x256xf32>
    %288 = arith.truncf %287 : vector<144x256xf32> to vector<144x256xbf16>
    %c0_40 = arith.constant 0 : index
    %c0_41 = arith.constant 0 : index
    %289 = vector.load %arg6[%c0_40, %c0_41] : memref<16x144xbf16, #tpu.memory_space<vmem>>, vector<16x144xbf16>
    %cst_42 = arith.constant dense<0.000000e+00> : vector<16x256xf32>
    %290 = tpu.matmul %289, %288, %cst_42 {dimension_numbers = #tpu.dot_dimension_numbers<[1], [0], [0], [1], [0, 0, 1, 1], [], []>} : vector<16x144xbf16>, vector<144x256xbf16>, vector<16x256xf32> -> vector<16x256xf32>
    %c48 = arith.constant 48 : index
    %c0_43 = arith.constant 0 : index
    %291 = vector.load %arg7[%c48, %c0_43] : memref<64x1xf32, #tpu.memory_space<vmem>>, vector<16x1xf32>
    %c48_44 = arith.constant 48 : index
    %c0_45 = arith.constant 0 : index
    %292 = vector.load %arg8[%c48_44, %c0_45] : memref<64x1xf32, #tpu.memory_space<vmem>>, vector<16x1xf32>
    %293 = vector.broadcast %291 : vector<16x1xf32> to vector<16x256xf32>
    %294 = arith.mulf %290, %293 : vector<16x256xf32>
    %295 = vector.broadcast %292 : vector<16x1xf32> to vector<16x256xf32>
    %296 = arith.addf %294, %295 : vector<16x256xf32>
    %cst_46 = arith.constant 0.000000e+00 : f32
    %297 = vector.broadcast %cst_46 : f32 to vector<16x256xf32>
    %298 = arith.maximumf %296, %297 : vector<16x256xf32>
    %299 = arith.addf %152, %298 : vector<16x256xf32>
    %c0_47 = arith.constant 0 : index
    %c0_48 = arith.constant 0 : index
    %300 = vector.load %arg11[%c0_47, %c0_48] : memref<8x16xf32, #tpu.memory_space<vmem>>, vector<8x16xf32>
    %cst_49 = arith.constant dense<0.000000e+00> : vector<8x256xf32>
    %301 = tpu.matmul %300, %299, %cst_49 {dimension_numbers = #tpu.dot_dimension_numbers<[1], [0], [0], [1], [0, 0, 1, 1], [], []>} : vector<8x16xf32>, vector<16x256xf32>, vector<8x256xf32> -> vector<8x256xf32>
    %c0_50 = arith.constant 0 : index
    %c0_51 = arith.constant 0 : index
    %302 = vector.load %arg12[%c0_50, %c0_51] : memref<8x1xf32, #tpu.memory_space<vmem>>, vector<8x1xf32>
    %303 = vector.broadcast %302 : vector<8x1xf32> to vector<8x256xf32>
    %304 = arith.addf %301, %303 : vector<8x256xf32>
    %c0_52 = arith.constant 0 : index
    %c0_53 = arith.constant 0 : index
    %c0_54 = arith.constant 0 : index
    %305 = vector.load %arg14[%c0_52, %c0_53, %c0_54] : memref<1x8x256xf32, #tpu.memory_space<vmem>>, vector<1x8x256xf32>
    %306 = vector.shape_cast %305 : vector<1x8x256xf32> to vector<8x256xf32>
    %307 = vector.shape_cast %304 : vector<8x256xf32> to vector<1x8x256xf32>
    tpu.vector_store %arg14[%c0_52, %c0_53, %c0_54], %307 {strides = array<i32>} : memref<1x8x256xf32, #tpu.memory_space<vmem>>, vector<1x8x256xf32>,
    return
  }
  func.func @transform_0(%arg0: i32) -> (i32, i32, i32) {
    %c0_i32 = arith.constant 0 : i32
    %c0_i32_0 = arith.constant 0 : i32
    %c0_i32_1 = arith.constant 0 : i32
    return %arg0, %c0_i32, %c0_i32_0 : i32, i32, i32
  }
  func.func @transform_1(%arg0: i32) -> (i32, i32) {
    %c0_i32 = arith.constant 0 : i32
    %c0_i32_0 = arith.constant 0 : i32
    %c0_i32_1 = arith.constant 0 : i32
    return %c0_i32, %c0_i32_0 : i32, i32
  }
  func.func @transform_2(%arg0: i32) -> (i32, i32) {
    %c0_i32 = arith.constant 0 : i32
    %c0_i32_0 = arith.constant 0 : i32
    %c0_i32_1 = arith.constant 0 : i32
    return %c0_i32, %c0_i32_0 : i32, i32
  }
  func.func @transform_3(%arg0: i32) -> (i32, i32) {
    %c0_i32 = arith.constant 0 : i32
    %c0_i32_0 = arith.constant 0 : i32
    %c0_i32_1 = arith.constant 0 : i32
    return %c0_i32, %c0_i32_0 : i32, i32
  }
  func.func @transform_4(%arg0: i32) -> (i32, i32) {
    %c0_i32 = arith.constant 0 : i32
    %c0_i32_0 = arith.constant 0 : i32
    %c0_i32_1 = arith.constant 0 : i32
    return %c0_i32, %c0_i32_0 : i32, i32
  }
  func.func @transform_5(%arg0: i32) -> (i32, i32) {
    %c0_i32 = arith.constant 0 : i32
    %c0_i32_0 = arith.constant 0 : i32
    %c0_i32_1 = arith.constant 0 : i32
    return %c0_i32, %c0_i32_0 : i32, i32
  }
  func.func @transform_6(%arg0: i32) -> (i32, i32) {
    %c0_i32 = arith.constant 0 : i32
    %c0_i32_0 = arith.constant 0 : i32
    %c0_i32_1 = arith.constant 0 : i32
    return %c0_i32, %c0_i32_0 : i32, i32
  }
  func.func @transform_7(%arg0: i32) -> (i32, i32) {
    %c0_i32 = arith.constant 0 : i32
    %c0_i32_0 = arith.constant 0 : i32
    %c0_i32_1 = arith.constant 0 : i32
    return %c0_i32, %c0_i32_0 : i32, i32
  }
  func.func @transform_8(%arg0: i32) -> (i32, i32) {
    %c0_i32 = arith.constant 0 : i32
    %c0_i32_0 = arith.constant 0 : i32
    %c0_i32_1 = arith.constant 0 : i32
    return %c0_i32, %c0_i32_0 : i32, i32
  }
  func.func @transform_9(%arg0: i32) -> (i32, i32) {
    %c0_i32 = arith.constant 0 : i32
    %c0_i32_0 = arith.constant 0 : i32
    %c0_i32_1 = arith.constant 0 : i32
    return %c0_i32, %c0_i32_0 : i32, i32
  }
  func.func @transform_10(%arg0: i32) -> (i32, i32) {
    %c0_i32 = arith.constant 0 : i32
    %c0_i32_0 = arith.constant 0 : i32
    %c0_i32_1 = arith.constant 0 : i32
    return %c0_i32, %c0_i32_0 : i32, i32
  }
  func.func @transform_11(%arg0: i32) -> (i32, i32) {
    %c0_i32 = arith.constant 0 : i32
    %c0_i32_0 = arith.constant 0 : i32
    %c0_i32_1 = arith.constant 0 : i32
    return %c0_i32, %c0_i32_0 : i32, i32
  }
  func.func @transform_12(%arg0: i32) -> i32 {
    %c0_i32 = arith.constant 0 : i32
    %c0_i32_0 = arith.constant 0 : i32
    return %c0_i32 : i32
  }
  func.func @transform_13(%arg0: i32) -> (i32, i32, i32) {
    %c0_i32 = arith.constant 0 : i32
    %c0_i32_0 = arith.constant 0 : i32
    %c0_i32_1 = arith.constant 0 : i32
    return %arg0, %c0_i32, %c0_i32_0 : i32, i32, i32
  }
}

</mosaic_0001>

<llo_original>
// kernel: danet_head_forward.1
$region0: #{danet_head_forward.1}
  #allocation0 [shape = 'u32[]', space=smem, size = 0x4, offset = 0x4, fixed_abs, tag = 'smem constant byte address 0x4 - core index']
  #allocation1 [shape = 'u32[72,128]{1,0:T(1,128)}', space=vmem, size = 0x9000, scoped, tag = 'internal scratch']
  %s0 = inlined_call_operand.vmem [shape: f32[2,64,256], index: 0, kind: input, shape index: {}]
  %s1 = inlined_call_operand.vmem [shape: f32[9,256], index: 1, kind: input, shape index: {}]
  %s2 = inlined_call_operand.vmem [shape: bf16[16,576], index: 2, kind: input, shape index: {}]
  %s3 = inlined_call_operand.vmem [shape: bf16[16,576], index: 3, kind: input, shape index: {}]
  %s4 = inlined_call_operand.vmem [shape: bf16[16,144], index: 4, kind: input, shape index: {}]
  %s5 = inlined_call_operand.vmem [shape: bf16[16,144], index: 5, kind: input, shape index: {}]
  %s6 = inlined_call_operand.vmem [shape: f32[64,1], index: 6, kind: input, shape index: {}]
  %s7 = inlined_call_operand.vmem [shape: f32[64,1], index: 7, kind: input, shape index: {}]
  %s8 = inlined_call_operand.vmem [shape: f32[32,16], index: 8, kind: input, shape index: {}]
  %s9 = inlined_call_operand.vmem [shape: f32[32,1], index: 9, kind: input, shape index: {}]
  %s10 = inlined_call_operand.vmem [shape: f32[8,16], index: 10, kind: input, shape index: {}]
  %s11 = inlined_call_operand.vmem [shape: f32[8,1], index: 11, kind: input, shape index: {}]
  %s12 = inlined_call_operand.vmem [shape: f32[2], index: 12, kind: input, shape index: {}]
  %s13 = inlined_call_operand.vmem [shape: f32[2,8,256], index: 13, kind: output, shape index: {}]
  %s14 = sld [smem:[#allocation0]]
  $region89: #{danet_head_forward.1} parent=0
    _
  %s16 = ssub.s32 1, %s14
  %s17 = scalar_select 0, %s16, %s14
  $region1: #{danet_head_forward.1} parent=0
    #allocation2 [shape = 'u8[512]{0}', space=smem, size = 0x200, scoped, tag = 'input window, operand 12, single buffered']
    #allocation3 [shape = 's32[2]{0}', space=sflag, size = 0x8, scoped, tag = 'scoped memory for danet_head_forward.1']
    %18 = vsyncpa [#allocation3], 0
    loop: start=0, step=1, limit=4
    $region2: #{danet_head_forward.1} parent=1 // loop_pre_header
      _
    $region3: #{danet_head_forward.1} parent=1 // loop_header
      %s20 = sphi 0, %s24
      %p21 = scmp.ge.s32.totalorder %s20, 4
      %s30 = sphi 0, %s32
      %s33 = sphi 0, %s30
      %s34 = sphi 0, %s33
      %s50 = sphi 0, %s34
      %s54 = sphi 0, %s54
      %s56 = sphi 0, %s54
      %s57 = sphi 0, %s56
      %s71 = sphi 0, %s57
      %s75 = sphi 0, %s75
      %s77 = sphi 0, %s75
      %s78 = sphi 0, %s77
      %s92 = sphi 0, %s78
      %s96 = sphi 0, %s96
      %s98 = sphi 0, %s96
      %s99 = sphi 0, %s98
      %s113 = sphi 0, %s99
      %s117 = sphi 0, %s117
      %s119 = sphi 0, %s117
      %s120 = sphi 0, %s119
      %s134 = sphi 0, %s120
      %s138 = sphi 0, %s138
      %s140 = sphi 0, %s138
      %s141 = sphi 0, %s140
      %s155 = sphi 0, %s141
      %s159 = sphi 0, %s159
      %s161 = sphi 0, %s159
      %s162 = sphi 0, %s161
      %s176 = sphi 0, %s162
      %s180 = sphi 0, %s180
      %s182 = sphi 0, %s180
      %s183 = sphi 0, %s182
      %s197 = sphi 0, %s183
      %s201 = sphi 0, %s201
      %s203 = sphi 0, %s201
      %s204 = sphi 0, %s203
      %s218 = sphi 0, %s204
      %s222 = sphi 0, %s222
      %s224 = sphi 0, %s222
      %s225 = sphi 0, %s224
      %s239 = sphi 0, %s225
      %s243 = sphi 0, %s243
      %s245 = sphi 0, %s243
      %s246 = sphi 0, %s245
      %s260 = sphi 0, %s246
      %s264 = sphi 0, %s264
      %s266 = sphi 0, %s264
      %s267 = sphi 0, %s266
      %s281 = sphi 0, %s267
      %s285 = sphi 0, %s285
      %s287 = sphi 0, %s285
      %s288 = sphi 0, %s287
      %s302 = sphi 0, %s288
      %s308 = sphi 0, %s310
      %s311 = sphi 0, %s308
      %s312 = sphi 0, %s311
      %s328 = sphi 0, %s312
    $region4: #{danet_head_forward.1} parent=1 // loop_header_branch
      %23 = sbr.rel (%p21) target = $region8
    $region5: #{danet_head_forward.1} parent=1 // loop_body
      %s25 = ssub.s32 %s20, 1
      %s26 = ssub.s32 %s20, 2
      %s27 = sadd.s32 %s20, 1
      %s28 = ssub.s32 %s20, %s27
      %p29 = scmp.eq.s32.totalorder %s28, 0
      %s31 = sadd.s32 %s30, 1
      %s32 = scalar_select %p29, %s30, %s31
      %p35 = pneg %p29
      %p36 = scmp.eq.s32.totalorder %s20, 1
      %p37 = por %p35, %p36
      %p38 = scmp.ne.s32.totalorder %s30, %s33
      %p39 = scmp.eq.s32.totalorder %s20, 0
      %p40 = por %p38, %p39
      %p41 = scmp.ne.s32.totalorder %s30, %s33
      %p42 = scmp.eq.s32.totalorder %s25, 1
      %p43 = por %p41, %p42
      %p44 = scmp.ne.s32.totalorder %s33, %s34
      %p45 = scmp.eq.s32.totalorder %s25, 0
      %p46 = por %p44, %p45
      %p47 = scmp.ne.s32.totalorder %s33, %s34
      %p48 = scmp.eq.s32.totalorder %s26, 1
      %p49 = por %p47, %p48
      %p51 = scmp.ne.s32.totalorder %s34, %s50
      %p52 = scmp.eq.s32.totalorder %s26, 0
      %p53 = por %p51, %p52
      %s55 = sadd.s32 %s54, 1
      %p58 = scmp.eq.s32.totalorder %s20, 1
      %p59 = scmp.ne.s32.totalorder %s54, %s56
      %p60 = scmp.eq.s32.totalorder %s20, 0
      %p61 = por %p59, %p60
      %p62 = scmp.ne.s32.totalorder %s54, %s56
      %p63 = scmp.eq.s32.totalorder %s25, 1
      %p64 = por %p62, %p63
      %p65 = scmp.ne.s32.totalorder %s56, %s57
      %p66 = scmp.eq.s32.totalorder %s25, 0
      %p67 = por %p65, %p66
      %p68 = scmp.ne.s32.totalorder %s56, %s57
      %p69 = scmp.eq.s32.totalorder %s26, 1
      %p70 = por %p68, %p69
      %p72 = scmp.ne.s32.totalorder %s57, %s71
      %p73 = scmp.eq.s32.totalorder %s26, 0
      %p74 = por %p72, %p73
      %s76 = sadd.s32 %s75, 1
      %p79 = scmp.eq.s32.totalorder %s20, 1
      %p80 = scmp.ne.s32.totalorder %s75, %s77
      %p81 = scmp.eq.s32.totalorder %s20, 0
      %p82 = por %p80, %p81
      %p83 = scmp.ne.s32.totalorder %s75, %s77
      %p84 = scmp.eq.s32.totalorder %s25, 1
      %p85 = por %p83, %p84
      %p86 = scmp.ne.s32.totalorder %s77, %s78
      %p87 = scmp.eq.s32.totalorder %s25, 0
      %p88 = por %p86, %p87
      %p89 = scmp.ne.s32.totalorder %s77, %s78
      %p90 = scmp.eq.s32.totalorder %s26, 1
      %p91 = por %p89, %p90
      %p93 = scmp.ne.s32.totalorder %s78, %s92
      %p94 = scmp.eq.s32.totalorder %s26, 0
      %p95 = por %p93, %p94
      %s97 = sadd.s32 %s96, 1
      %p100 = scmp.eq.s32.totalorder %s20, 1
      %p101 = scmp.ne.s32.totalorder %s96, %s98
      %p102 = scmp.eq.s32.totalorder %s20, 0
      %p103 = por %p101, %p102
      %p104 = scmp.ne.s32.totalorder %s96, %s98
      %p105 = scmp.eq.s32.totalorder %s25, 1
      %p106 = por %p104, %p105
      %p107 = scmp.ne.s32.totalorder %s98, %s99
      %p108 = scmp.eq.s32.totalorder %s25, 0
      %p109 = por %p107, %p108
      %p110 = scmp.ne.s32.totalorder %s98, %s99
      %p111 = scmp.eq.s32.totalorder %s26, 1
      %p112 = por %p110, %p111
      %p114 = scmp.ne.s32.totalorder %s99, %s113
      %p115 = scmp.eq.s32.totalorder %s26, 0
      %p116 = por %p114, %p115
      %s118 = sadd.s32 %s117, 1
      %p121 = scmp.eq.s32.totalorder %s20, 1
      %p122 = scmp.ne.s32.totalorder %s117, %s119
      %p123 = scmp.eq.s32.totalorder %s20, 0
      %p124 = por %p122, %p123
      %p125 = scmp.ne.s32.totalorder %s117, %s119
      %p126 = scmp.eq.s32.totalorder %s25, 1
      %p127 = por %p125, %p126
      %p128 = scmp.ne.s32.totalorder %s119, %s120
      %p129 = scmp.eq.s32.totalorder %s25, 0
      %p130 = por %p128, %p129
      %p131 = scmp.ne.s32.totalorder %s119, %s120
      %p132 = scmp.eq.s32.totalorder %s26, 1
      %p133 = por %p131, %p132
      %p135 = scmp.ne.s32.totalorder %s120, %s134
      %p136 = scmp.eq.s32.totalorder %s26, 0
      %p137 = por %p135, %p136
      %s139 = sadd.s32 %s138, 1
      %p142 = scmp.eq.s32.totalorder %s20, 1
      %p143 = scmp.ne.s32.totalorder %s138, %s140
      %p144 = scmp.eq.s32.totalorder %s20, 0
      %p145 = por %p143, %p144
      %p146 = scmp.ne.s32.totalorder %s138, %s140
      %p147 = scmp.eq.s32.totalorder %s25, 1
      %p148 = por %p146, %p147
      %p149 = scmp.ne.s32.totalorder %s140, %s141
      %p150 = scmp.eq.s32.totalorder %s25, 0
      %p151 = por %p149, %p150
      %p152 = scmp.ne.s32.totalorder %s140, %s141
      %p153 = scmp.eq.s32.totalorder %s26, 1
      %p154 = por %p152, %p153
      %p156 = scmp.ne.s32.totalorder %s141, %s155
      %p157 = scmp.eq.s32.totalorder %s26, 0
      %p158 = por %p156, %p157
      %s160 = sadd.s32 %s159, 1
      %p163 = scmp.eq.s32.totalorder %s20, 1
      %p164 = scmp.ne.s32.totalorder %s159, %s161
      %p165 = scmp.eq.s32.totalorder %s20, 0
      %p166 = por %p164, %p165
      %p167 = scmp.ne.s32.totalorder %s159, %s161
      %p168 = scmp.eq.s32.totalorder %s25, 1
      %p169 = por %p167, %p168
      %p170 = scmp.ne.s32.totalorder %s161, %s162
      %p171 = scmp.eq.s32.totalorder %s25, 0
      %p172 = por %p170, %p171
      %p173 = scmp.ne.s32.totalorder %s161, %s162
      %p174 = scmp.eq.s32.totalorder %s26, 1
      %p175 = por %p173, %p174
      %p177 = scmp.ne.s32.totalorder %s162, %s176
      %p178 = scmp.eq.s32.totalorder %s26, 0
      %p179 = por %p177, %p178
      %s181 = sadd.s32 %s180, 1
      %p184 = scmp.eq.s32.totalorder %s20, 1
      %p185 = scmp.ne.s32.totalorder %s180, %s182
      %p186 = scmp.eq.s32.totalorder %s20, 0
      %p187 = por %p185, %p186
      %p188 = scmp.ne.s32.totalorder %s180, %s182
      %p189 = scmp.eq.s32.totalorder %s25, 1
      %p190 = por %p188, %p189
      %p191 = scmp.ne.s32.totalorder %s182, %s183
      %p192 = scmp.eq.s32.totalorder %s25, 0
      %p193 = por %p191, %p192
      %p194 = scmp.ne.s32.totalorder %s182, %s183
      %p195 = scmp.eq.s32.totalorder %s26, 1
      %p196 = por %p194, %p195
      %p198 = scmp.ne.s32.totalorder %s183, %s197
      %p199 = scmp.eq.s32.totalorder %s26, 0
      %p200 = por %p198, %p199
      %s202 = sadd.s32 %s201, 1
      %p205 = scmp.eq.s32.totalorder %s20, 1
      %p206 = scmp.ne.s32.totalorder %s201, %s203
      %p207 = scmp.eq.s32.totalorder %s20, 0
      %p208 = por %p206, %p207
      %p209 = scmp.ne.s32.totalorder %s201, %s203
      %p210 = scmp.eq.s32.totalorder %s25, 1
      %p211 = por %p209, %p210
      %p212 = scmp.ne.s32.totalorder %s203, %s204
      %p213 = scmp.eq.s32.totalorder %s25, 0
      %p214 = por %p212, %p213
      %p215 = scmp.ne.s32.totalorder %s203, %s204
      %p216 = scmp.eq.s32.totalorder %s26, 1
      %p217 = por %p215, %p216
      %p219 = scmp.ne.s32.totalorder %s204, %s218
      %p220 = scmp.eq.s32.totalorder %s26, 0
      %p221 = por %p219, %p220
      %s223 = sadd.s32 %s222, 1
      %p226 = scmp.eq.s32.totalorder %s20, 1
      %p227 = scmp.ne.s32.totalorder %s222, %s224
      %p228 = scmp.eq.s32.totalorder %s20, 0
      %p229 = por %p227, %p228
      %p230 = scmp.ne.s32.totalorder %s222, %s224
      %p231 = scmp.eq.s32.totalorder %s25, 1
      %p232 = por %p230, %p231
      %p233 = scmp.ne.s32.totalorder %s224, %s225
      %p234 = scmp.eq.s32.totalorder %s25, 0
      %p235 = por %p233, %p234
      %p236 = scmp.ne.s32.totalorder %s224, %s225
      %p237 = scmp.eq.s32.totalorder %s26, 1
      %p238 = por %p236, %p237
      %p240 = scmp.ne.s32.totalorder %s225, %s239
      %p241 = scmp.eq.s32.totalorder %s26, 0
      %p242 = por %p240, %p241
      %s244 = sadd.s32 %s243, 1
      %p247 = scmp.eq.s32.totalorder %s20, 1
      %p248 = scmp.ne.s32.totalorder %s243, %s245
      %p249 = scmp.eq.s32.totalorder %s20, 0
      %p250 = por %p248, %p249
      %p251 = scmp.ne.s32.totalorder %s243, %s245
      %p252 = scmp.eq.s32.totalorder %s25, 1
      %p253 = por %p251, %p252
      %p254 = scmp.ne.s32.totalorder %s245, %s246
      %p255 = scmp.eq.s32.totalorder %s25, 0
      %p256 = por %p254, %p255
      %p257 = scmp.ne.s32.totalorder %s245, %s246
      %p258 = scmp.eq.s32.totalorder %s26, 1
      %p259 = por %p257, %p258
      %p261 = scmp.ne.s32.totalorder %s246, %s260
      %p262 = scmp.eq.s32.totalorder %s26, 0
      %p263 = por %p261, %p262
      %s265 = sadd.s32 %s264, 1
      %p268 = scmp.eq.s32.totalorder %s20, 1
      %p269 = scmp.ne.s32.totalorder %s264, %s266
      %p270 = scmp.eq.s32.totalorder %s20, 0
      %p271 = por %p269, %p270
      %p272 = scmp.ne.s32.totalorder %s264, %s266
      %p273 = scmp.eq.s32.totalorder %s25, 1
      %p274 = por %p272, %p273
      %p275 = scmp.ne.s32.totalorder %s266, %s267
      %p276 = scmp.eq.s32.totalorder %s25, 0
      %p277 = por %p275, %p276
      %p278 = scmp.ne.s32.totalorder %s266, %s267
      %p279 = scmp.eq.s32.totalorder %s26, 1
      %p280 = por %p278, %p279
      %p282 = scmp.ne.s32.totalorder %s267, %s281
      %p283 = scmp.eq.s32.totalorder %s26, 0
      %p284 = por %p282, %p283
      %s286 = sadd.s32 %s285, 1
      %p289 = scmp.eq.s32.totalorder %s20, 1
      %p290 = scmp.ne.s32.totalorder %s285, %s287
      %p291 = scmp.eq.s32.totalorder %s20, 0
      %p292 = por %p290, %p291
      %p293 = scmp.ne.s32.totalorder %s285, %s287
      %p294 = scmp.eq.s32.totalorder %s25, 1
      %p295 = por %p293, %p294
      %p296 = scmp.ne.s32.totalorder %s287, %s288
      %p297 = scmp.eq.s32.totalorder %s25, 0
      %p298 = por %p296, %p297
      %p299 = scmp.ne.s32.totalorder %s287, %s288
      %p300 = scmp.eq.s32.totalorder %s26, 1
      %p301 = por %p299, %p300
      %p303 = scmp.ne.s32.totalorder %s288, %s302
      %p304 = scmp.eq.s32.totalorder %s26, 0
      %p305 = por %p303, %p304
      %s306 = ssub.s32 %s20, %s27
      %p307 = scmp.eq.s32.totalorder %s306, 0
      %s309 = sadd.s32 %s308, 1
      %s310 = scalar_select %p307, %s308, %s309
      %p313 = pneg %p307
      %p314 = scmp.eq.s32.totalorder %s20, 1
      %p315 = por %p313, %p314
      %p316 = scmp.ne.s32.totalorder %s308, %s311
      %p317 = scmp.eq.s32.totalorder %s20, 0
      %p318 = por %p316, %p317
      %p319 = scmp.ne.s32.totalorder %s308, %s311
      %p320 = scmp.eq.s32.totalorder %s25, 1
      %p321 = por %p319, %p320
      %p322 = scmp.ne.s32.totalorder %s311, %s312
      %p323 = scmp.eq.s32.totalorder %s25, 0
      %p324 = por %p322, %p323
      %p325 = scmp.ne.s32.totalorder %s311, %s312
      %p326 = scmp.eq.s32.totalorder %s26, 1
      %p327 = por %p325, %p326
      %p329 = scmp.ne.s32.totalorder %s312, %s328
      %p330 = scmp.eq.s32.totalorder %s26, 0
      %p331 = por %p329, %p330
      %p332 = scmp.le.s32.totalorder 1, %s20
      %p333 = scmp.lt.s32.totalorder %s20, 3
      %p334 = pnand %p332, %p333
      %p335 = pneg %p334
      // Predicated region
      $region9: #{danet_head_forward.1} parent=5 // pred_check
        _
      $region10: #{danet_head_forward.1} parent=5 // pred_check_branch
        %337 = sbr.rel (%p334) target = $region12
      $region11: #{danet_head_forward.1} parent=5 // pred_region
        %s338 = ssub.s32 %s20, 1
        // Predicated region
        $region13: #{danet_head_forward.1} parent=11 // pred_check
          %p339 = pneg %p67
        $region14: #{danet_head_forward.1} parent=11 // pred_check_branch
          %341 = sbr.rel (%p339) target = $region16
        $region15: #{danet_head_forward.1} parent=11 // pred_region
          _
        $region16: #{danet_head_forward.1} parent=11 // pred_fallthru
          _
        // Predicated region
        $region17: #{danet_head_forward.1} parent=11 // pred_check
          %p342 = pneg %p88
        $region18: #{danet_head_forward.1} parent=11 // pred_check_branch
          %344 = sbr.rel (%p342) target = $region20
        $region19: #{danet_head_forward.1} parent=11 // pred_region
          _
        $region20: #{danet_head_forward.1} parent=11 // pred_fallthru
          _
        // Predicated region
        $region21: #{danet_head_forward.1} parent=11 // pred_check
          %p345 = pneg %p109
        $region22: #{danet_head_forward.1} parent=11 // pred_check_branch
          %347 = sbr.rel (%p345) target = $region24
        $region23: #{danet_head_forward.1} parent=11 // pred_region
          _
        $region24: #{danet_head_forward.1} parent=11 // pred_fallthru
          _
        // Predicated region
        $region25: #{danet_head_forward.1} parent=11 // pred_check
          %p348 = pneg %p130
        $region26: #{danet_head_forward.1} parent=11 // pred_check_branch
          %350 = sbr.rel (%p348) target = $region28
        $region27: #{danet_head_forward.1} parent=11 // pred_region
          _
        $region28: #{danet_head_forward.1} parent=11 // pred_fallthru
          _
        // Predicated region
        $region29: #{danet_head_forward.1} parent=11 // pred_check
          %p351 = pneg %p151
        $region30: #{danet_head_forward.1} parent=11 // pred_check_branch
          %353 = sbr.rel (%p351) target = $region32
        $region31: #{danet_head_forward.1} parent=11 // pred_region
          _
        $region32: #{danet_head_forward.1} parent=11 // pred_fallthru
          _
        // Predicated region
        $region33: #{danet_head_forward.1} parent=11 // pred_check
          %p354 = pneg %p172
        $region34: #{danet_head_forward.1} parent=11 // pred_check_branch
          %356 = sbr.rel (%p354) target = $region36
        $region35: #{danet_head_forward.1} parent=11 // pred_region
          _
        $region36: #{danet_head_forward.1} parent=11 // pred_fallthru
          _
        // Predicated region
        $region37: #{danet_head_forward.1} parent=11 // pred_check
          %p357 = pneg %p193
        $region38: #{danet_head_forward.1} parent=11 // pred_check_branch
          %359 = sbr.rel (%p357) target = $region40
        $region39: #{danet_head_forward.1} parent=11 // pred_region
          _
        $region40: #{danet_head_forward.1} parent=11 // pred_fallthru
          _
        // Predicated region
        $region41: #{danet_head_forward.1} parent=11 // pred_check
          %p360 = pneg %p214
        $region42: #{danet_head_forward.1} parent=11 // pred_check_branch
          %362 = sbr.rel (%p360) target = $region44
        $region43: #{danet_head_forward.1} parent=11 // pred_region
          _
        $region44: #{danet_head_forward.1} parent=11 // pred_fallthru
          _
        // Predicated region
        $region45: #{danet_head_forward.1} parent=11 // pred_check
          %p363 = pneg %p235
        $region46: #{danet_head_forward.1} parent=11 // pred_check_branch
          %365 = sbr.rel (%p363) target = $region48
        $region47: #{danet_head_forward.1} parent=11 // pred_region
          _
        $region48: #{danet_head_forward.1} parent=11 // pred_fallthru
          _
        // Predicated region
        $region49: #{danet_head_forward.1} parent=11 // pred_check
          %p366 = pneg %p256
        $region50: #{danet_head_forward.1} parent=11 // pred_check_branch
          %368 = sbr.rel (%p366) target = $region52
        $region51: #{danet_head_forward.1} parent=11 // pred_region
          _
        $region52: #{danet_head_forward.1} parent=11 // pred_fallthru
          _
        // Predicated region
        $region53: #{danet_head_forward.1} parent=11 // pred_check
          %p369 = pneg %p277
        $region54: #{danet_head_forward.1} parent=11 // pred_check_branch
          %371 = sbr.rel (%p369) target = $region56
        $region55: #{danet_head_forward.1} parent=11 // pred_region
          _
        $region56: #{danet_head_forward.1} parent=11 // pred_fallthru
          _
        // Predicated region
        $region57: #{danet_head_forward.1} parent=11 // pred_check
          %p372 = pneg %p298
        $region58: #{danet_head_forward.1} parent=11 // pred_check_branch
          %374 = sbr.rel (%p372) target = $region60
        $region59: #{danet_head_forward.1} parent=11 // pred_region
          %376 = vsyncadd [#allocation3], 0
          %s378 = sshll.u32 %s12, 4
          %s379 = int_to_ptr.vmem [resolvable:$true] %s378
          %381 = dma.vmem_to_smem %s379, 16, [#allocation2], [#allocation3]
        $region60: #{danet_head_forward.1} parent=11 // pred_fallthru
          _
      $region12: #{danet_head_forward.1} parent=5 // pred_fallthru
        _
      %p382 = scmp.lt.s32.totalorder %s20, 2
      // Predicated region
      $region61: #{danet_head_forward.1} parent=5 // pred_check
        %p383 = pneg %p382
      $region62: #{danet_head_forward.1} parent=5 // pred_check_branch
        %385 = sbr.rel (%p383) target = $region64
      $region63: #{danet_head_forward.1} parent=5 // pred_region
        // Predicated region
        $region65: #{danet_head_forward.1} parent=63 // pred_check
          %p386 = pneg %p40
        $region66: #{danet_head_forward.1} parent=63 // pred_check_branch
          %388 = sbr.rel (%p386) target = $region68
        $region67: #{danet_head_forward.1} parent=63 // pred_region
          %p389 = scmp.lt.s32.totalorder %s20, 1
          %s390 = scalar_select %p389, %s20, 1
          %s391 = smul.addr %s390, 16
          %s392 = smul.addr %s391, 8
          %s393 = scalar_lea.vmem %s0, %s392
        $region68: #{danet_head_forward.1} parent=63 // pred_fallthru
          _
      $region64: #{danet_head_forward.1} parent=5 // pred_fallthru
        _
      %p394 = scmp.le.s32.totalorder 1, %s20
      %p395 = scmp.lt.s32.totalorder %s20, 3
      %p396 = pnand %p394, %p395
      %p397 = pneg %p396
      // Predicated region
      $region69: #{danet_head_forward.1} parent=5 // pred_check
        _
      $region70: #{danet_head_forward.1} parent=5 // pred_check_branch
        %399 = sbr.rel (%p396) target = $region72
      $region71: #{danet_head_forward.1} parent=5 // pred_region
        %s400 = ssub.s32 %s20, 1
        // Predicated region
        $region73: #{danet_head_forward.1} parent=71 // pred_check
          %p401 = pneg %p298
        $region74: #{danet_head_forward.1} parent=71 // pred_check_branch
          %403 = sbr.rel (%p401) target = $region76
        $region75: #{danet_head_forward.1} parent=71 // pred_region
          %405 = dma.done [#allocation3], 16
        $region76: #{danet_head_forward.1} parent=71 // pred_fallthru
          _
        %406 = sfence
        %p407 = scmp.lt.s32.totalorder %s25, 1
        %s408 = scalar_select %p407, %s25, 1
        %s409 = smul.addr %s408, 16
        %s410 = smul.addr %s409, 8
        %s411 = scalar_lea.vmem %s0, %s410
        %p412 = pneg %p46
        %p413 = pneg %p43
        %p414 = pneg %p67
        %p415 = pneg %p64
        %p416 = pneg %p88
        %p417 = pneg %p85
        %p418 = pneg %p109
        %p419 = pneg %p106
        %p420 = pneg %p130
        %p421 = pneg %p127
        %p422 = pneg %p151
        %p423 = pneg %p148
        %p424 = pneg %p172
        %p425 = pneg %p169
        %p426 = pneg %p193
        %p427 = pneg %p190
        %p428 = pneg %p214
        %p429 = pneg %p211
        %p430 = pneg %p235
        %p431 = pneg %p232
        %p432 = pneg %p256
        %p433 = pneg %p253
        %p434 = pneg %p277
        %p435 = pneg %p274
        %p436 = pneg %p298
        %p437 = pneg %p295
        %p438 = pneg %p324
        %p439 = pneg %p321
        %p440 = scmp.lt.s32.totalorder %s25, 1
        %s441 = scalar_select %p440, %s25, 1
        %s442 = smul.addr %s441, 2
        %s443 = smul.addr %s442, 8
        %s444 = scalar_lea.vmem %s13, %s443
        %p445 = scmp.lt.s32.totalorder %s25, 1
        %s446 = scalar_select %p445, %s25, 1
        %s447 = smul.addr %s446, 16
        %s448 = smul.addr %s447, 8
        %s449 = scalar_lea.vmem %s0, %s448
        %p450 = scmp.lt.s32.totalorder %s25, 1
        %s451 = scalar_select %p450, %s25, 1
        %s452 = smul.addr %s451, 2
        %s453 = smul.addr %s452, 8
        %s454 = scalar_lea.vmem %s13, %s453
        %v456 = vld [vmem:[%s449] sm:$0xff]
        %v457 = vld [vmem:[%s449 + $0x8] sm:$0xff]
        %v458 = vld [vmem:[%s449 + $0x10] sm:$0xff]
        %v459 = vld [vmem:[%s449 + $0x18] sm:$0xff]
        %v460 = vld [vmem:[%s449 + $0x20] sm:$0xff]
        %v461 = vld [vmem:[%s449 + $0x28] sm:$0xff]
        %v462 = vld [vmem:[%s449 + $0x30] sm:$0xff]
        %v463 = vld [vmem:[%s449 + $0x38] sm:$0xff]
        %v464 = vld [vmem:[%s449 + $0x40] sm:$0xff]
        %v465 = vld [vmem:[%s449 + $0x48] sm:$0xff]
        %v466 = vld [vmem:[%s449 + $0x50] sm:$0xff]
        %v467 = vld [vmem:[%s449 + $0x58] sm:$0xff]
        %v468 = vld [vmem:[%s449 + $0x60] sm:$0xff]
        %v469 = vld [vmem:[%s449 + $0x68] sm:$0xff]
        %v470 = vld [vmem:[%s449 + $0x70] sm:$0xff]
        %v471 = vld [vmem:[%s449 + $0x78] sm:$0xff]
        %v472 = vld [vmem:[%s1] sm:$0xff]
        %v473 = vld [vmem:[%s1 + $0x8] sm:$0xff]
        %v474 = vld [vmem:[%s1 + $0x10] sm:$0x1]
        %v475 = vld [vmem:[%s1 + $0x18] sm:$0x1]
        %484 = vrot.lane.b32.xlu0 %v457, 17
        %v485 = vpop.permute.xlu0 %484
        %486 = vrot.lane.b32.xlu0 %v459, 17
        %v487 = vpop.permute.xlu0 %486
        %488 = vrot.lane.b32.xlu0 %v461, 17
        %v489 = vpop.permute.xlu0 %488
        %490 = vrot.lane.b32.xlu0 %v463, 17
        %v491 = vpop.permute.xlu0 %490
        %492 = vrot.lane.b32.xlu0 %v465, 17
        %v493 = vpop.permute.xlu0 %492
        %494 = vrot.lane.b32.xlu0 %v467, 17
        %v495 = vpop.permute.xlu0 %494
        %496 = vrot.lane.b32.xlu0 %v469, 17
        %v497 = vpop.permute.xlu0 %496
        %498 = vrot.lane.b32.xlu0 %v471, 17
        %v499 = vpop.permute.xlu0 %498
        %516 = vrot.lane.b32.xlu0 %v456, 17
        %v517 = vpop.permute.xlu0 %516
        %518 = vrot.lane.b32.xlu0 %v458, 17
        %v519 = vpop.permute.xlu0 %518
        %520 = vrot.lane.b32.xlu0 %v460, 17
        %v521 = vpop.permute.xlu0 %520
        %522 = vrot.lane.b32.xlu0 %v462, 17
        %v523 = vpop.permute.xlu0 %522
        %524 = vrot.lane.b32.xlu0 %v464, 17
        %v525 = vpop.permute.xlu0 %524
        %526 = vrot.lane.b32.xlu0 %v466, 17
        %v527 = vpop.permute.xlu0 %526
        %528 = vrot.lane.b32.xlu0 %v468, 17
        %v529 = vpop.permute.xlu0 %528
        %530 = vrot.lane.b32.xlu0 %v470, 17
        %v531 = vpop.permute.xlu0 %530
        %vm532 = vcmask 138240
        %v533 = vsel %vm532, %v517, %v485
        %v534 = vsel %vm532, %v519, %v487
        %v535 = vsel %vm532, %v521, %v489
        %v536 = vsel %vm532, %v523, %v491
        %v537 = vsel %vm532, %v525, %v493
        %v538 = vsel %vm532, %v527, %v495
        %v539 = vsel %vm532, %v529, %v497
        %v540 = vsel %vm532, %v531, %v499
        %v557 = vsel %vm532, %v485, %v517
        %v558 = vsel %vm532, %v487, %v519
        %v559 = vsel %vm532, %v489, %v521
        %v560 = vsel %vm532, %v491, %v523
        %v561 = vsel %vm532, %v493, %v525
        %v562 = vsel %vm532, %v495, %v527
        %v563 = vsel %vm532, %v497, %v529
        %v564 = vsel %vm532, %v499, %v531
        %v565 = vperm.slane %v472, 0
        %v566 = vperm.slane %v473, 0
        %v567 = vmul.f32 %v557, %v565
        %v568 = vmul.f32 %v533, %v566
        %v569 = vmul.f32 %v558, %v565
        %v570 = vmul.f32 %v534, %v566
        %v571 = vmul.f32 %v559, %v565
        %v572 = vmul.f32 %v535, %v566
        %v573 = vmul.f32 %v560, %v565
        %v574 = vmul.f32 %v536, %v566
        %v575 = vmul.f32 %v561, %v565
        %v576 = vmul.f32 %v537, %v566
        %v577 = vmul.f32 %v562, %v565
        %v578 = vmul.f32 %v538, %v566
        %v579 = vmul.f32 %v563, %v565
        %v580 = vmul.f32 %v539, %v566
        %v581 = vmul.f32 %v564, %v565
        %v582 = vmul.f32 %v540, %v566
        %583 = vrot.lane.b32.xlu0 %v457, 16
        %v584 = vpop.permute.xlu0 %583
        %585 = vrot.lane.b32.xlu0 %v459, 16
        %v586 = vpop.permute.xlu0 %585
        %587 = vrot.lane.b32.xlu0 %v461, 16
        %v588 = vpop.permute.xlu0 %587
        %589 = vrot.lane.b32.xlu0 %v463, 16
        %v590 = vpop.permute.xlu0 %589
        %591 = vrot.lane.b32.xlu0 %v465, 16
        %v592 = vpop.permute.xlu0 %591
        %593 = vrot.lane.b32.xlu0 %v467, 16
        %v594 = vpop.permute.xlu0 %593
        %595 = vrot.lane.b32.xlu0 %v469, 16
        %v596 = vpop.permute.xlu0 %595
        %597 = vrot.lane.b32.xlu0 %v471, 16
        %v598 = vpop.permute.xlu0 %597
        %607 = vrot.lane.b32.xlu0 %v456, 16
        %v608 = vpop.permute.xlu0 %607
        %609 = vrot.lane.b32.xlu0 %v458, 16
        %v610 = vpop.permute.xlu0 %609
        %611 = vrot.lane.b32.xlu0 %v460, 16
        %v612 = vpop.permute.xlu0 %611
        %613 = vrot.lane.b32.xlu0 %v462, 16
        %v614 = vpop.permute.xlu0 %613
        %615 = vrot.lane.b32.xlu0 %v464, 16
        %v616 = vpop.permute.xlu0 %615
        %617 = vrot.lane.b32.xlu0 %v466, 16
        %v618 = vpop.permute.xlu0 %617
        %619 = vrot.lane.b32.xlu0 %v468, 16
        %v620 = vpop.permute.xlu0 %619
        %621 = vrot.lane.b32.xlu0 %v470, 16
        %v622 = vpop.permute.xlu0 %621
        %vm623 = vcmask 130048
        %v624 = vsel %vm623, %v608, %v584
        %v625 = vsel %vm623, %v610, %v586
        %v626 = vsel %vm623, %v612, %v588
        %v627 = vsel %vm623, %v614, %v590
        %v628 = vsel %vm623, %v616, %v592
        %v629 = vsel %vm623, %v618, %v594
        %v630 = vsel %vm623, %v620, %v596
        %v631 = vsel %vm623, %v622, %v598
        %v648 = vsel %vm623, %v584, %v608
        %v649 = vsel %vm623, %v586, %v610
        %v650 = vsel %vm623, %v588, %v612
        %v651 = vsel %vm623, %v590, %v614
        %v652 = vsel %vm623, %v592, %v616
        %v653 = vsel %vm623, %v594, %v618
        %v654 = vsel %vm623, %v596, %v620
        %v655 = vsel %vm623, %v598, %v622
        %v656 = vperm.slane %v472, 1
        %v657 = vperm.slane %v473, 1
        %v658 = vmul.f32 %v648, %v656
        %v659 = vmul.f32 %v624, %v657
        %v660 = vmul.f32 %v649, %v656
        %v661 = vmul.f32 %v625, %v657
        %v662 = vmul.f32 %v650, %v656
        %v663 = vmul.f32 %v626, %v657
        %v664 = vmul.f32 %v651, %v656
        %v665 = vmul.f32 %v627, %v657
        %v666 = vmul.f32 %v652, %v656
        %v667 = vmul.f32 %v628, %v657
        %v668 = vmul.f32 %v653, %v656
        %v669 = vmul.f32 %v629, %v657
        %v670 = vmul.f32 %v654, %v656
        %v671 = vmul.f32 %v630, %v657
        %v672 = vmul.f32 %v655, %v656
        %v673 = vmul.f32 %v631, %v657
        %674 = vrot.lane.b32.xlu0 %v457, 15
        %v675 = vpop.permute.xlu0 %674
        %676 = vrot.lane.b32.xlu0 %v459, 15
        %v677 = vpop.permute.xlu0 %676
        %678 = vrot.lane.b32.xlu0 %v461, 15
        %v679 = vpop.permute.xlu0 %678
        %680 = vrot.lane.b32.xlu0 %v463, 15
        %v681 = vpop.permute.xlu0 %680
        %682 = vrot.lane.b32.xlu0 %v465, 15
        %v683 = vpop.permute.xlu0 %682
        %684 = vrot.lane.b32.xlu0 %v467, 15
        %v685 = vpop.permute.xlu0 %684
        %686 = vrot.lane.b32.xlu0 %v469, 15
        %v687 = vpop.permute.xlu0 %686
        %688 = vrot.lane.b32.xlu0 %v471, 15
        %v689 = vpop.permute.xlu0 %688
        %698 = vrot.lane.b32.xlu0 %v456, 15
        %v699 = vpop.permute.xlu0 %698
        %700 = vrot.lane.b32.xlu0 %v458, 15
        %v701 = vpop.permute.xlu0 %700
        %702 = vrot.lane.b32.xlu0 %v460, 15
        %v703 = vpop.permute.xlu0 %702
        %704 = vrot.lane.b32.xlu0 %v462, 15
        %v705 = vpop.permute.xlu0 %704
        %706 = vrot.lane.b32.xlu0 %v464, 15
        %v707 = vpop.permute.xlu0 %706
        %708 = vrot.lane.b32.xlu0 %v466, 15
        %v709 = vpop.permute.xlu0 %708
        %710 = vrot.lane.b32.xlu0 %v468, 15
        %v711 = vpop.permute.xlu0 %710
        %712 = vrot.lane.b32.xlu0 %v470, 15
        %v713 = vpop.permute.xlu0 %712
        %vm714 = vcmask 121856
        %v715 = vsel %vm714, %v699, %v675
        %v716 = vsel %vm714, %v701, %v677
        %v717 = vsel %vm714, %v703, %v679
        %v718 = vsel %vm714, %v705, %v681
        %v719 = vsel %vm714, %v707, %v683
        %v720 = vsel %vm714, %v709, %v685
        %v721 = vsel %vm714, %v711, %v687
        %v722 = vsel %vm714, %v713, %v689
        %v739 = vsel %vm714, %v675, %v699
        %v740 = vsel %vm714, %v677, %v701
        %v741 = vsel %vm714, %v679, %v703
        %v742 = vsel %vm714, %v681, %v705
        %v743 = vsel %vm714, %v683, %v707
        %v744 = vsel %vm714, %v685, %v709
        %v745 = vsel %vm714, %v687, %v711
        %v746 = vsel %vm714, %v689, %v713
        %v747 = vperm.slane %v472, 2
        %v748 = vperm.slane %v473, 2
        %v749 = vmul.f32 %v739, %v747
        %v750 = vmul.f32 %v715, %v748
        %v751 = vmul.f32 %v740, %v747
        %v752 = vmul.f32 %v716, %v748
        %v753 = vmul.f32 %v741, %v747
        %v754 = vmul.f32 %v717, %v748
        %v755 = vmul.f32 %v742, %v747
        %v756 = vmul.f32 %v718, %v748
        %v757 = vmul.f32 %v743, %v747
        %v758 = vmul.f32 %v719, %v748
        %v759 = vmul.f32 %v744, %v747
        %v760 = vmul.f32 %v720, %v748
        %v761 = vmul.f32 %v745, %v747
        %v762 = vmul.f32 %v721, %v748
        %v763 = vmul.f32 %v746, %v747
        %v764 = vmul.f32 %v722, %v748
        %765 = vrot.lane.b32.xlu0 %v457, 1
        %v766 = vpop.permute.xlu0 %765
        %767 = vrot.lane.b32.xlu0 %v459, 1
        %v768 = vpop.permute.xlu0 %767
        %769 = vrot.lane.b32.xlu0 %v461, 1
        %v770 = vpop.permute.xlu0 %769
        %771 = vrot.lane.b32.xlu0 %v463, 1
        %v772 = vpop.permute.xlu0 %771
        %773 = vrot.lane.b32.xlu0 %v465, 1
        %v774 = vpop.permute.xlu0 %773
        %775 = vrot.lane.b32.xlu0 %v467, 1
        %v776 = vpop.permute.xlu0 %775
        %777 = vrot.lane.b32.xlu0 %v469, 1
        %v778 = vpop.permute.xlu0 %777
        %779 = vrot.lane.b32.xlu0 %v471, 1
        %v780 = vpop.permute.xlu0 %779
        %789 = vrot.lane.b32.xlu0 %v456, 1
        %v790 = vpop.permute.xlu0 %789
        %791 = vrot.lane.b32.xlu0 %v458, 1
        %v792 = vpop.permute.xlu0 %791
        %793 = vrot.lane.b32.xlu0 %v460, 1
        %v794 = vpop.permute.xlu0 %793
        %795 = vrot.lane.b32.xlu0 %v462, 1
        %v796 = vpop.permute.xlu0 %795
        %797 = vrot.lane.b32.xlu0 %v464, 1
        %v798 = vpop.permute.xlu0 %797
        %799 = vrot.lane.b32.xlu0 %v466, 1
        %v800 = vpop.permute.xlu0 %799
        %801 = vrot.lane.b32.xlu0 %v468, 1
        %v802 = vpop.permute.xlu0 %801
        %803 = vrot.lane.b32.xlu0 %v470, 1
        %v804 = vpop.permute.xlu0 %803
        %vm805 = vcmask 7168
        %v806 = vsel %vm805, %v790, %v766
        %v807 = vsel %vm805, %v792, %v768
        %v808 = vsel %vm805, %v794, %v770
        %v809 = vsel %vm805, %v796, %v772
        %v810 = vsel %vm805, %v798, %v774
        %v811 = vsel %vm805, %v800, %v776
        %v812 = vsel %vm805, %v802, %v778
        %v813 = vsel %vm805, %v804, %v780
        %v830 = vsel %vm805, %v766, %v790
        %v831 = vsel %vm805, %v768, %v792
        %v832 = vsel %vm805, %v770, %v794
        %v833 = vsel %vm805, %v772, %v796
        %v834 = vsel %vm805, %v774, %v798
        %v835 = vsel %vm805, %v776, %v800
        %v836 = vsel %vm805, %v778, %v802
        %v837 = vsel %vm805, %v780, %v804
        %v838 = vperm.slane %v472, 3
        %v839 = vperm.slane %v473, 3
        %v840 = vmul.f32 %v830, %v838
        %v841 = vmul.f32 %v806, %v839
        %v842 = vmul.f32 %v831, %v838
        %v843 = vmul.f32 %v807, %v839
        %v844 = vmul.f32 %v832, %v838
        %v845 = vmul.f32 %v808, %v839
        %v846 = vmul.f32 %v833, %v838
        %v847 = vmul.f32 %v809, %v839
        %v848 = vmul.f32 %v834, %v838
        %v849 = vmul.f32 %v810, %v839
        %v850 = vmul.f32 %v835, %v838
        %v851 = vmul.f32 %v811, %v839
        %v852 = vmul.f32 %v836, %v838
        %v853 = vmul.f32 %v812, %v839
        %v854 = vmul.f32 %v837, %v838
        %v855 = vmul.f32 %v813, %v839
        %v856 = vperm.slane %v472, 4
        %v857 = vperm.slane %v473, 4
        %v858 = vmul.f32 %v456, %v856
        %v859 = vmul.f32 %v457, %v857
        %v860 = vmul.f32 %v458, %v856
        %v861 = vmul.f32 %v459, %v857
        %v862 = vmul.f32 %v460, %v856
        %v863 = vmul.f32 %v461, %v857
        %v864 = vmul.f32 %v462, %v856
        %v865 = vmul.f32 %v463, %v857
        %v866 = vmul.f32 %v464, %v856
        %v867 = vmul.f32 %v465, %v857
        %v868 = vmul.f32 %v466, %v856
        %v869 = vmul.f32 %v467, %v857
        %v870 = vmul.f32 %v468, %v856
        %v871 = vmul.f32 %v469, %v857
        %v872 = vmul.f32 %v470, %v856
        %v873 = vmul.f32 %v471, %v857
        %874 = vrot.lane.b32.xlu0 %v456, 127
        %v875 = vpop.permute.xlu0 %874
        %876 = vrot.lane.b32.xlu0 %v457, 127
        %v877 = vpop.permute.xlu0 %876
        %878 = vrot.lane.b32.xlu0 %v458, 127
        %v879 = vpop.permute.xlu0 %878
        %880 = vrot.lane.b32.xlu0 %v459, 127
        %v881 = vpop.permute.xlu0 %880
        %882 = vrot.lane.b32.xlu0 %v460, 127
        %v883 = vpop.permute.xlu0 %882
        %884 = vrot.lane.b32.xlu0 %v461, 127
        %v885 = vpop.permute.xlu0 %884
        %886 = vrot.lane.b32.xlu0 %v462, 127
        %v887 = vpop.permute.xlu0 %886
        %888 = vrot.lane.b32.xlu0 %v463, 127
        %v889 = vpop.permute.xlu0 %888
        %890 = vrot.lane.b32.xlu0 %v464, 127
        %v891 = vpop.permute.xlu0 %890
        %892 = vrot.lane.b32.xlu0 %v465, 127
        %v893 = vpop.permute.xlu0 %892
        %894 = vrot.lane.b32.xlu0 %v466, 127
        %v895 = vpop.permute.xlu0 %894
        %896 = vrot.lane.b32.xlu0 %v467, 127
        %v897 = vpop.permute.xlu0 %896
        %898 = vrot.lane.b32.xlu0 %v468, 127
        %v899 = vpop.permute.xlu0 %898
        %900 = vrot.lane.b32.xlu0 %v469, 127
        %v901 = vpop.permute.xlu0 %900
        %902 = vrot.lane.b32.xlu0 %v470, 127
        %v903 = vpop.permute.xlu0 %902
        %904 = vrot.lane.b32.xlu0 %v471, 127
        %v905 = vpop.permute.xlu0 %904
        %vm906 = vcmask 1039360
        %v907 = vsel %vm906, %v875, %v877
        %v908 = vsel %vm906, %v879, %v881
        %v909 = vsel %vm906, %v883, %v885
        %v910 = vsel %vm906, %v887, %v889
        %v911 = vsel %vm906, %v891, %v893
        %v912 = vsel %vm906, %v895, %v897
        %v913 = vsel %vm906, %v899, %v901
        %v914 = vsel %vm906, %v903, %v905
        %v939 = vsel %vm906, %v877, %v875
        %v940 = vsel %vm906, %v881, %v879
        %v941 = vsel %vm906, %v885, %v883
        %v942 = vsel %vm906, %v889, %v887
        %v943 = vsel %vm906, %v893, %v891
        %v944 = vsel %vm906, %v897, %v895
        %v945 = vsel %vm906, %v901, %v899
        %v946 = vsel %vm906, %v905, %v903
        %v947 = vperm.slane %v472, 5
        %v948 = vperm.slane %v473, 5
        %v949 = vmul.f32 %v907, %v947
        %v950 = vmul.f32 %v939, %v948
        %v951 = vmul.f32 %v908, %v947
        %v952 = vmul.f32 %v940, %v948
        %v953 = vmul.f32 %v909, %v947
        %v954 = vmul.f32 %v941, %v948
        %v955 = vmul.f32 %v910, %v947
        %v956 = vmul.f32 %v942, %v948
        %v957 = vmul.f32 %v911, %v947
        %v958 = vmul.f32 %v943, %v948
        %v959 = vmul.f32 %v912, %v947
        %v960 = vmul.f32 %v944, %v948
        %v961 = vmul.f32 %v913, %v947
        %v962 = vmul.f32 %v945, %v948
        %v963 = vmul.f32 %v914, %v947
        %v964 = vmul.f32 %v946, %v948
        %965 = vrot.lane.b32.xlu0 %v456, 113
        %v966 = vpop.permute.xlu0 %965
        %967 = vrot.lane.b32.xlu0 %v457, 113
        %v968 = vpop.permute.xlu0 %967
        %969 = vrot.lane.b32.xlu0 %v458, 113
        %v970 = vpop.permute.xlu0 %969
        %971 = vrot.lane.b32.xlu0 %v459, 113
        %v972 = vpop.permute.xlu0 %971
        %973 = vrot.lane.b32.xlu0 %v460, 113
        %v974 = vpop.permute.xlu0 %973
        %975 = vrot.lane.b32.xlu0 %v461, 113
        %v976 = vpop.permute.xlu0 %975
        %977 = vrot.lane.b32.xlu0 %v462, 113
        %v978 = vpop.permute.xlu0 %977
        %979 = vrot.lane.b32.xlu0 %v463, 113
        %v980 = vpop.permute.xlu0 %979
        %981 = vrot.lane.b32.xlu0 %v464, 113
        %v982 = vpop.permute.xlu0 %981
        %983 = vrot.lane.b32.xlu0 %v465, 113
        %v984 = vpop.permute.xlu0 %983
        %985 = vrot.lane.b32.xlu0 %v466, 113
        %v986 = vpop.permute.xlu0 %985
        %987 = vrot.lane.b32.xlu0 %v467, 113
        %v988 = vpop.permute.xlu0 %987
        %989 = vrot.lane.b32.xlu0 %v468, 113
        %v990 = vpop.permute.xlu0 %989
        %991 = vrot.lane.b32.xlu0 %v469, 113
        %v992 = vpop.permute.xlu0 %991
        %993 = vrot.lane.b32.xlu0 %v470, 113
        %v994 = vpop.permute.xlu0 %993
        %995 = vrot.lane.b32.xlu0 %v471, 113
        %v996 = vpop.permute.xlu0 %995
        %vm997 = vcmask 924672
        %v998 = vsel %vm997, %v966, %v968
        %v999 = vsel %vm997, %v970, %v972
        %v1000 = vsel %vm997, %v974, %v976
        %v1001 = vsel %vm997, %v978, %v980
        %v1002 = vsel %vm997, %v982, %v984
        %v1003 = vsel %vm997, %v986, %v988
        %v1004 = vsel %vm997, %v990, %v992
        %v1005 = vsel %vm997, %v994, %v996
        %v1030 = vsel %vm997, %v968, %v966
        %v1031 = vsel %vm997, %v972, %v970
        %v1032 = vsel %vm997, %v976, %v974
        %v1033 = vsel %vm997, %v980, %v978
        %v1034 = vsel %vm997, %v984, %v982
        %v1035 = vsel %vm997, %v988, %v986
        %v1036 = vsel %vm997, %v992, %v990
        %v1037 = vsel %vm997, %v996, %v994
        %v1038 = vperm.slane %v472, 6
        %v1039 = vperm.slane %v473, 6
        %v1040 = vmul.f32 %v998, %v1038
        %v1041 = vmul.f32 %v1030, %v1039
        %v1042 = vmul.f32 %v999, %v1038
        %v1043 = vmul.f32 %v1031, %v1039
        %v1044 = vmul.f32 %v1000, %v1038
        %v1045 = vmul.f32 %v1032, %v1039
        %v1046 = vmul.f32 %v1001, %v1038
        %v1047 = vmul.f32 %v1033, %v1039
        %v1048 = vmul.f32 %v1002, %v1038
        %v1049 = vmul.f32 %v1034, %v1039
        %v1050 = vmul.f32 %v1003, %v1038
        %v1051 = vmul.f32 %v1035, %v1039
        %v1052 = vmul.f32 %v1004, %v1038
        %v1053 = vmul.f32 %v1036, %v1039
        %v1054 = vmul.f32 %v1005, %v1038
        %v1055 = vmul.f32 %v1037, %v1039
        %1056 = vrot.lane.b32.xlu0 %v456, 112
        %v1057 = vpop.permute.xlu0 %1056
        %1058 = vrot.lane.b32.xlu0 %v457, 112
        %v1059 = vpop.permute.xlu0 %1058
        %1060 = vrot.lane.b32.xlu0 %v458, 112
        %v1061 = vpop.permute.xlu0 %1060
        %1062 = vrot.lane.b32.xlu0 %v459, 112
        %v1063 = vpop.permute.xlu0 %1062
        %1064 = vrot.lane.b32.xlu0 %v460, 112
        %v1065 = vpop.permute.xlu0 %1064
        %1066 = vrot.lane.b32.xlu0 %v461, 112
        %v1067 = vpop.permute.xlu0 %1066
        %1068 = vrot.lane.b32.xlu0 %v462, 112
        %v1069 = vpop.permute.xlu0 %1068
        %1070 = vrot.lane.b32.xlu0 %v463, 112
        %v1071 = vpop.permute.xlu0 %1070
        %1072 = vrot.lane.b32.xlu0 %v464, 112
        %v1073 = vpop.permute.xlu0 %1072
        %1074 = vrot.lane.b32.xlu0 %v465, 112
        %v1075 = vpop.permute.xlu0 %1074
        %1076 = vrot.lane.b32.xlu0 %v466, 112
        %v1077 = vpop.permute.xlu0 %1076
        %1078 = vrot.lane.b32.xlu0 %v467, 112
        %v1079 = vpop.permute.xlu0 %1078
        %1080 = vrot.lane.b32.xlu0 %v468, 112
        %v1081 = vpop.permute.xlu0 %1080
        %1082 = vrot.lane.b32.xlu0 %v469, 112
        %v1083 = vpop.permute.xlu0 %1082
        %1084 = vrot.lane.b32.xlu0 %v470, 112
        %v1085 = vpop.permute.xlu0 %1084
        %1086 = vrot.lane.b32.xlu0 %v471, 112
        %v1087 = vpop.permute.xlu0 %1086
        %vm1088 = vcmask 916480
        %v1089 = vsel %vm1088, %v1057, %v1059
        %v1090 = vsel %vm1088, %v1061, %v1063
        %v1091 = vsel %vm1088, %v1065, %v1067
        %v1092 = vsel %vm1088, %v1069, %v1071
        %v1093 = vsel %vm1088, %v1073, %v1075
        %v1094 = vsel %vm1088, %v1077, %v1079
        %v1095 = vsel %vm1088, %v1081, %v1083
        %v1096 = vsel %vm1088, %v1085, %v1087
        %v1121 = vsel %vm1088, %v1059, %v1057
        %v1122 = vsel %vm1088, %v1063, %v1061
        %v1123 = vsel %vm1088, %v1067, %v1065
        %v1124 = vsel %vm1088, %v1071, %v1069
        %v1125 = vsel %vm1088, %v1075, %v1073
        %v1126 = vsel %vm1088, %v1079, %v1077
        %v1127 = vsel %vm1088, %v1083, %v1081
        %v1128 = vsel %vm1088, %v1087, %v1085
        %v1129 = vperm.slane %v472, 7
        %v1130 = vperm.slane %v473, 7
        %v1131 = vmul.f32 %v1089, %v1129
        %v1132 = vmul.f32 %v1121, %v1130
        %v1133 = vmul.f32 %v1090, %v1129
        %v1134 = vmul.f32 %v1122, %v1130
        %v1135 = vmul.f32 %v1091, %v1129
        %v1136 = vmul.f32 %v1123, %v1130
        %v1137 = vmul.f32 %v1092, %v1129
        %v1138 = vmul.f32 %v1124, %v1130
        %v1139 = vmul.f32 %v1093, %v1129
        %v1140 = vmul.f32 %v1125, %v1130
        %v1141 = vmul.f32 %v1094, %v1129
        %v1142 = vmul.f32 %v1126, %v1130
        %v1143 = vmul.f32 %v1095, %v1129
        %v1144 = vmul.f32 %v1127, %v1130
        %v1145 = vmul.f32 %v1096, %v1129
        %v1146 = vmul.f32 %v1128, %v1130
        %1147 = vrot.lane.b32.xlu0 %v456, 111
        %v1148 = vpop.permute.xlu0 %1147
        %1149 = vrot.lane.b32.xlu0 %v457, 111
        %v1150 = vpop.permute.xlu0 %1149
        %1151 = vrot.lane.b32.xlu0 %v458, 111
        %v1152 = vpop.permute.xlu0 %1151
        %1153 = vrot.lane.b32.xlu0 %v459, 111
        %v1154 = vpop.permute.xlu0 %1153
        %1155 = vrot.lane.b32.xlu0 %v460, 111
        %v1156 = vpop.permute.xlu0 %1155
        %1157 = vrot.lane.b32.xlu0 %v461, 111
        %v1158 = vpop.permute.xlu0 %1157
        %1159 = vrot.lane.b32.xlu0 %v462, 111
        %v1160 = vpop.permute.xlu0 %1159
        %1161 = vrot.lane.b32.xlu0 %v463, 111
        %v1162 = vpop.permute.xlu0 %1161
        %1163 = vrot.lane.b32.xlu0 %v464, 111
        %v1164 = vpop.permute.xlu0 %1163
        %1165 = vrot.lane.b32.xlu0 %v465, 111
        %v1166 = vpop.permute.xlu0 %1165
        %1167 = vrot.lane.b32.xlu0 %v466, 111
        %v1168 = vpop.permute.xlu0 %1167
        %1169 = vrot.lane.b32.xlu0 %v467, 111
        %v1170 = vpop.permute.xlu0 %1169
        %1171 = vrot.lane.b32.xlu0 %v468, 111
        %v1172 = vpop.permute.xlu0 %1171
        %1173 = vrot.lane.b32.xlu0 %v469, 111
        %v1174 = vpop.permute.xlu0 %1173
        %1175 = vrot.lane.b32.xlu0 %v470, 111
        %v1176 = vpop.permute.xlu0 %1175
        %1177 = vrot.lane.b32.xlu0 %v471, 111
        %v1178 = vpop.permute.xlu0 %1177
        %vm1179 = vcmask 908288
        %v1180 = vsel %vm1179, %v1148, %v1150
        %v1181 = vsel %vm1179, %v1152, %v1154
        %v1182 = vsel %vm1179, %v1156, %v1158
        %v1183 = vsel %vm1179, %v1160, %v1162
        %v1184 = vsel %vm1179, %v1164, %v1166
        %v1185 = vsel %vm1179, %v1168, %v1170
        %v1186 = vsel %vm1179, %v1172, %v1174
        %v1187 = vsel %vm1179, %v1176, %v1178
        %v1212 = vsel %vm1179, %v1150, %v1148
        %v1213 = vsel %vm1179, %v1154, %v1152
        %v1214 = vsel %vm1179, %v1158, %v1156
        %v1215 = vsel %vm1179, %v1162, %v1160
        %v1216 = vsel %vm1179, %v1166, %v1164
        %v1217 = vsel %vm1179, %v1170, %v1168
        %v1218 = vsel %vm1179, %v1174, %v1172
        %v1219 = vsel %vm1179, %v1178, %v1176
        %v1220 = vperm.slane %v474, 0
        %v1221 = vperm.slane %v475, 0
        %v1222 = vmul.f32 %v1180, %v1220
        %v1223 = vmul.f32 %v1212, %v1221
        %v1224 = vmul.f32 %v1181, %v1220
        %v1225 = vmul.f32 %v1213, %v1221
        %v1226 = vmul.f32 %v1182, %v1220
        %v1227 = vmul.f32 %v1214, %v1221
        %v1228 = vmul.f32 %v1183, %v1220
        %v1229 = vmul.f32 %v1215, %v1221
        %v1230 = vmul.f32 %v1184, %v1220
        %v1231 = vmul.f32 %v1216, %v1221
        %v1232 = vmul.f32 %v1185, %v1220
        %v1233 = vmul.f32 %v1217, %v1221
        %v1234 = vmul.f32 %v1186, %v1220
        %v1235 = vmul.f32 %v1218, %v1221
        %v1236 = vmul.f32 %v1187, %v1220
        %v1237 = vmul.f32 %v1219, %v1221
        %v1238 = vpack.c.bf16 %v569, %v567
        %v1239 = vpack.c.bf16 %v570, %v568
        %v1240 = vpack.c.bf16 %v573, %v571
        %v1241 = vpack.c.bf16 %v574, %v572
        %v1242 = vpack.c.bf16 %v577, %v575
        %v1243 = vpack.c.bf16 %v578, %v576
        %v1244 = vpack.c.bf16 %v581, %v579
        %v1245 = vpack.c.bf16 %v582, %v580
        %v1246 = vpack.c.bf16 %v660, %v658
        %v1247 = vpack.c.bf16 %v661, %v659
        %v1248 = vpack.c.bf16 %v664, %v662
        %v1249 = vpack.c.bf16 %v665, %v663
        %v1250 = vpack.c.bf16 %v668, %v666
        %v1251 = vpack.c.bf16 %v669, %v667
        %v1252 = vpack.c.bf16 %v672, %v670
        %v1253 = vpack.c.bf16 %v673, %v671
        %v1254 = vpack.c.bf16 %v751, %v749
        %v1255 = vpack.c.bf16 %v752, %v750
        %v1256 = vpack.c.bf16 %v755, %v753
        %v1257 = vpack.c.bf16 %v756, %v754
        %v1258 = vpack.c.bf16 %v759, %v757
        %v1259 = vpack.c.bf16 %v760, %v758
        %v1260 = vpack.c.bf16 %v763, %v761
        %v1261 = vpack.c.bf16 %v764, %v762
        %v1262 = vpack.c.bf16 %v842, %v840
        %v1263 = vpack.c.bf16 %v843, %v841
        %v1264 = vpack.c.bf16 %v846, %v844
        %v1265 = vpack.c.bf16 %v847, %v845
        %v1266 = vpack.c.bf16 %v850, %v848
        %v1267 = vpack.c.bf16 %v851, %v849
        %v1268 = vpack.c.bf16 %v854, %v852
        %v1269 = vpack.c.bf16 %v855, %v853
        %v1270 = vpack.c.bf16 %v860, %v858
        %v1271 = vpack.c.bf16 %v861, %v859
        %v1272 = vpack.c.bf16 %v864, %v862
        %v1273 = vpack.c.bf16 %v865, %v863
        %v1274 = vpack.c.bf16 %v868, %v866
        %v1275 = vpack.c.bf16 %v869, %v867
        %v1276 = vpack.c.bf16 %v872, %v870
        %v1277 = vpack.c.bf16 %v873, %v871
        %v1278 = vpack.c.bf16 %v951, %v949
        %v1279 = vpack.c.bf16 %v952, %v950
        %v1280 = vpack.c.bf16 %v955, %v953
        %v1281 = vpack.c.bf16 %v956, %v954
        %v1282 = vpack.c.bf16 %v959, %v957
        %v1283 = vpack.c.bf16 %v960, %v958
        %v1284 = vpack.c.bf16 %v963, %v961
        %v1285 = vpack.c.bf16 %v964, %v962
        %v1286 = vpack.c.bf16 %v1042, %v1040
        %v1287 = vpack.c.bf16 %v1043, %v1041
        %v1288 = vpack.c.bf16 %v1046, %v1044
        %v1289 = vpack.c.bf16 %v1047, %v1045
        %v1290 = vpack.c.bf16 %v1050, %v1048
        %v1291 = vpack.c.bf16 %v1051, %v1049
        %v1292 = vpack.c.bf16 %v1054, %v1052
        %v1293 = vpack.c.bf16 %v1055, %v1053
        %v1294 = vpack.c.bf16 %v1133, %v1131
        %v1295 = vpack.c.bf16 %v1134, %v1132
        %v1296 = vpack.c.bf16 %v1137, %v1135
        %v1297 = vpack.c.bf16 %v1138, %v1136
        %v1298 = vpack.c.bf16 %v1141, %v1139
        %v1299 = vpack.c.bf16 %v1142, %v1140
        %v1300 = vpack.c.bf16 %v1145, %v1143
        %v1301 = vpack.c.bf16 %v1146, %v1144
        %v1302 = vpack.c.bf16 %v1224, %v1222
        %v1303 = vpack.c.bf16 %v1225, %v1223
        %v1304 = vpack.c.bf16 %v1228, %v1226
        %v1305 = vpack.c.bf16 %v1229, %v1227
        %v1306 = vpack.c.bf16 %v1232, %v1230
        %v1307 = vpack.c.bf16 %v1233, %v1231
        %v1308 = vpack.c.bf16 %v1236, %v1234
        %v1309 = vpack.c.bf16 %v1237, %v1235
        %v1310 = vld [vmem:[%s2] sm:$0xff]
        %v1311 = vld [vmem:[%s2 + $0x8] sm:$0xff]
        %v1312 = vld [vmem:[%s2 + $0x10] sm:$0xf]
        %v1313 = vld [vmem:[%s2 + $0x14] sm:$0xff]
        %v1314 = vld [vmem:[%s2 + $0x1c] sm:$0xff]
        %v1315 = vld [vmem:[%s2 + $0x24] sm:$0xf]
        %v1322 = vunpack.c.l.b16 %v1310
        %v1323 = vunpack.c.h.b16 %v1310
        %v1324 = vunpack.c.l.b16 %v1311
        %v1325 = vunpack.c.h.b16 %v1311
        %v1326 = vunpack.c.l.b16 %v1312
        %v1327 = vunpack.c.l.b16 %v1313
        %v1328 = vunpack.c.h.b16 %v1313
        %v1329 = vunpack.c.l.b16 %v1314
        %v1330 = vunpack.c.h.b16 %v1314
        %v1331 = vunpack.c.l.b16 %v1315
        %v1332 = vpack.c.b16 %v1327, %v1322
        %v1333 = vpack.c.b16 %v1328, %v1323
        %v1334 = vpack.c.b16 %v1329, %v1324
        %v1335 = vpack.c.b16 %v1330, %v1325
        %v1336 = vpack.c.b16 %v1331, %v1326
        %vm1341 = vcmask 523264
        %v1343 = vsel %vm1341, %v1336, 0
        %1345 = vmatpush.bf16.msra.mxu0 %v1252
        %1346 = vmatpush.bf16.msra.mxu0 %v1250
        %1347 = vmatpush.bf16.msra.mxu0 %v1248
        %1348 = vmatpush.bf16.msra.mxu0 %v1246
        %1349 = vmatpush.bf16.msra.mxu0 %v1244
        %1350 = vmatpush.bf16.msra.mxu0 %v1242
        %1351 = vmatpush.bf16.msra.mxu0 %v1240
        %1352 = vmatpush.bf16.msra.mxu0 %v1238
        %1353 = vmatmul.bf16.gmra.mxu0 %v1332
        %v1354 = vpop.f32.mrf.mxu0
        %v1355 = vadd.f32 0.0, %v1354
        %v1356 = vpop.f32.mrf.mxu0
        %v1357 = vadd.f32 0.0, %v1356
        %1358 = vdwg.mxu0
        %1359 = vmatpush.bf16.msra.mxu0 %v1268
        %1360 = vmatpush.bf16.msra.mxu0 %v1266
        %1361 = vmatpush.bf16.msra.mxu0 %v1264
        %1362 = vmatpush.bf16.msra.mxu0 %v1262
        %1363 = vmatpush.bf16.msra.mxu0 %v1260
        %1364 = vmatpush.bf16.msra.mxu0 %v1258
        %1365 = vmatpush.bf16.msra.mxu0 %v1256
        %1366 = vmatpush.bf16.msra.mxu0 %v1254
        %1367 = vmatmul.bf16.gmra.mxu0 %v1333
        %v1368 = vpop.f32.mrf.mxu0
        %v1369 = vadd.f32 %v1355, %v1368
        %v1370 = vpop.f32.mrf.mxu0
        %v1371 = vadd.f32 %v1357, %v1370
        %1372 = vdwg.mxu0
        %1373 = vmatpush.bf16.msra.mxu0 %v1284
        %1374 = vmatpush.bf16.msra.mxu0 %v1282
        %1375 = vmatpush.bf16.msra.mxu0 %v1280
        %1376 = vmatpush.bf16.msra.mxu0 %v1278
        %1377 = vmatpush.bf16.msra.mxu0 %v1276
        %1378 = vmatpush.bf16.msra.mxu0 %v1274
        %1379 = vmatpush.bf16.msra.mxu0 %v1272
        %1380 = vmatpush.bf16.msra.mxu0 %v1270
        %1381 = vmatmul.bf16.gmra.mxu0 %v1334
        %v1382 = vpop.f32.mrf.mxu0
        %v1383 = vadd.f32 %v1369, %v1382
        %v1384 = vpop.f32.mrf.mxu0
        %v1385 = vadd.f32 %v1371, %v1384
        %1386 = vdwg.mxu0
        %1387 = vmatpush.bf16.msra.mxu0 %v1300
        %1388 = vmatpush.bf16.msra.mxu0 %v1298
        %1389 = vmatpush.bf16.msra.mxu0 %v1296
        %1390 = vmatpush.bf16.msra.mxu0 %v1294
        %1391 = vmatpush.bf16.msra.mxu0 %v1292
        %1392 = vmatpush.bf16.msra.mxu0 %v1290
        %1393 = vmatpush.bf16.msra.mxu0 %v1288
        %1394 = vmatpush.bf16.msra.mxu0 %v1286
        %1395 = vmatmul.bf16.gmra.mxu0 %v1335
        %v1396 = vpop.f32.mrf.mxu0
        %v1397 = vadd.f32 %v1383, %v1396
        %v1398 = vpop.f32.mrf.mxu0
        %v1399 = vadd.f32 %v1385, %v1398
        %1400 = vdwg.mxu0
        %1401 = vmatpush.bf16.msra.mxu0 0
        %1402 = vmatpush.bf16.msra.mxu0 0
        %1403 = vmatpush.bf16.msra.mxu0 0
        %1404 = vmatpush.bf16.msra.mxu0 0
        %1405 = vmatpush.bf16.msra.mxu0 %v1308
        %1406 = vmatpush.bf16.msra.mxu0 %v1306
        %1407 = vmatpush.bf16.msra.mxu0 %v1304
        %1408 = vmatpush.bf16.msra.mxu0 %v1302
        %1409 = vmatmul.bf16.gmra.mxu0 %v1343
        %v1410 = vpop.f32.mrf.mxu0
        %v1411 = vadd.f32 %v1397, %v1410
        %v1412 = vpop.f32.mrf.mxu0
        %v1413 = vadd.f32 %v1399, %v1412
        %1414 = vdwg.mxu0
        %1415 = vmatpush.bf16.msra.mxu0 %v1253
        %1416 = vmatpush.bf16.msra.mxu0 %v1251
        %1417 = vmatpush.bf16.msra.mxu0 %v1249
        %1418 = vmatpush.bf16.msra.mxu0 %v1247
        %1419 = vmatpush.bf16.msra.mxu0 %v1245
        %1420 = vmatpush.bf16.msra.mxu0 %v1243
        %1421 = vmatpush.bf16.msra.mxu0 %v1241
        %1422 = vmatpush.bf16.msra.mxu0 %v1239
        %1423 = vmatmul.bf16.gmra.mxu0 %v1332
        %v1424 = vpop.f32.mrf.mxu0
        %v1425 = vadd.f32 0.0, %v1424
        %v1426 = vpop.f32.mrf.mxu0
        %v1427 = vadd.f32 0.0, %v1426
        %1428 = vdwg.mxu0
        %1429 = vmatpush.bf16.msra.mxu0 %v1269
        %1430 = vmatpush.bf16.msra.mxu0 %v1267
        %1431 = vmatpush.bf16.msra.mxu0 %v1265
        %1432 = vmatpush.bf16.msra.mxu0 %v1263
        %1433 = vmatpush.bf16.msra.mxu0 %v1261
        %1434 = vmatpush.bf16.msra.mxu0 %v1259
        %1435 = vmatpush.bf16.msra.mxu0 %v1257
        %1436 = vmatpush.bf16.msra.mxu0 %v1255
        %1437 = vmatmul.bf16.gmra.mxu0 %v1333
        %v1438 = vpop.f32.mrf.mxu0
        %v1439 = vadd.f32 %v1425, %v1438
        %v1440 = vpop.f32.mrf.mxu0
        %v1441 = vadd.f32 %v1427, %v1440
        %1442 = vdwg.mxu0
        %1443 = vmatpush.bf16.msra.mxu0 %v1285
        %1444 = vmatpush.bf16.msra.mxu0 %v1283
        %1445 = vmatpush.bf16.msra.mxu0 %v1281
        %1446 = vmatpush.bf16.msra.mxu0 %v1279
        %1447 = vmatpush.bf16.msra.mxu0 %v1277
        %1448 = vmatpush.bf16.msra.mxu0 %v1275
        %1449 = vmatpush.bf16.msra.mxu0 %v1273
        %1450 = vmatpush.bf16.msra.mxu0 %v1271
        %1451 = vmatmul.bf16.gmra.mxu0 %v1334
        %v1452 = vpop.f32.mrf.mxu0
        %v1453 = vadd.f32 %v1439, %v1452
        %v1454 = vpop.f32.mrf.mxu0
        %v1455 = vadd.f32 %v1441, %v1454
        %1456 = vdwg.mxu0
        %1457 = vmatpush.bf16.msra.mxu0 %v1301
        %1458 = vmatpush.bf16.msra.mxu0 %v1299
        %1459 = vmatpush.bf16.msra.mxu0 %v1297
        %1460 = vmatpush.bf16.msra.mxu0 %v1295
        %1461 = vmatpush.bf16.msra.mxu0 %v1293
        %1462 = vmatpush.bf16.msra.mxu0 %v1291
        %1463 = vmatpush.bf16.msra.mxu0 %v1289
        %1464 = vmatpush.bf16.msra.mxu0 %v1287
        %1465 = vmatmul.bf16.gmra.mxu0 %v1335
        %v1466 = vpop.f32.mrf.mxu0
        %v1467 = vadd.f32 %v1453, %v1466
        %v1468 = vpop.f32.mrf.mxu0
        %v1469 = vadd.f32 %v1455, %v1468
        %1470 = vdwg.mxu0
        %1471 = vmatpush.bf16.msra.mxu0 0
        %1472 = vmatpush.bf16.msra.mxu0 0
        %1473 = vmatpush.bf16.msra.mxu0 0
        %1474 = vmatpush.bf16.msra.mxu0 0
        %1475 = vmatpush.bf16.msra.mxu0 %v1309
        %1476 = vmatpush.bf16.msra.mxu0 %v1307
        %1477 = vmatpush.bf16.msra.mxu0 %v1305
        %1478 = vmatpush.bf16.msra.mxu0 %v1303
        %1479 = vmatmul.bf16.gmra.mxu0 %v1343
        %v1480 = vpop.f32.mrf.mxu0
        %v1481 = vadd.f32 %v1467, %v1480
        %v1482 = vpop.f32.mrf.mxu0
        %v1483 = vadd.f32 %v1469, %v1482
        %1484 = vdwg.mxu0
        %v1485 = vld [vmem:[%s6] sm:$0xff]
        %v1486 = vld [vmem:[%s6 + $0x8] sm:$0xff]
        %v1487 = vld [vmem:[%s7] sm:$0xff]
        %v1488 = vld [vmem:[%s7 + $0x8] sm:$0xff]
        %1490 = vset.pattern.permute.xlu0 0
        %1491 = vperm.xlu0 %1490, %v1485
        %v1492 = vpop.permute.xlu0 %1491
        %1495 = vset.pattern.permute.xlu0 0
        %1496 = vperm.xlu0 %1495, %v1486
        %v1497 = vpop.permute.xlu0 %1496
        %v1499 = vmul.f32 %v1411, %v1492
        %v1500 = vmul.f32 %v1481, %v1492
        %v1501 = vmul.f32 %v1413, %v1497
        %v1502 = vmul.f32 %v1483, %v1497
        %1504 = vset.pattern.permute.xlu0 0
        %1505 = vperm.xlu0 %1504, %v1487
        %v1506 = vpop.permute.xlu0 %1505
        %1509 = vset.pattern.permute.xlu0 0
        %1510 = vperm.xlu0 %1509, %v1488
        %v1511 = vpop.permute.xlu0 %1510
        %v1513 = vadd.f32 %v1499, %v1506
        %v1514 = vadd.f32 %v1500, %v1506
        %v1515 = vadd.f32 %v1501, %v1511
        %v1516 = vadd.f32 %v1502, %v1511
        %v1517 = vmax.f32 %v1513, 0.0
        %v1518 = vmax.f32 %v1514, 0.0
        %v1519 = vmax.f32 %v1515, 0.0
        %v1520 = vmax.f32 %v1516, 0.0
        %v1521 = vld [vmem:[%s8] sm:$0xff]
        %v1522 = vld [vmem:[%s8 + $0x8] sm:$0xff]
        %v1523 = vld [vmem:[%s8 + $0x10] sm:$0xff]
        %v1524 = vld [vmem:[%s8 + $0x18] sm:$0xff]
        %v1525 = vld [vmem:[%s9] sm:$0xff]
        %v1526 = vld [vmem:[%s9 + $0x8] sm:$0xff]
        %v1527 = vld [vmem:[%s9 + $0x10] sm:$0xff]
        %v1528 = vld [vmem:[%s9 + $0x18] sm:$0xff]
        %1530 = vset.pattern.permute.xlu0 0
        %1531 = vperm.xlu0 %1530, %v1525
        %v1532 = vpop.permute.xlu0 %1531
        %1535 = vset.pattern.permute.xlu0 0
        %1536 = vperm.xlu0 %1535, %v1526
        %v1537 = vpop.permute.xlu0 %1536
        %1540 = vset.pattern.permute.xlu0 0
        %1541 = vperm.xlu0 %1540, %v1527
        %v1542 = vpop.permute.xlu0 %1541
        %1545 = vset.pattern.permute.xlu0 0
        %1546 = vperm.xlu0 %1545, %v1528
        %v1547 = vpop.permute.xlu0 %1546
        %v1550 = vsel %vm623, %v1521, 0
        %v1553 = vsel %vm623, %v1522, 0
        %v1556 = vsel %vm623, %v1523, 0
        %v1559 = vsel %vm623, %v1524, 0
        %1561 = vmatpush.msra.mxu0 0.0
        %1562 = vmatpush.msra.mxu0 0.0
        %1563 = vmatpush.msra.mxu0 0.0
        %1564 = vmatpush.msra.mxu0 0.0
        %1565 = vmatpush.msra.mxu0 0.0
        %1566 = vmatpush.msra.mxu0 0.0
        %1567 = vmatpush.msra.mxu0 0.0
        %1568 = vmatpush.msra.mxu0 0.0
        %1569 = vmatpush.msra.mxu0 0.0
        %1570 = vmatpush.msra.mxu0 0.0
        %1571 = vmatpush.msra.mxu0 0.0
        %1572 = vmatpush.msra.mxu0 0.0
        %1573 = vmatpush.msra.mxu0 0.0
        %1574 = vmatpush.msra.mxu0 0.0
        %1575 = vmatpush.msra.mxu0 %v1519
        %1576 = vmatpush.msra.mxu0 %v1517
        %1577 = vmatmul.f32.gmra.mxu0 %v1550
        %v1578 = vpop.f32.mrf.mxu0
        %v1579 = vadd.f32 %v1532, %v1578
        %1580 = vmatmul.f32.gmra.mxu0 %v1553
        %v1581 = vpop.f32.mrf.mxu0
        %v1582 = vadd.f32 %v1537, %v1581
        %1583 = vmatmul.f32.gmra.mxu0 %v1556
        %v1584 = vpop.f32.mrf.mxu0
        %v1585 = vadd.f32 %v1542, %v1584
        %1586 = vmatmul.f32.gmra.mxu0 %v1559
        %v1587 = vpop.f32.mrf.mxu0
        %v1588 = vadd.f32 %v1547, %v1587
        %1589 = vdwg.mxu0
        %1590 = vmatpush.msra.mxu0 0.0
        %1591 = vmatpush.msra.mxu0 0.0
        %1592 = vmatpush.msra.mxu0 0.0
        %1593 = vmatpush.msra.mxu0 0.0
        %1594 = vmatpush.msra.mxu0 0.0
        %1595 = vmatpush.msra.mxu0 0.0
        %1596 = vmatpush.msra.mxu0 0.0
        %1597 = vmatpush.msra.mxu0 0.0
        %1598 = vmatpush.msra.mxu0 0.0
        %1599 = vmatpush.msra.mxu0 0.0
        %1600 = vmatpush.msra.mxu0 0.0
        %1601 = vmatpush.msra.mxu0 0.0
        %1602 = vmatpush.msra.mxu0 0.0
        %1603 = vmatpush.msra.mxu0 0.0
        %1604 = vmatpush.msra.mxu0 %v1520
        %1605 = vmatpush.msra.mxu0 %v1518
        %1606 = vmatmul.f32.gmra.mxu0 %v1550
        %v1607 = vpop.f32.mrf.mxu0
        %v1608 = vadd.f32 %v1532, %v1607
        %1609 = vmatmul.f32.gmra.mxu0 %v1553
        %v1610 = vpop.f32.mrf.mxu0
        %v1611 = vadd.f32 %v1537, %v1610
        %1612 = vmatmul.f32.gmra.mxu0 %v1556
        %v1613 = vpop.f32.mrf.mxu0
        %v1614 = vadd.f32 %v1542, %v1613
        %1615 = vmatmul.f32.gmra.mxu0 %v1559
        %v1616 = vpop.f32.mrf.mxu0
        %v1617 = vadd.f32 %v1547, %v1616
        %1618 = vdwg.mxu0
        %1619 = vxpose.xlu0.b32.start [1/16] %v1579, 128
        %1620 = vxpose.xlu0.b32.cont [2/16] 0.0, 128
        %1621 = vxpose.xlu0.b32.cont [3/16] 0.0, 128
        %1622 = vxpose.xlu0.b32.cont [4/16] 0.0, 128
        %1623 = vxpose.xlu0.b32.cont [5/16] 0.0, 128
        %1624 = vxpose.xlu0.b32.cont [6/16] 0.0, 128
        %1625 = vxpose.xlu0.b32.cont [7/16] 0.0, 128
        %1626 = vxpose.xlu0.b32.cont [8/16] 0.0, 128
        %1627 = vxpose.xlu0.b32.cont [9/16] 0.0, 128
        %1628 = vxpose.xlu0.b32.cont [10/16] 0.0, 128
        %1629 = vxpose.xlu0.b32.cont [11/16] 0.0, 128
        %1630 = vxpose.xlu0.b32.cont [12/16] 0.0, 128
        %1631 = vxpose.xlu0.b32.cont [13/16] 0.0, 128
        %1632 = vxpose.xlu0.b32.cont [14/16] 0.0, 128
        %1633 = vxpose.xlu0.b32.cont [15/16] 0.0, 128
        %1634 = vxpose.xlu0.b32.end [16/16] 0.0, 128
        %v1635 = vpop.trf.xlu0
        %v1636 = vpop.trf.xlu0
        %v1637 = vpop.trf.xlu0
        %v1638 = vpop.trf.xlu0
        %v1639 = vpop.trf.xlu0
        %v1640 = vpop.trf.xlu0
        %v1641 = vpop.trf.xlu0
        %v1642 = vpop.trf.xlu0
        %v1643 = vpop.trf.xlu0
        %v1644 = vpop.trf.xlu0
        %v1645 = vpop.trf.xlu0
        %v1646 = vpop.trf.xlu0
        %v1647 = vpop.trf.xlu0
        %v1648 = vpop.trf.xlu0
        %v1649 = vpop.trf.xlu0
        %v1650 = vpop.trf.xlu0
        %1651 = vxpose.xlu0.b32.start [1/16] %v1608, 128
        %1652 = vxpose.xlu0.b32.cont [2/16] 0.0, 128
        %1653 = vxpose.xlu0.b32.cont [3/16] 0.0, 128
        %1654 = vxpose.xlu0.b32.cont [4/16] 0.0, 128
        %1655 = vxpose.xlu0.b32.cont [5/16] 0.0, 128
        %1656 = vxpose.xlu0.b32.cont [6/16] 0.0, 128
        %1657 = vxpose.xlu0.b32.cont [7/16] 0.0, 128
        %1658 = vxpose.xlu0.b32.cont [8/16] 0.0, 128
        %1659 = vxpose.xlu0.b32.cont [9/16] 0.0, 128
        %1660 = vxpose.xlu0.b32.cont [10/16] 0.0, 128
        %1661 = vxpose.xlu0.b32.cont [11/16] 0.0, 128
        %1662 = vxpose.xlu0.b32.cont [12/16] 0.0, 128
        %1663 = vxpose.xlu0.b32.cont [13/16] 0.0, 128
        %1664 = vxpose.xlu0.b32.cont [14/16] 0.0, 128
        %1665 = vxpose.xlu0.b32.cont [15/16] 0.0, 128
        %1666 = vxpose.xlu0.b32.end [16/16] 0.0, 128
        %v1667 = vpop.trf.xlu0
        %v1668 = vpop.trf.xlu0
        %v1669 = vpop.trf.xlu0
        %v1670 = vpop.trf.xlu0
        %v1671 = vpop.trf.xlu0
        %v1672 = vpop.trf.xlu0
        %v1673 = vpop.trf.xlu0
        %v1674 = vpop.trf.xlu0
        %v1675 = vpop.trf.xlu0
        %v1676 = vpop.trf.xlu0
        %v1677 = vpop.trf.xlu0
        %v1678 = vpop.trf.xlu0
        %v1679 = vpop.trf.xlu0
        %v1680 = vpop.trf.xlu0
        %v1681 = vpop.trf.xlu0
        %v1682 = vpop.trf.xlu0
        %vm1683 = vcmask 64512
        %v1685 = vsel %vm1683, %v1635, 0
        %v1688 = vsel %vm1683, %v1636, 0
        %v1691 = vsel %vm1683, %v1637, 0
        %v1694 = vsel %vm1683, %v1638, 0
        %v1697 = vsel %vm1683, %v1639, 0
        %v1700 = vsel %vm1683, %v1640, 0
        %v1703 = vsel %vm1683, %v1641, 0
        %v1706 = vsel %vm1683, %v1642, 0
        %v1709 = vsel %vm1683, %v1643, 0
        %v1712 = vsel %vm1683, %v1644, 0
        %v1715 = vsel %vm1683, %v1645, 0
        %v1718 = vsel %vm1683, %v1646, 0
        %v1721 = vsel %vm1683, %v1647, 0
        %v1724 = vsel %vm1683, %v1648, 0
        %v1727 = vsel %vm1683, %v1649, 0
        %v1730 = vsel %vm1683, %v1650, 0
        %v1733 = vsel %vm1683, %v1667, 0
        %v1736 = vsel %vm1683, %v1668, 0
        %v1739 = vsel %vm1683, %v1669, 0
        %v1742 = vsel %vm1683, %v1670, 0
        %v1745 = vsel %vm1683, %v1671, 0
        %v1748 = vsel %vm1683, %v1672, 0
        %v1751 = vsel %vm1683, %v1673, 0
        %v1754 = vsel %vm1683, %v1674, 0
        %v1757 = vsel %vm1683, %v1675, 0
        %v1760 = vsel %vm1683, %v1676, 0
        %v1763 = vsel %vm1683, %v1677, 0
        %v1766 = vsel %vm1683, %v1678, 0
        %v1769 = vsel %vm1683, %v1679, 0
        %v1772 = vsel %vm1683, %v1680, 0
        %v1775 = vsel %vm1683, %v1681, 0
        %v1778 = vsel %vm1683, %v1682, 0
        %1780 = vmatpush.msra.mxu0 0.0
        %1781 = vmatpush.msra.mxu0 0.0
        %1782 = vmatpush.msra.mxu0 0.0
        %1783 = vmatpush.msra.mxu0 0.0
        %1784 = vmatpush.msra.mxu0 0.0
        %1785 = vmatpush.msra.mxu0 0.0
        %1786 = vmatpush.msra.mxu0 0.0
        %1787 = vmatpush.msra.mxu0 0.0
        %1788 = vmatpush.msra.mxu0 0.0
        %1789 = vmatpush.msra.mxu0 0.0
        %1790 = vmatpush.msra.mxu0 0.0
        %1791 = vmatpush.msra.mxu0 0.0
        %1792 = vmatpush.msra.mxu0 0.0
        %1793 = vmatpush.msra.mxu0 0.0
        %1794 = vmatpush.msra.mxu0 0.0
        %1795 = vmatpush.msra.mxu0 %v1582
        %1796 = vmatmul.f32.gmra.mxu0 %v1685
        %v1797 = vpop.f32.mrf.mxu0
        %v1798 = vadd.f32 0.0, %v1797
        %1799 = vmatmul.f32.gmra.mxu0 %v1688
        %v1800 = vpop.f32.mrf.mxu0
        %v1801 = vadd.f32 0.0, %v1800
        %1802 = vmatmul.f32.gmra.mxu0 %v1691
        %v1803 = vpop.f32.mrf.mxu0
        %v1804 = vadd.f32 0.0, %v1803
        %1805 = vmatmul.f32.gmra.mxu0 %v1694
        %v1806 = vpop.f32.mrf.mxu0
        %v1807 = vadd.f32 0.0, %v1806
        %1808 = vmatmul.f32.gmra.mxu0 %v1697
        %v1809 = vpop.f32.mrf.mxu0
        %v1810 = vadd.f32 0.0, %v1809
        %1811 = vmatmul.f32.gmra.mxu0 %v1700
        %v1812 = vpop.f32.mrf.mxu0
        %v1813 = vadd.f32 0.0, %v1812
        %1814 = vmatmul.f32.gmra.mxu0 %v1703
        %v1815 = vpop.f32.mrf.mxu0
        %v1816 = vadd.f32 0.0, %v1815
        %1817 = vmatmul.f32.gmra.mxu0 %v1706
        %v1818 = vpop.f32.mrf.mxu0
        %v1819 = vadd.f32 0.0, %v1818
        %1820 = vmatmul.f32.gmra.mxu0 %v1709
        %v1821 = vpop.f32.mrf.mxu0
        %v1822 = vadd.f32 0.0, %v1821
        %1823 = vmatmul.f32.gmra.mxu0 %v1712
        %v1824 = vpop.f32.mrf.mxu0
        %v1825 = vadd.f32 0.0, %v1824
        %1826 = vmatmul.f32.gmra.mxu0 %v1715
        %v1827 = vpop.f32.mrf.mxu0
        %v1828 = vadd.f32 0.0, %v1827
        %1829 = vmatmul.f32.gmra.mxu0 %v1718
        %v1830 = vpop.f32.mrf.mxu0
        %v1831 = vadd.f32 0.0, %v1830
        %1832 = vmatmul.f32.gmra.mxu0 %v1721
        %v1833 = vpop.f32.mrf.mxu0
        %v1834 = vadd.f32 0.0, %v1833
        %1835 = vmatmul.f32.gmra.mxu0 %v1724
        %v1836 = vpop.f32.mrf.mxu0
        %v1837 = vadd.f32 0.0, %v1836
        %1838 = vmatmul.f32.gmra.mxu0 %v1727
        %v1839 = vpop.f32.mrf.mxu0
        %v1840 = vadd.f32 0.0, %v1839
        %1841 = vmatmul.f32.gmra.mxu0 %v1730
        %v1842 = vpop.f32.mrf.mxu0
        %v1843 = vadd.f32 0.0, %v1842
        %1844 = vmatmul.f32.gmra.mxu0 %v1733
        %v1845 = vpop.f32.mrf.mxu0
        %v1846 = vadd.f32 0.0, %v1845
        %1847 = vmatmul.f32.gmra.mxu0 %v1736
        %v1848 = vpop.f32.mrf.mxu0
        %v1849 = vadd.f32 0.0, %v1848
        %1850 = vmatmul.f32.gmra.mxu0 %v1739
        %v1851 = vpop.f32.mrf.mxu0
        %v1852 = vadd.f32 0.0, %v1851
        %1853 = vmatmul.f32.gmra.mxu0 %v1742
        %v1854 = vpop.f32.mrf.mxu0
        %v1855 = vadd.f32 0.0, %v1854
        %1856 = vmatmul.f32.gmra.mxu0 %v1745
        %v1857 = vpop.f32.mrf.mxu0
        %v1858 = vadd.f32 0.0, %v1857
        %1859 = vmatmul.f32.gmra.mxu0 %v1748
        %v1860 = vpop.f32.mrf.mxu0
        %v1861 = vadd.f32 0.0, %v1860
        %1862 = vmatmul.f32.gmra.mxu0 %v1751
        %v1863 = vpop.f32.mrf.mxu0
        %v1864 = vadd.f32 0.0, %v1863
        %1865 = vmatmul.f32.gmra.mxu0 %v1754
        %v1866 = vpop.f32.mrf.mxu0
        %v1867 = vadd.f32 0.0, %v1866
        %1868 = vmatmul.f32.gmra.mxu0 %v1757
        %v1869 = vpop.f32.mrf.mxu0
        %v1870 = vadd.f32 0.0, %v1869
        %1871 = vmatmul.f32.gmra.mxu0 %v1760
        %v1872 = vpop.f32.mrf.mxu0
        %v1873 = vadd.f32 0.0, %v1872
        %1874 = vmatmul.f32.gmra.mxu0 %v1763
        %v1875 = vpop.f32.mrf.mxu0
        %v1876 = vadd.f32 0.0, %v1875
        %1877 = vmatmul.f32.gmra.mxu0 %v1766
        %v1878 = vpop.f32.mrf.mxu0
        %v1879 = vadd.f32 0.0, %v1878
        %1880 = vmatmul.f32.gmra.mxu0 %v1769
        %v1881 = vpop.f32.mrf.mxu0
        %v1882 = vadd.f32 0.0, %v1881
        %1883 = vmatmul.f32.gmra.mxu0 %v1772
        %v1884 = vpop.f32.mrf.mxu0
        %v1885 = vadd.f32 0.0, %v1884
        %1886 = vmatmul.f32.gmra.mxu0 %v1775
        %v1887 = vpop.f32.mrf.mxu0
        %v1888 = vadd.f32 0.0, %v1887
        %1889 = vmatmul.f32.gmra.mxu0 %v1778
        %v1890 = vpop.f32.mrf.mxu0
        %v1891 = vadd.f32 0.0, %v1890
        %1892 = vdwg.mxu0
        %1893 = vmatpush.msra.mxu0 0.0
        %1894 = vmatpush.msra.mxu0 0.0
        %1895 = vmatpush.msra.mxu0 0.0
        %1896 = vmatpush.msra.mxu0 0.0
        %1897 = vmatpush.msra.mxu0 0.0
        %1898 = vmatpush.msra.mxu0 0.0
        %1899 = vmatpush.msra.mxu0 0.0
        %1900 = vmatpush.msra.mxu0 0.0
        %1901 = vmatpush.msra.mxu0 0.0
        %1902 = vmatpush.msra.mxu0 0.0
        %1903 = vmatpush.msra.mxu0 0.0
        %1904 = vmatpush.msra.mxu0 0.0
        %1905 = vmatpush.msra.mxu0 0.0
        %1906 = vmatpush.msra.mxu0 0.0
        %1907 = vmatpush.msra.mxu0 0.0
        %1908 = vmatpush.msra.mxu0 %v1611
        %1909 = vmatmul.f32.gmra.mxu0 %v1685
        %v1910 = vpop.f32.mrf.mxu0
        %v1911 = vadd.f32 0.0, %v1910
        %1912 = vmatmul.f32.gmra.mxu0 %v1688
        %v1913 = vpop.f32.mrf.mxu0
        %v1914 = vadd.f32 0.0, %v1913
        %1915 = vmatmul.f32.gmra.mxu0 %v1691
        %v1916 = vpop.f32.mrf.mxu0
        %v1917 = vadd.f32 0.0, %v1916
        %1918 = vmatmul.f32.gmra.mxu0 %v1694
        %v1919 = vpop.f32.mrf.mxu0
        %v1920 = vadd.f32 0.0, %v1919
        %1921 = vmatmul.f32.gmra.mxu0 %v1697
        %v1922 = vpop.f32.mrf.mxu0
        %v1923 = vadd.f32 0.0, %v1922
        %1924 = vmatmul.f32.gmra.mxu0 %v1700
        %v1925 = vpop.f32.mrf.mxu0
        %v1926 = vadd.f32 0.0, %v1925
        %1927 = vmatmul.f32.gmra.mxu0 %v1703
        %v1928 = vpop.f32.mrf.mxu0
        %v1929 = vadd.f32 0.0, %v1928
        %1930 = vmatmul.f32.gmra.mxu0 %v1706
        %v1931 = vpop.f32.mrf.mxu0
        %v1932 = vadd.f32 0.0, %v1931
        %1933 = vmatmul.f32.gmra.mxu0 %v1709
        %v1934 = vpop.f32.mrf.mxu0
        %v1935 = vadd.f32 0.0, %v1934
        %1936 = vmatmul.f32.gmra.mxu0 %v1712
        %v1937 = vpop.f32.mrf.mxu0
        %v1938 = vadd.f32 0.0, %v1937
        %1939 = vmatmul.f32.gmra.mxu0 %v1715
        %v1940 = vpop.f32.mrf.mxu0
        %v1941 = vadd.f32 0.0, %v1940
        %1942 = vmatmul.f32.gmra.mxu0 %v1718
        %v1943 = vpop.f32.mrf.mxu0
        %v1944 = vadd.f32 0.0, %v1943
        %1945 = vmatmul.f32.gmra.mxu0 %v1721
        %v1946 = vpop.f32.mrf.mxu0
        %v1947 = vadd.f32 0.0, %v1946
        %1948 = vmatmul.f32.gmra.mxu0 %v1724
        %v1949 = vpop.f32.mrf.mxu0
        %v1950 = vadd.f32 0.0, %v1949
        %1951 = vmatmul.f32.gmra.mxu0 %v1727
        %v1952 = vpop.f32.mrf.mxu0
        %v1953 = vadd.f32 0.0, %v1952
        %1954 = vmatmul.f32.gmra.mxu0 %v1730
        %v1955 = vpop.f32.mrf.mxu0
        %v1956 = vadd.f32 0.0, %v1955
        %1957 = vmatmul.f32.gmra.mxu0 %v1733
        %v1958 = vpop.f32.mrf.mxu0
        %v1959 = vadd.f32 0.0, %v1958
        %1960 = vmatmul.f32.gmra.mxu0 %v1736
        %v1961 = vpop.f32.mrf.mxu0
        %v1962 = vadd.f32 0.0, %v1961
        %1963 = vmatmul.f32.gmra.mxu0 %v1739
        %v1964 = vpop.f32.mrf.mxu0
        %v1965 = vadd.f32 0.0, %v1964
        %1966 = vmatmul.f32.gmra.mxu0 %v1742
        %v1967 = vpop.f32.mrf.mxu0
        %v1968 = vadd.f32 0.0, %v1967
        %1969 = vmatmul.f32.gmra.mxu0 %v1745
        %v1970 = vpop.f32.mrf.mxu0
        %v1971 = vadd.f32 0.0, %v1970
        %1972 = vmatmul.f32.gmra.mxu0 %v1748
        %v1973 = vpop.f32.mrf.mxu0
        %v1974 = vadd.f32 0.0, %v1973
        %1975 = vmatmul.f32.gmra.mxu0 %v1751
        %v1976 = vpop.f32.mrf.mxu0
        %v1977 = vadd.f32 0.0, %v1976
        %1978 = vmatmul.f32.gmra.mxu0 %v1754
        %v1979 = vpop.f32.mrf.mxu0
        %v1980 = vadd.f32 0.0, %v1979
        %1981 = vmatmul.f32.gmra.mxu0 %v1757
        %v1982 = vpop.f32.mrf.mxu0
        %v1983 = vadd.f32 0.0, %v1982
        %1984 = vmatmul.f32.gmra.mxu0 %v1760
        %v1985 = vpop.f32.mrf.mxu0
        %v1986 = vadd.f32 0.0, %v1985
        %1987 = vmatmul.f32.gmra.mxu0 %v1763
        %v1988 = vpop.f32.mrf.mxu0
        %v1989 = vadd.f32 0.0, %v1988
        %1990 = vmatmul.f32.gmra.mxu0 %v1766
        %v1991 = vpop.f32.mrf.mxu0
        %v1992 = vadd.f32 0.0, %v1991
        %1993 = vmatmul.f32.gmra.mxu0 %v1769
        %v1994 = vpop.f32.mrf.mxu0
        %v1995 = vadd.f32 0.0, %v1994
        %1996 = vmatmul.f32.gmra.mxu0 %v1772
        %v1997 = vpop.f32.mrf.mxu0
        %v1998 = vadd.f32 0.0, %v1997
        %1999 = vmatmul.f32.gmra.mxu0 %v1775
        %v2000 = vpop.f32.mrf.mxu0
        %v2001 = vadd.f32 0.0, %v2000
        %2002 = vmatmul.f32.gmra.mxu0 %v1778
        %v2003 = vpop.f32.mrf.mxu0
        %v2004 = vadd.f32 0.0, %v2003
        %2005 = vdwg.mxu0
        %v2006 = vmax.f32 %v1798, %v1911
        %2007 = vmax.xlane.f32.xlu0 %v2006
        %v2008 = vpop.xlane.xlu0 %2007
        %v2009 = vmax.f32 %v1801, %v1914
        %2010 = vmax.xlane.f32.xlu0 %v2009
        %v2011 = vpop.xlane.xlu0 %2010
        %v2012 = vmax.f32 %v1804, %v1917
        %2013 = vmax.xlane.f32.xlu0 %v2012
        %v2014 = vpop.xlane.xlu0 %2013
        %v2015 = vmax.f32 %v1807, %v1920
        %2016 = vmax.xlane.f32.xlu0 %v2015
        %v2017 = vpop.xlane.xlu0 %2016
        %v2018 = vmax.f32 %v1810, %v1923
        %2019 = vmax.xlane.f32.xlu0 %v2018
        %v2020 = vpop.xlane.xlu0 %2019
        %v2021 = vmax.f32 %v1813, %v1926
        %2022 = vmax.xlane.f32.xlu0 %v2021
        %v2023 = vpop.xlane.xlu0 %2022
        %v2024 = vmax.f32 %v1816, %v1929
        %2025 = vmax.xlane.f32.xlu0 %v2024
        %v2026 = vpop.xlane.xlu0 %2025
        %v2027 = vmax.f32 %v1819, %v1932
        %2028 = vmax.xlane.f32.xlu0 %v2027
        %v2029 = vpop.xlane.xlu0 %2028
        %v2030 = vmax.f32 %v1822, %v1935
        %2031 = vmax.xlane.f32.xlu0 %v2030
        %v2032 = vpop.xlane.xlu0 %2031
        %v2033 = vmax.f32 %v1825, %v1938
        %2034 = vmax.xlane.f32.xlu0 %v2033
        %v2035 = vpop.xlane.xlu0 %2034
        %v2036 = vmax.f32 %v1828, %v1941
        %2037 = vmax.xlane.f32.xlu0 %v2036
        %v2038 = vpop.xlane.xlu0 %2037
        %v2039 = vmax.f32 %v1831, %v1944
        %2040 = vmax.xlane.f32.xlu0 %v2039
        %v2041 = vpop.xlane.xlu0 %2040
        %v2042 = vmax.f32 %v1834, %v1947
        %2043 = vmax.xlane.f32.xlu0 %v2042
        %v2044 = vpop.xlane.xlu0 %2043
        %v2045 = vmax.f32 %v1837, %v1950
        %2046 = vmax.xlane.f32.xlu0 %v2045
        %v2047 = vpop.xlane.xlu0 %2046
        %v2048 = vmax.f32 %v1840, %v1953
        %2049 = vmax.xlane.f32.xlu0 %v2048
        %v2050 = vpop.xlane.xlu0 %2049
        %v2051 = vmax.f32 %v1843, %v1956
        %2052 = vmax.xlane.f32.xlu0 %v2051
        %v2053 = vpop.xlane.xlu0 %2052
        %v2054 = vmax.f32 %v1846, %v1959
        %2055 = vmax.xlane.f32.xlu0 %v2054
        %v2056 = vpop.xlane.xlu0 %2055
        %v2057 = vmax.f32 %v1849, %v1962
        %2058 = vmax.xlane.f32.xlu0 %v2057
        %v2059 = vpop.xlane.xlu0 %2058
        %v2060 = vmax.f32 %v1852, %v1965
        %2061 = vmax.xlane.f32.xlu0 %v2060
        %v2062 = vpop.xlane.xlu0 %2061
        %v2063 = vmax.f32 %v1855, %v1968
        %2064 = vmax.xlane.f32.xlu0 %v2063
        %v2065 = vpop.xlane.xlu0 %2064
        %v2066 = vmax.f32 %v1858, %v1971
        %2067 = vmax.xlane.f32.xlu0 %v2066
        %v2068 = vpop.xlane.xlu0 %2067
        %v2069 = vmax.f32 %v1861, %v1974
        %2070 = vmax.xlane.f32.xlu0 %v2069
        %v2071 = vpop.xlane.xlu0 %2070
        %v2072 = vmax.f32 %v1864, %v1977
        %2073 = vmax.xlane.f32.xlu0 %v2072
        %v2074 = vpop.xlane.xlu0 %2073
        %v2075 = vmax.f32 %v1867, %v1980
        %2076 = vmax.xlane.f32.xlu0 %v2075
        %v2077 = vpop.xlane.xlu0 %2076
        %v2078 = vmax.f32 %v1870, %v1983
        %2079 = vmax.xlane.f32.xlu0 %v2078
        %v2080 = vpop.xlane.xlu0 %2079
        %v2081 = vmax.f32 %v1873, %v1986
        %2082 = vmax.xlane.f32.xlu0 %v2081
        %v2083 = vpop.xlane.xlu0 %2082
        %v2084 = vmax.f32 %v1876, %v1989
        %2085 = vmax.xlane.f32.xlu0 %v2084
        %v2086 = vpop.xlane.xlu0 %2085
        %v2087 = vmax.f32 %v1879, %v1992
        %2088 = vmax.xlane.f32.xlu0 %v2087
        %v2089 = vpop.xlane.xlu0 %2088
        %v2090 = vmax.f32 %v1882, %v1995
        %2091 = vmax.xlane.f32.xlu0 %v2090
        %v2092 = vpop.xlane.xlu0 %2091
        %v2093 = vmax.f32 %v1885, %v1998
        %2094 = vmax.xlane.f32.xlu0 %v2093
        %v2095 = vpop.xlane.xlu0 %2094
        %v2096 = vmax.f32 %v1888, %v2001
        %2097 = vmax.xlane.f32.xlu0 %v2096
        %v2098 = vpop.xlane.xlu0 %2097
        %v2099 = vmax.f32 %v1891, %v2004
        %2100 = vmax.xlane.f32.xlu0 %v2099
        %v2101 = vpop.xlane.xlu0 %2100
        %v2102 = vsub.f32 %v1798, %v2008
        %v2103 = vsub.f32 %v1911, %v2008
        %v2104 = vsub.f32 %v1801, %v2011
        %v2105 = vsub.f32 %v1914, %v2011
        %v2106 = vsub.f32 %v1804, %v2014
        %v2107 = vsub.f32 %v1917, %v2014
        %v2108 = vsub.f32 %v1807, %v2017
        %v2109 = vsub.f32 %v1920, %v2017
        %v2110 = vsub.f32 %v1810, %v2020
        %v2111 = vsub.f32 %v1923, %v2020
        %v2112 = vsub.f32 %v1813, %v2023
        %v2113 = vsub.f32 %v1926, %v2023
        %v2114 = vsub.f32 %v1816, %v2026
        %v2115 = vsub.f32 %v1929, %v2026
        %v2116 = vsub.f32 %v1819, %v2029
        %v2117 = vsub.f32 %v1932, %v2029
        %v2118 = vsub.f32 %v1822, %v2032
        %v2119 = vsub.f32 %v1935, %v2032
        %v2120 = vsub.f32 %v1825, %v2035
        %v2121 = vsub.f32 %v1938, %v2035
        %v2122 = vsub.f32 %v1828, %v2038
        %v2123 = vsub.f32 %v1941, %v2038
        %v2124 = vsub.f32 %v1831, %v2041
        %v2125 = vsub.f32 %v1944, %v2041
        %v2126 = vsub.f32 %v1834, %v2044
        %v2127 = vsub.f32 %v1947, %v2044
        %v2128 = vsub.f32 %v1837, %v2047
        %v2129 = vsub.f32 %v1950, %v2047
        %v2130 = vsub.f32 %v1840, %v2050
        %v2131 = vsub.f32 %v1953, %v2050
        %v2132 = vsub.f32 %v1843, %v2053
        %v2133 = vsub.f32 %v1956, %v2053
        %v2134 = vsub.f32 %v1846, %v2056
        %v2135 = vsub.f32 %v1959, %v2056
        %v2136 = vsub.f32 %v1849, %v2059
        %v2137 = vsub.f32 %v1962, %v2059
        %v2138 = vsub.f32 %v1852, %v2062
        %v2139 = vsub.f32 %v1965, %v2062
        %v2140 = vsub.f32 %v1855, %v2065
        %v2141 = vsub.f32 %v1968, %v2065
        %v2142 = vsub.f32 %v1858, %v2068
        %v2143 = vsub.f32 %v1971, %v2068
        %v2144 = vsub.f32 %v1861, %v2071
        %v2145 = vsub.f32 %v1974, %v2071
        %v2146 = vsub.f32 %v1864, %v2074
        %v2147 = vsub.f32 %v1977, %v2074
        %v2148 = vsub.f32 %v1867, %v2077
        %v2149 = vsub.f32 %v1980, %v2077
        %v2150 = vsub.f32 %v1870, %v2080
        %v2151 = vsub.f32 %v1983, %v2080
        %v2152 = vsub.f32 %v1873, %v2083
        %v2153 = vsub.f32 %v1986, %v2083
        %v2154 = vsub.f32 %v1876, %v2086
        %v2155 = vsub.f32 %v1989, %v2086
        %v2156 = vsub.f32 %v1879, %v2089
        %v2157 = vsub.f32 %v1992, %v2089
        %v2158 = vsub.f32 %v1882, %v2092
        %v2159 = vsub.f32 %v1995, %v2092
        %v2160 = vsub.f32 %v1885, %v2095
        %v2161 = vsub.f32 %v1998, %v2095
        %v2162 = vsub.f32 %v1888, %v2098
        %v2163 = vsub.f32 %v2001, %v2098
        %v2164 = vsub.f32 %v1891, %v2101
        %v2165 = vsub.f32 %v2004, %v2101
        %v2166 = vmul.f32 %v2102, 1.442695
        %v2167 = vpow.pop %v2166
        %v2168 = vmul.f32 %v2103, 1.442695
        %v2169 = vpow.pop %v2168
        %v2170 = vmul.f32 %v2104, 1.442695
        %v2171 = vpow.pop %v2170
        %v2172 = vmul.f32 %v2105, 1.442695
        %v2173 = vpow.pop %v2172
        %v2174 = vmul.f32 %v2106, 1.442695
        %v2175 = vpow.pop %v2174
        %v2176 = vmul.f32 %v2107, 1.442695
        %v2177 = vpow.pop %v2176
        %v2178 = vmul.f32 %v2108, 1.442695
        %v2179 = vpow.pop %v2178
        %v2180 = vmul.f32 %v2109, 1.442695
        %v2181 = vpow.pop %v2180
        %v2182 = vmul.f32 %v2110, 1.442695
        %v2183 = vpow.pop %v2182
        %v2184 = vmul.f32 %v2111, 1.442695
        %v2185 = vpow.pop %v2184
        %v2186 = vmul.f32 %v2112, 1.442695
        %v2187 = vpow.pop %v2186
        %v2188 = vmul.f32 %v2113, 1.442695
        %v2189 = vpow.pop %v2188
        %v2190 = vmul.f32 %v2114, 1.442695
        %v2191 = vpow.pop %v2190
        %v2192 = vmul.f32 %v2115, 1.442695
        %v2193 = vpow.pop %v2192
        %v2194 = vmul.f32 %v2116, 1.442695
        %v2195 = vpow.pop %v2194
        %v2196 = vmul.f32 %v2117, 1.442695
        %v2197 = vpow.pop %v2196
        %v2198 = vmul.f32 %v2118, 1.442695
        %v2199 = vpow.pop %v2198
        %v2200 = vmul.f32 %v2119, 1.442695
        %v2201 = vpow.pop %v2200
        %v2202 = vmul.f32 %v2120, 1.442695
        %v2203 = vpow.pop %v2202
        %v2204 = vmul.f32 %v2121, 1.442695
        %v2205 = vpow.pop %v2204
        %v2206 = vmul.f32 %v2122, 1.442695
        %v2207 = vpow.pop %v2206
        %v2208 = vmul.f32 %v2123, 1.442695
        %v2209 = vpow.pop %v2208
        %v2210 = vmul.f32 %v2124, 1.442695
        %v2211 = vpow.pop %v2210
        %v2212 = vmul.f32 %v2125, 1.442695
        %v2213 = vpow.pop %v2212
        %v2214 = vmul.f32 %v2126, 1.442695
        %v2215 = vpow.pop %v2214
        %v2216 = vmul.f32 %v2127, 1.442695
        %v2217 = vpow.pop %v2216
        %v2218 = vmul.f32 %v2128, 1.442695
        %v2219 = vpow.pop %v2218
        %v2220 = vmul.f32 %v2129, 1.442695
        %v2221 = vpow.pop %v2220
        %v2222 = vmul.f32 %v2130, 1.442695
        %v2223 = vpow.pop %v2222
        %v2224 = vmul.f32 %v2131, 1.442695
        %v2225 = vpow.pop %v2224
        %v2226 = vmul.f32 %v2132, 1.442695
        %v2227 = vpow.pop %v2226
        %v2228 = vmul.f32 %v2133, 1.442695
        %v2229 = vpow.pop %v2228
        %v2230 = vmul.f32 %v2134, 1.442695
        %v2231 = vpow.pop %v2230
        %v2232 = vmul.f32 %v2135, 1.442695
        %v2233 = vpow.pop %v2232
        %v2234 = vmul.f32 %v2136, 1.442695
        %v2235 = vpow.pop %v2234
        %v2236 = vmul.f32 %v2137, 1.442695
        %v2237 = vpow.pop %v2236
        %v2238 = vmul.f32 %v2138, 1.442695
        %v2239 = vpow.pop %v2238
        %v2240 = vmul.f32 %v2139, 1.442695
        %v2241 = vpow.pop %v2240
        %v2242 = vmul.f32 %v2140, 1.442695
        %v2243 = vpow.pop %v2242
        %v2244 = vmul.f32 %v2141, 1.442695
        %v2245 = vpow.pop %v2244
        %v2246 = vmul.f32 %v2142, 1.442695
        %v2247 = vpow.pop %v2246
        %v2248 = vmul.f32 %v2143, 1.442695
        %v2249 = vpow.pop %v2248
        %v2250 = vmul.f32 %v2144, 1.442695
        %v2251 = vpow.pop %v2250
        %v2252 = vmul.f32 %v2145, 1.442695
        %v2253 = vpow.pop %v2252
        %v2254 = vmul.f32 %v2146, 1.442695
        %v2255 = vpow.pop %v2254
        %v2256 = vmul.f32 %v2147, 1.442695
        %v2257 = vpow.pop %v2256
        %v2258 = vmul.f32 %v2148, 1.442695
        %v2259 = vpow.pop %v2258
        %v2260 = vmul.f32 %v2149, 1.442695
        %v2261 = vpow.pop %v2260
        %v2262 = vmul.f32 %v2150, 1.442695
        %v2263 = vpow.pop %v2262
        %v2264 = vmul.f32 %v2151, 1.442695
        %v2265 = vpow.pop %v2264
        %v2266 = vmul.f32 %v2152, 1.442695
        %v2267 = vpow.pop %v2266
        %v2268 = vmul.f32 %v2153, 1.442695
        %v2269 = vpow.pop %v2268
        %v2270 = vmul.f32 %v2154, 1.442695
        %v2271 = vpow.pop %v2270
        %v2272 = vmul.f32 %v2155, 1.442695
        %v2273 = vpow.pop %v2272
        %v2274 = vmul.f32 %v2156, 1.442695
        %v2275 = vpow.pop %v2274
        %v2276 = vmul.f32 %v2157, 1.442695
        %v2277 = vpow.pop %v2276
        %v2278 = vmul.f32 %v2158, 1.442695
        %v2279 = vpow.pop %v2278
        %v2280 = vmul.f32 %v2159, 1.442695
        %v2281 = vpow.pop %v2280
        %v2282 = vmul.f32 %v2160, 1.442695
        %v2283 = vpow.pop %v2282
        %v2284 = vmul.f32 %v2161, 1.442695
        %v2285 = vpow.pop %v2284
        %v2286 = vmul.f32 %v2162, 1.442695
        %v2287 = vpow.pop %v2286
        %v2288 = vmul.f32 %v2163, 1.442695
        %v2289 = vpow.pop %v2288
        %v2290 = vmul.f32 %v2164, 1.442695
        %v2291 = vpow.pop %v2290
        %v2292 = vmul.f32 %v2165, 1.442695
        %v2293 = vpow.pop %v2292
        %v2294 = vadd.f32 %v2167, %v2169
        %2295 = vadd.xlane.f32.xlu0 %v2294
        %v2296 = vpop.xlane.xlu0 %2295
        %v2297 = vadd.f32 %v2171, %v2173
        %2298 = vadd.xlane.f32.xlu0 %v2297
        %v2299 = vpop.xlane.xlu0 %2298
        %v2300 = vadd.f32 %v2175, %v2177
        %2301 = vadd.xlane.f32.xlu0 %v2300
        %v2302 = vpop.xlane.xlu0 %2301
        %v2303 = vadd.f32 %v2179, %v2181
        %2304 = vadd.xlane.f32.xlu0 %v2303
        %v2305 = vpop.xlane.xlu0 %2304
        %v2306 = vadd.f32 %v2183, %v2185
        %2307 = vadd.xlane.f32.xlu0 %v2306
        %v2308 = vpop.xlane.xlu0 %2307
        %v2309 = vadd.f32 %v2187, %v2189
        %2310 = vadd.xlane.f32.xlu0 %v2309
        %v2311 = vpop.xlane.xlu0 %2310
        %v2312 = vadd.f32 %v2191, %v2193
        %2313 = vadd.xlane.f32.xlu0 %v2312
        %v2314 = vpop.xlane.xlu0 %2313
        %v2315 = vadd.f32 %v2195, %v2197
        %2316 = vadd.xlane.f32.xlu0 %v2315
        %v2317 = vpop.xlane.xlu0 %2316
        %v2318 = vadd.f32 %v2199, %v2201
        %2319 = vadd.xlane.f32.xlu0 %v2318
        %v2320 = vpop.xlane.xlu0 %2319
        %v2321 = vadd.f32 %v2203, %v2205
        %2322 = vadd.xlane.f32.xlu0 %v2321
        %v2323 = vpop.xlane.xlu0 %2322
        %v2324 = vadd.f32 %v2207, %v2209
        %2325 = vadd.xlane.f32.xlu0 %v2324
        %v2326 = vpop.xlane.xlu0 %2325
        %v2327 = vadd.f32 %v2211, %v2213
        %2328 = vadd.xlane.f32.xlu0 %v2327
        %v2329 = vpop.xlane.xlu0 %2328
        %v2330 = vadd.f32 %v2215, %v2217
        %2331 = vadd.xlane.f32.xlu0 %v2330
        %v2332 = vpop.xlane.xlu0 %2331
        %v2333 = vadd.f32 %v2219, %v2221
        %2334 = vadd.xlane.f32.xlu0 %v2333
        %v2335 = vpop.xlane.xlu0 %2334
        %v2336 = vadd.f32 %v2223, %v2225
        %2337 = vadd.xlane.f32.xlu0 %v2336
        %v2338 = vpop.xlane.xlu0 %2337
        %v2339 = vadd.f32 %v2227, %v2229
        %2340 = vadd.xlane.f32.xlu0 %v2339
        %v2341 = vpop.xlane.xlu0 %2340
        %v2342 = vadd.f32 %v2231, %v2233
        %2343 = vadd.xlane.f32.xlu0 %v2342
        %v2344 = vpop.xlane.xlu0 %2343
        %v2345 = vadd.f32 %v2235, %v2237
        %2346 = vadd.xlane.f32.xlu0 %v2345
        %v2347 = vpop.xlane.xlu0 %2346
        %v2348 = vadd.f32 %v2239, %v2241
        %2349 = vadd.xlane.f32.xlu0 %v2348
        %v2350 = vpop.xlane.xlu0 %2349
        %v2351 = vadd.f32 %v2243, %v2245
        %2352 = vadd.xlane.f32.xlu0 %v2351
        %v2353 = vpop.xlane.xlu0 %2352
        %v2354 = vadd.f32 %v2247, %v2249
        %2355 = vadd.xlane.f32.xlu0 %v2354
        %v2356 = vpop.xlane.xlu0 %2355
        %v2357 = vadd.f32 %v2251, %v2253
        %2358 = vadd.xlane.f32.xlu0 %v2357
        %v2359 = vpop.xlane.xlu0 %2358
        %v2360 = vadd.f32 %v2255, %v2257
        %2361 = vadd.xlane.f32.xlu0 %v2360
        %v2362 = vpop.xlane.xlu0 %2361
        %v2363 = vadd.f32 %v2259, %v2261
        %2364 = vadd.xlane.f32.xlu0 %v2363
        %v2365 = vpop.xlane.xlu0 %2364
        %v2366 = vadd.f32 %v2263, %v2265
        %2367 = vadd.xlane.f32.xlu0 %v2366
        %v2368 = vpop.xlane.xlu0 %2367
        %v2369 = vadd.f32 %v2267, %v2269
        %2370 = vadd.xlane.f32.xlu0 %v2369
        %v2371 = vpop.xlane.xlu0 %2370
        %v2372 = vadd.f32 %v2271, %v2273
        %2373 = vadd.xlane.f32.xlu0 %v2372
        %v2374 = vpop.xlane.xlu0 %2373
        %v2375 = vadd.f32 %v2275, %v2277
        %2376 = vadd.xlane.f32.xlu0 %v2375
        %v2377 = vpop.xlane.xlu0 %2376
        %v2378 = vadd.f32 %v2279, %v2281
        %2379 = vadd.xlane.f32.xlu0 %v2378
        %v2380 = vpop.xlane.xlu0 %2379
        %v2381 = vadd.f32 %v2283, %v2285
        %2382 = vadd.xlane.f32.xlu0 %v2381
        %v2383 = vpop.xlane.xlu0 %2382
        %v2384 = vadd.f32 %v2287, %v2289
        %2385 = vadd.xlane.f32.xlu0 %v2384
        %v2386 = vpop.xlane.xlu0 %2385
        %v2387 = vadd.f32 %v2291, %v2293
        %2388 = vadd.xlane.f32.xlu0 %v2387
        %v2389 = vpop.xlane.xlu0 %2388
        %v2390 = vrcp.pop %v2296
        %v2391 = vrcp.pop %v2299
        %v2392 = vrcp.pop %v2302
        %v2393 = vrcp.pop %v2305
        %v2394 = vrcp.pop %v2308
        %v2395 = vrcp.pop %v2311
        %v2396 = vrcp.pop %v2314
        %v2397 = vrcp.pop %v2317
        %v2398 = vrcp.pop %v2320
        %v2399 = vrcp.pop %v2323
        %v2400 = vrcp.pop %v2326
        %v2401 = vrcp.pop %v2329
        %v2402 = vrcp.pop %v2332
        %v2403 = vrcp.pop %v2335
        %v2404 = vrcp.pop %v2338
        %v2405 = vrcp.pop %v2341
        %v2406 = vrcp.pop %v2344
        %v2407 = vrcp.pop %v2347
        %v2408 = vrcp.pop %v2350
        %v2409 = vrcp.pop %v2353
        %v2410 = vrcp.pop %v2356
        %v2411 = vrcp.pop %v2359
        %v2412 = vrcp.pop %v2362
        %v2413 = vrcp.pop %v2365
        %v2414 = vrcp.pop %v2368
        %v2415 = vrcp.pop %v2371
        %v2416 = vrcp.pop %v2374
        %v2417 = vrcp.pop %v2377
        %v2418 = vrcp.pop %v2380
        %v2419 = vrcp.pop %v2383
        %v2420 = vrcp.pop %v2386
        %v2421 = vrcp.pop %v2389
        %v2422 = vmul.f32 %v2167, %v2390
        %v2423 = vmul.f32 %v2169, %v2390
        %v2424 = vmul.f32 %v2171, %v2391
        %v2425 = vmul.f32 %v2173, %v2391
        %v2426 = vmul.f32 %v2175, %v2392
        %v2427 = vmul.f32 %v2177, %v2392
        %v2428 = vmul.f32 %v2179, %v2393
        %v2429 = vmul.f32 %v2181, %v2393
        %v2430 = vmul.f32 %v2183, %v2394
        %v2431 = vmul.f32 %v2185, %v2394
        %v2432 = vmul.f32 %v2187, %v2395
        %v2433 = vmul.f32 %v2189, %v2395
        %v2434 = vmul.f32 %v2191, %v2396
        %v2435 = vmul.f32 %v2193, %v2396
        %v2436 = vmul.f32 %v2195, %v2397
        %v2437 = vmul.f32 %v2197, %v2397
        %v2438 = vmul.f32 %v2199, %v2398
        %v2439 = vmul.f32 %v2201, %v2398
        %v2440 = vmul.f32 %v2203, %v2399
        %v2441 = vmul.f32 %v2205, %v2399
        %v2442 = vmul.f32 %v2207, %v2400
        %v2443 = vmul.f32 %v2209, %v2400
        %v2444 = vmul.f32 %v2211, %v2401
        %v2445 = vmul.f32 %v2213, %v2401
        %v2446 = vmul.f32 %v2215, %v2402
        %v2447 = vmul.f32 %v2217, %v2402
        %v2448 = vmul.f32 %v2219, %v2403
        %v2449 = vmul.f32 %v2221, %v2403
        %v2450 = vmul.f32 %v2223, %v2404
        %v2451 = vmul.f32 %v2225, %v2404
        %v2452 = vmul.f32 %v2227, %v2405
        %v2453 = vmul.f32 %v2229, %v2405
        %v2454 = vmul.f32 %v2231, %v2406
        %v2455 = vmul.f32 %v2233, %v2406
        %v2456 = vmul.f32 %v2235, %v2407
        %v2457 = vmul.f32 %v2237, %v2407
        %v2458 = vmul.f32 %v2239, %v2408
        %v2459 = vmul.f32 %v2241, %v2408
        %v2460 = vmul.f32 %v2243, %v2409
        %v2461 = vmul.f32 %v2245, %v2409
        %v2462 = vmul.f32 %v2247, %v2410
        %v2463 = vmul.f32 %v2249, %v2410
        %v2464 = vmul.f32 %v2251, %v2411
        %v2465 = vmul.f32 %v2253, %v2411
        %v2466 = vmul.f32 %v2255, %v2412
        %v2467 = vmul.f32 %v2257, %v2412
        %v2468 = vmul.f32 %v2259, %v2413
        %v2469 = vmul.f32 %v2261, %v2413
        %v2470 = vmul.f32 %v2263, %v2414
        %v2471 = vmul.f32 %v2265, %v2414
        %v2472 = vmul.f32 %v2267, %v2415
        %v2473 = vmul.f32 %v2269, %v2415
        %v2474 = vmul.f32 %v2271, %v2416
        %v2475 = vmul.f32 %v2273, %v2416
        %v2476 = vmul.f32 %v2275, %v2417
        %v2477 = vmul.f32 %v2277, %v2417
        %v2478 = vmul.f32 %v2279, %v2418
        %v2479 = vmul.f32 %v2281, %v2418
        %v2480 = vmul.f32 %v2283, %v2419
        %v2481 = vmul.f32 %v2285, %v2419
        %v2482 = vmul.f32 %v2287, %v2420
        %v2483 = vmul.f32 %v2289, %v2420
        %v2484 = vmul.f32 %v2291, %v2421
        %v2485 = vmul.f32 %v2293, %v2421
        %2486 = vmatpush.xpose.msra.mxu0 %v2452
        %2487 = vmatpush.xpose.msra.mxu0 %v2450
        %2488 = vmatpush.xpose.msra.mxu0 %v2448
        %2489 = vmatpush.xpose.msra.mxu0 %v2446
        %2490 = vmatpush.xpose.msra.mxu0 %v2444
        %2491 = vmatpush.xpose.msra.mxu0 %v2442
        %2492 = vmatpush.xpose.msra.mxu0 %v2440
        %2493 = vmatpush.xpose.msra.mxu0 %v2438
        %2494 = vmatpush.xpose.msra.mxu0 %v2436
        %2495 = vmatpush.xpose.msra.mxu0 %v2434
        %2496 = vmatpush.xpose.msra.mxu0 %v2432
        %2497 = vmatpush.xpose.msra.mxu0 %v2430
        %2498 = vmatpush.xpose.msra.mxu0 %v2428
        %2499 = vmatpush.xpose.msra.mxu0 %v2426
        %2500 = vmatpush.xpose.msra.mxu0 %v2424
        %2501 = vmatpush.xpose.msra.mxu0 %v2422
        %2502 = vmatmul.f32.gmra.mxu0 %v1585
        %v2503 = vpop.f32.mrf.mxu0
        %v2504 = vadd.f32 0.0, %v2503
        %2505 = vmatmul.f32.gmra.mxu0 %v1588
        %v2506 = vpop.f32.mrf.mxu0
        %v2507 = vadd.f32 0.0, %v2506
        %2508 = vdwg.mxu0
        %2509 = vmatpush.xpose.msra.mxu0 %v2453
        %2510 = vmatpush.xpose.msra.mxu0 %v2451
        %2511 = vmatpush.xpose.msra.mxu0 %v2449
        %2512 = vmatpush.xpose.msra.mxu0 %v2447
        %2513 = vmatpush.xpose.msra.mxu0 %v2445
        %2514 = vmatpush.xpose.msra.mxu0 %v2443
        %2515 = vmatpush.xpose.msra.mxu0 %v2441
        %2516 = vmatpush.xpose.msra.mxu0 %v2439
        %2517 = vmatpush.xpose.msra.mxu0 %v2437
        %2518 = vmatpush.xpose.msra.mxu0 %v2435
        %2519 = vmatpush.xpose.msra.mxu0 %v2433
        %2520 = vmatpush.xpose.msra.mxu0 %v2431
        %2521 = vmatpush.xpose.msra.mxu0 %v2429
        %2522 = vmatpush.xpose.msra.mxu0 %v2427
        %2523 = vmatpush.xpose.msra.mxu0 %v2425
        %2524 = vmatpush.xpose.msra.mxu0 %v2423
        %2525 = vmatmul.f32.gmra.mxu0 %v1614
        %v2526 = vpop.f32.mrf.mxu0
        %v2527 = vadd.f32 %v2504, %v2526
        %2528 = vmatmul.f32.gmra.mxu0 %v1617
        %v2529 = vpop.f32.mrf.mxu0
        %v2530 = vadd.f32 %v2507, %v2529
        %2531 = vdwg.mxu0
        %2532 = vmatpush.xpose.msra.mxu0 %v2484
        %2533 = vmatpush.xpose.msra.mxu0 %v2482
        %2534 = vmatpush.xpose.msra.mxu0 %v2480
        %2535 = vmatpush.xpose.msra.mxu0 %v2478
        %2536 = vmatpush.xpose.msra.mxu0 %v2476
        %2537 = vmatpush.xpose.msra.mxu0 %v2474
        %2538 = vmatpush.xpose.msra.mxu0 %v2472
        %2539 = vmatpush.xpose.msra.mxu0 %v2470
        %2540 = vmatpush.xpose.msra.mxu0 %v2468
        %2541 = vmatpush.xpose.msra.mxu0 %v2466
        %2542 = vmatpush.xpose.msra.mxu0 %v2464
        %2543 = vmatpush.xpose.msra.mxu0 %v2462
        %2544 = vmatpush.xpose.msra.mxu0 %v2460
        %2545 = vmatpush.xpose.msra.mxu0 %v2458
        %2546 = vmatpush.xpose.msra.mxu0 %v2456
        %2547 = vmatpush.xpose.msra.mxu0 %v2454
        %2548 = vmatmul.f32.gmra.mxu0 %v1585
        %v2549 = vpop.f32.mrf.mxu0
        %v2550 = vadd.f32 0.0, %v2549
        %2551 = vmatmul.f32.gmra.mxu0 %v1588
        %v2552 = vpop.f32.mrf.mxu0
        %v2553 = vadd.f32 0.0, %v2552
        %2554 = vdwg.mxu0
        %2555 = vmatpush.xpose.msra.mxu0 %v2485
        %2556 = vmatpush.xpose.msra.mxu0 %v2483
        %2557 = vmatpush.xpose.msra.mxu0 %v2481
        %2558 = vmatpush.xpose.msra.mxu0 %v2479
        %2559 = vmatpush.xpose.msra.mxu0 %v2477
        %2560 = vmatpush.xpose.msra.mxu0 %v2475
        %2561 = vmatpush.xpose.msra.mxu0 %v2473
        %2562 = vmatpush.xpose.msra.mxu0 %v2471
        %2563 = vmatpush.xpose.msra.mxu0 %v2469
        %2564 = vmatpush.xpose.msra.mxu0 %v2467
        %2565 = vmatpush.xpose.msra.mxu0 %v2465
        %2566 = vmatpush.xpose.msra.mxu0 %v2463
        %2567 = vmatpush.xpose.msra.mxu0 %v2461
        %2568 = vmatpush.xpose.msra.mxu0 %v2459
        %2569 = vmatpush.xpose.msra.mxu0 %v2457
        %2570 = vmatpush.xpose.msra.mxu0 %v2455
        %2571 = vmatmul.f32.gmra.mxu0 %v1614
        %v2572 = vpop.f32.mrf.mxu0
        %v2573 = vadd.f32 %v2550, %v2572
        %2574 = vmatmul.f32.gmra.mxu0 %v1617
        %v2575 = vpop.f32.mrf.mxu0
        %v2576 = vadd.f32 %v2553, %v2575
        %2577 = vdwg.mxu0
        %s2578 = sld [smem:[#allocation2]]
        %v2579 = vstv %s2578
        %v2580 = vmul.f32 %v2579, %v2527
        %v2581 = vmul.f32 %v2579, %v2573
        %v2582 = vmul.f32 %v2579, %v2530
        %v2583 = vmul.f32 %v2579, %v2576
        %v2584 = vadd.f32 %v2580, %v1517
        %v2585 = vadd.f32 %v2581, %v1518
        %v2586 = vadd.f32 %v2582, %v1519
        %v2587 = vadd.f32 %v2583, %v1520
        %2590 = vrot.lane.b32.xlu0 %v2585, 17
        %v2591 = vpop.permute.xlu0 %2590
        %2592 = vrot.lane.b32.xlu0 %v2587, 17
        %v2593 = vpop.permute.xlu0 %2592
        %2598 = vrot.lane.b32.xlu0 %v2584, 17
        %v2599 = vpop.permute.xlu0 %2598
        %2600 = vrot.lane.b32.xlu0 %v2586, 17
        %v2601 = vpop.permute.xlu0 %2600
        %v2602 = vsel %vm532, %v2599, %v2591
        %v2603 = vsel %vm532, %v2601, %v2593
        %v2608 = vsel %vm532, %v2591, %v2599
        %v2609 = vsel %vm532, %v2593, %v2601
        %v2610 = vmul.f32 %v2608, %v565
        %v2611 = vmul.f32 %v2602, %v566
        %v2612 = vmul.f32 %v2609, %v565
        %v2613 = vmul.f32 %v2603, %v566
        %2614 = vrot.lane.b32.xlu0 %v2585, 16
        %v2615 = vpop.permute.xlu0 %2614
        %2616 = vrot.lane.b32.xlu0 %v2587, 16
        %v2617 = vpop.permute.xlu0 %2616
        %2620 = vrot.lane.b32.xlu0 %v2584, 16
        %v2621 = vpop.permute.xlu0 %2620
        %2622 = vrot.lane.b32.xlu0 %v2586, 16
        %v2623 = vpop.permute.xlu0 %2622
        %v2624 = vsel %vm623, %v2621, %v2615
        %v2625 = vsel %vm623, %v2623, %v2617
        %v2630 = vsel %vm623, %v2615, %v2621
        %v2631 = vsel %vm623, %v2617, %v2623
        %v2632 = vmul.f32 %v2630, %v656
        %v2633 = vmul.f32 %v2624, %v657
        %v2634 = vmul.f32 %v2631, %v656
        %v2635 = vmul.f32 %v2625, %v657
        %2636 = vrot.lane.b32.xlu0 %v2585, 15
        %v2637 = vpop.permute.xlu0 %2636
        %2638 = vrot.lane.b32.xlu0 %v2587, 15
        %v2639 = vpop.permute.xlu0 %2638
        %2642 = vrot.lane.b32.xlu0 %v2584, 15
        %v2643 = vpop.permute.xlu0 %2642
        %2644 = vrot.lane.b32.xlu0 %v2586, 15
        %v2645 = vpop.permute.xlu0 %2644
        %v2646 = vsel %vm714, %v2643, %v2637
        %v2647 = vsel %vm714, %v2645, %v2639
        %v2652 = vsel %vm714, %v2637, %v2643
        %v2653 = vsel %vm714, %v2639, %v2645
        %v2654 = vmul.f32 %v2652, %v747
        %v2655 = vmul.f32 %v2646, %v748
        %v2656 = vmul.f32 %v2653, %v747
        %v2657 = vmul.f32 %v2647, %v748
        %2658 = vrot.lane.b32.xlu0 %v2585, 1
        %v2659 = vpop.permute.xlu0 %2658
        %2660 = vrot.lane.b32.xlu0 %v2587, 1
        %v2661 = vpop.permute.xlu0 %2660
        %2664 = vrot.lane.b32.xlu0 %v2584, 1
        %v2665 = vpop.permute.xlu0 %2664
        %2666 = vrot.lane.b32.xlu0 %v2586, 1
        %v2667 = vpop.permute.xlu0 %2666
        %v2668 = vsel %vm805, %v2665, %v2659
        %v2669 = vsel %vm805, %v2667, %v2661
        %v2674 = vsel %vm805, %v2659, %v2665
        %v2675 = vsel %vm805, %v2661, %v2667
        %v2676 = vmul.f32 %v2674, %v838
        %v2677 = vmul.f32 %v2668, %v839
        %v2678 = vmul.f32 %v2675, %v838
        %v2679 = vmul.f32 %v2669, %v839
        %v2680 = vmul.f32 %v2584, %v856
        %v2681 = vmul.f32 %v2585, %v857
        %v2682 = vmul.f32 %v2586, %v856
        %v2683 = vmul.f32 %v2587, %v857
        %2684 = vrot.lane.b32.xlu0 %v2584, 127
        %v2685 = vpop.permute.xlu0 %2684
        %2686 = vrot.lane.b32.xlu0 %v2585, 127
        %v2687 = vpop.permute.xlu0 %2686
        %2688 = vrot.lane.b32.xlu0 %v2586, 127
        %v2689 = vpop.permute.xlu0 %2688
        %2690 = vrot.lane.b32.xlu0 %v2587, 127
        %v2691 = vpop.permute.xlu0 %2690
        %v2692 = vsel %vm906, %v2685, %v2687
        %v2693 = vsel %vm906, %v2689, %v2691
        %v2700 = vsel %vm906, %v2687, %v2685
        %v2701 = vsel %vm906, %v2691, %v2689
        %v2702 = vmul.f32 %v2692, %v947
        %v2703 = vmul.f32 %v2700, %v948
        %v2704 = vmul.f32 %v2693, %v947
        %v2705 = vmul.f32 %v2701, %v948
        %2706 = vrot.lane.b32.xlu0 %v2584, 113
        %v2707 = vpop.permute.xlu0 %2706
        %2708 = vrot.lane.b32.xlu0 %v2585, 113
        %v2709 = vpop.permute.xlu0 %2708
        %2710 = vrot.lane.b32.xlu0 %v2586, 113
        %v2711 = vpop.permute.xlu0 %2710
        %2712 = vrot.lane.b32.xlu0 %v2587, 113
        %v2713 = vpop.permute.xlu0 %2712
        %v2714 = vsel %vm997, %v2707, %v2709
        %v2715 = vsel %vm997, %v2711, %v2713
        %v2722 = vsel %vm997, %v2709, %v2707
        %v2723 = vsel %vm997, %v2713, %v2711
        %v2724 = vmul.f32 %v2714, %v1038
        %v2725 = vmul.f32 %v2722, %v1039
        %v2726 = vmul.f32 %v2715, %v1038
        %v2727 = vmul.f32 %v2723, %v1039
        %2728 = vrot.lane.b32.xlu0 %v2584, 112
        %v2729 = vpop.permute.xlu0 %2728
        %2730 = vrot.lane.b32.xlu0 %v2585, 112
        %v2731 = vpop.permute.xlu0 %2730
        %2732 = vrot.lane.b32.xlu0 %v2586, 112
        %v2733 = vpop.permute.xlu0 %2732
        %2734 = vrot.lane.b32.xlu0 %v2587, 112
        %v2735 = vpop.permute.xlu0 %2734
        %v2736 = vsel %vm1088, %v2729, %v2731
        %v2737 = vsel %vm1088, %v2733, %v2735
        %v2744 = vsel %vm1088, %v2731, %v2729
        %v2745 = vsel %vm1088, %v2735, %v2733
        %v2746 = vmul.f32 %v2736, %v1129
        %v2747 = vmul.f32 %v2744, %v1130
        %v2748 = vmul.f32 %v2737, %v1129
        %v2749 = vmul.f32 %v2745, %v1130
        %2750 = vrot.lane.b32.xlu0 %v2584, 111
        %v2751 = vpop.permute.xlu0 %2750
        %2752 = vrot.lane.b32.xlu0 %v2585, 111
        %v2753 = vpop.permute.xlu0 %2752
        %2754 = vrot.lane.b32.xlu0 %v2586, 111
        %v2755 = vpop.permute.xlu0 %2754
        %2756 = vrot.lane.b32.xlu0 %v2587, 111
        %v2757 = vpop.permute.xlu0 %2756
        %v2758 = vsel %vm1179, %v2751, %v2753
        %v2759 = vsel %vm1179, %v2755, %v2757
        %v2766 = vsel %vm1179, %v2753, %v2751
        %v2767 = vsel %vm1179, %v2757, %v2755
        %v2768 = vmul.f32 %v2758, %v1220
        %v2769 = vmul.f32 %v2766, %v1221
        %v2770 = vmul.f32 %v2759, %v1220
        %v2771 = vmul.f32 %v2767, %v1221
        %v2772 = vpack.c.bf16 %v2612, %v2610
        %v2773 = vpack.c.bf16 %v2613, %v2611
        %v2774 = vpack.c.bf16 %v2634, %v2632
        %v2775 = vpack.c.bf16 %v2635, %v2633
        %v2776 = vpack.c.bf16 %v2656, %v2654
        %v2777 = vpack.c.bf16 %v2657, %v2655
        %v2778 = vpack.c.bf16 %v2678, %v2676
        %v2779 = vpack.c.bf16 %v2679, %v2677
        %v2780 = vpack.c.bf16 %v2682, %v2680
        %v2781 = vpack.c.bf16 %v2683, %v2681
        %v2782 = vpack.c.bf16 %v2704, %v2702
        %v2783 = vpack.c.bf16 %v2705, %v2703
        %v2784 = vpack.c.bf16 %v2726, %v2724
        %v2785 = vpack.c.bf16 %v2727, %v2725
        %v2786 = vpack.c.bf16 %v2748, %v2746
        %v2787 = vpack.c.bf16 %v2749, %v2747
        %v2788 = vpack.c.bf16 %v2770, %v2768
        %v2789 = vpack.c.bf16 %v2771, %v2769
        %v2790 = vld [vmem:[%s4] sm:$0xff]
        %v2791 = vld [vmem:[%s4 + $0x8] sm:$0xff]
        %v2794 = vunpack.c.l.b16 %v2790
        %v2795 = vunpack.c.h.b16 %v2790
        %v2796 = vunpack.c.l.b16 %v2791
        %v2797 = vunpack.c.h.b16 %v2791
        %v2798 = vpack.c.b16 %v2796, %v2794
        %v2799 = vpack.c.b16 %v2797, %v2795
        %v2802 = vsel %vm623, %v2799, 0
        %2804 = vmatpush.bf16.msra.mxu0 %v2786
        %2805 = vmatpush.bf16.msra.mxu0 %v2784
        %2806 = vmatpush.bf16.msra.mxu0 %v2782
        %2807 = vmatpush.bf16.msra.mxu0 %v2780
        %2808 = vmatpush.bf16.msra.mxu0 %v2778
        %2809 = vmatpush.bf16.msra.mxu0 %v2776
        %2810 = vmatpush.bf16.msra.mxu0 %v2774
        %2811 = vmatpush.bf16.msra.mxu0 %v2772
        %2812 = vmatmul.bf16.gmra.mxu0 %v2798
        %v2813 = vpop.f32.mrf.mxu0
        %v2814 = vadd.f32 0.0, %v2813
        %v2815 = vpop.f32.mrf.mxu0
        %v2816 = vadd.f32 0.0, %v2815
        %2817 = vdwg.mxu0
        %2818 = vmatpush.bf16.msra.mxu0 0
        %2819 = vmatpush.bf16.msra.mxu0 0
        %2820 = vmatpush.bf16.msra.mxu0 0
        %2821 = vmatpush.bf16.msra.mxu0 0
        %2822 = vmatpush.bf16.msra.mxu0 0
        %2823 = vmatpush.bf16.msra.mxu0 0
        %2824 = vmatpush.bf16.msra.mxu0 0
        %2825 = vmatpush.bf16.msra.mxu0 %v2788
        %2826 = vmatmul.bf16.gmra.mxu0 %v2802
        %v2827 = vpop.f32.mrf.mxu0
        %v2828 = vadd.f32 %v2814, %v2827
        %v2829 = vpop.f32.mrf.mxu0
        %v2830 = vadd.f32 %v2816, %v2829
        %2831 = vdwg.mxu0
        %2832 = vmatpush.bf16.msra.mxu0 %v2787
        %2833 = vmatpush.bf16.msra.mxu0 %v2785
        %2834 = vmatpush.bf16.msra.mxu0 %v2783
        %2835 = vmatpush.bf16.msra.mxu0 %v2781
        %2836 = vmatpush.bf16.msra.mxu0 %v2779
        %2837 = vmatpush.bf16.msra.mxu0 %v2777
        %2838 = vmatpush.bf16.msra.mxu0 %v2775
        %2839 = vmatpush.bf16.msra.mxu0 %v2773
        %2840 = vmatmul.bf16.gmra.mxu0 %v2798
        %v2841 = vpop.f32.mrf.mxu0
        %v2842 = vadd.f32 0.0, %v2841
        %v2843 = vpop.f32.mrf.mxu0
        %v2844 = vadd.f32 0.0, %v2843
        %2845 = vdwg.mxu0
        %2846 = vmatpush.bf16.msra.mxu0 0
        %2847 = vmatpush.bf16.msra.mxu0 0
        %2848 = vmatpush.bf16.msra.mxu0 0
        %2849 = vmatpush.bf16.msra.mxu0 0
        %2850 = vmatpush.bf16.msra.mxu0 0
        %2851 = vmatpush.bf16.msra.mxu0 0
        %2852 = vmatpush.bf16.msra.mxu0 0
        %2853 = vmatpush.bf16.msra.mxu0 %v2789
        %2854 = vmatmul.bf16.gmra.mxu0 %v2802
        %v2855 = vpop.f32.mrf.mxu0
        %v2856 = vadd.f32 %v2842, %v2855
        %v2857 = vpop.f32.mrf.mxu0
        %v2858 = vadd.f32 %v2844, %v2857
        %2859 = vdwg.mxu0
        %v2860 = vld [vmem:[%s6 + $0x20] sm:$0xff]
        %v2861 = vld [vmem:[%s6 + $0x28] sm:$0xff]
        %v2862 = vld [vmem:[%s7 + $0x20] sm:$0xff]
        %v2863 = vld [vmem:[%s7 + $0x28] sm:$0xff]
        %2865 = vset.pattern.permute.xlu0 0
        %2866 = vperm.xlu0 %2865, %v2860
        %v2867 = vpop.permute.xlu0 %2866
        %2870 = vset.pattern.permute.xlu0 0
        %2871 = vperm.xlu0 %2870, %v2861
        %v2872 = vpop.permute.xlu0 %2871
        %v2874 = vmul.f32 %v2828, %v2867
        %v2875 = vmul.f32 %v2856, %v2867
        %v2876 = vmul.f32 %v2830, %v2872
        %v2877 = vmul.f32 %v2858, %v2872
        %2879 = vset.pattern.permute.xlu0 0
        %2880 = vperm.xlu0 %2879, %v2862
        %v2881 = vpop.permute.xlu0 %2880
        %2884 = vset.pattern.permute.xlu0 0
        %2885 = vperm.xlu0 %2884, %v2863
        %v2886 = vpop.permute.xlu0 %2885
        %v2888 = vadd.f32 %v2874, %v2881
        %v2889 = vadd.f32 %v2875, %v2881
        %v2890 = vadd.f32 %v2876, %v2886
        %v2891 = vadd.f32 %v2877, %v2886
        %v2892 = vmax.f32 %v2888, 0.0
        %v2893 = vmax.f32 %v2889, 0.0
        %v2894 = vmax.f32 %v2890, 0.0
        %v2895 = vmax.f32 %v2891, 0.0
        %v2896 = vld [vmem:[%s3] sm:$0xff]
        %v2897 = vld [vmem:[%s3 + $0x8] sm:$0xff]
        %v2898 = vld [vmem:[%s3 + $0x10] sm:$0xf]
        %v2899 = vld [vmem:[%s3 + $0x14] sm:$0xff]
        %v2900 = vld [vmem:[%s3 + $0x1c] sm:$0xff]
        %v2901 = vld [vmem:[%s3 + $0x24] sm:$0xf]
        %v2908 = vunpack.c.l.b16 %v2896
        %v2909 = vunpack.c.h.b16 %v2896
        %v2910 = vunpack.c.l.b16 %v2897
        %v2911 = vunpack.c.h.b16 %v2897
        %v2912 = vunpack.c.l.b16 %v2898
        %v2913 = vunpack.c.l.b16 %v2899
        %v2914 = vunpack.c.h.b16 %v2899
        %v2915 = vunpack.c.l.b16 %v2900
        %v2916 = vunpack.c.h.b16 %v2900
        %v2917 = vunpack.c.l.b16 %v2901
        %v2918 = vpack.c.b16 %v2913, %v2908
        %v2919 = vpack.c.b16 %v2914, %v2909
        %v2920 = vpack.c.b16 %v2915, %v2910
        %v2921 = vpack.c.b16 %v2916, %v2911
        %v2922 = vpack.c.b16 %v2917, %v2912
        %v2928 = vsel %vm1341, %v2922, 0
        %2930 = vmatpush.bf16.msra.mxu0 %v1252
        %2931 = vmatpush.bf16.msra.mxu0 %v1250
        %2932 = vmatpush.bf16.msra.mxu0 %v1248
        %2933 = vmatpush.bf16.msra.mxu0 %v1246
        %2934 = vmatpush.bf16.msra.mxu0 %v1244
        %2935 = vmatpush.bf16.msra.mxu0 %v1242
        %2936 = vmatpush.bf16.msra.mxu0 %v1240
        %2937 = vmatpush.bf16.msra.mxu0 %v1238
        %2938 = vmatmul.bf16.gmra.mxu0 %v2918
        %v2939 = vpop.f32.mrf.mxu0
        %v2940 = vadd.f32 0.0, %v2939
        %v2941 = vpop.f32.mrf.mxu0
        %v2942 = vadd.f32 0.0, %v2941
        %2943 = vdwg.mxu0
        %2944 = vmatpush.bf16.msra.mxu0 %v1268
        %2945 = vmatpush.bf16.msra.mxu0 %v1266
        %2946 = vmatpush.bf16.msra.mxu0 %v1264
        %2947 = vmatpush.bf16.msra.mxu0 %v1262
        %2948 = vmatpush.bf16.msra.mxu0 %v1260
        %2949 = vmatpush.bf16.msra.mxu0 %v1258
        %2950 = vmatpush.bf16.msra.mxu0 %v1256
        %2951 = vmatpush.bf16.msra.mxu0 %v1254
        %2952 = vmatmul.bf16.gmra.mxu0 %v2919
        %v2953 = vpop.f32.mrf.mxu0
        %v2954 = vadd.f32 %v2940, %v2953
        %v2955 = vpop.f32.mrf.mxu0
        %v2956 = vadd.f32 %v2942, %v2955
        %2957 = vdwg.mxu0
        %2958 = vmatpush.bf16.msra.mxu0 %v1284
        %2959 = vmatpush.bf16.msra.mxu0 %v1282
        %2960 = vmatpush.bf16.msra.mxu0 %v1280
        %2961 = vmatpush.bf16.msra.mxu0 %v1278
        %2962 = vmatpush.bf16.msra.mxu0 %v1276
        %2963 = vmatpush.bf16.msra.mxu0 %v1274
        %2964 = vmatpush.bf16.msra.mxu0 %v1272
        %2965 = vmatpush.bf16.msra.mxu0 %v1270
        %2966 = vmatmul.bf16.gmra.mxu0 %v2920
        %v2967 = vpop.f32.mrf.mxu0
        %v2968 = vadd.f32 %v2954, %v2967
        %v2969 = vpop.f32.mrf.mxu0
        %v2970 = vadd.f32 %v2956, %v2969
        %2971 = vdwg.mxu0
        %2972 = vmatpush.bf16.msra.mxu0 %v1300
        %2973 = vmatpush.bf16.msra.mxu0 %v1298
        %2974 = vmatpush.bf16.msra.mxu0 %v1296
        %2975 = vmatpush.bf16.msra.mxu0 %v1294
        %2976 = vmatpush.bf16.msra.mxu0 %v1292
        %2977 = vmatpush.bf16.msra.mxu0 %v1290
        %2978 = vmatpush.bf16.msra.mxu0 %v1288
        %2979 = vmatpush.bf16.msra.mxu0 %v1286
        %2980 = vmatmul.bf16.gmra.mxu0 %v2921
        %v2981 = vpop.f32.mrf.mxu0
        %v2982 = vadd.f32 %v2968, %v2981
        %v2983 = vpop.f32.mrf.mxu0
        %v2984 = vadd.f32 %v2970, %v2983
        %2985 = vdwg.mxu0
        %2986 = vmatpush.bf16.msra.mxu0 0
        %2987 = vmatpush.bf16.msra.mxu0 0
        %2988 = vmatpush.bf16.msra.mxu0 0
        %2989 = vmatpush.bf16.msra.mxu0 0
        %2990 = vmatpush.bf16.msra.mxu0 %v1308
        %2991 = vmatpush.bf16.msra.mxu0 %v1306
        %2992 = vmatpush.bf16.msra.mxu0 %v1304
        %2993 = vmatpush.bf16.msra.mxu0 %v1302
        %2994 = vmatmul.bf16.gmra.mxu0 %v2928
        %v2995 = vpop.f32.mrf.mxu0
        %v2996 = vadd.f32 %v2982, %v2995
        %v2997 = vpop.f32.mrf.mxu0
        %v2998 = vadd.f32 %v2984, %v2997
        %2999 = vdwg.mxu0
        %3000 = vmatpush.bf16.msra.mxu0 %v1253
        %3001 = vmatpush.bf16.msra.mxu0 %v1251
        %3002 = vmatpush.bf16.msra.mxu0 %v1249
        %3003 = vmatpush.bf16.msra.mxu0 %v1247
        %3004 = vmatpush.bf16.msra.mxu0 %v1245
        %3005 = vmatpush.bf16.msra.mxu0 %v1243
        %3006 = vmatpush.bf16.msra.mxu0 %v1241
        %3007 = vmatpush.bf16.msra.mxu0 %v1239
        %3008 = vmatmul.bf16.gmra.mxu0 %v2918
        %v3009 = vpop.f32.mrf.mxu0
        %v3010 = vadd.f32 0.0, %v3009
        %v3011 = vpop.f32.mrf.mxu0
        %v3012 = vadd.f32 0.0, %v3011
        %3013 = vdwg.mxu0
        %3014 = vmatpush.bf16.msra.mxu0 %v1269
        %3015 = vmatpush.bf16.msra.mxu0 %v1267
        %3016 = vmatpush.bf16.msra.mxu0 %v1265
        %3017 = vmatpush.bf16.msra.mxu0 %v1263
        %3018 = vmatpush.bf16.msra.mxu0 %v1261
        %3019 = vmatpush.bf16.msra.mxu0 %v1259
        %3020 = vmatpush.bf16.msra.mxu0 %v1257
        %3021 = vmatpush.bf16.msra.mxu0 %v1255
        %3022 = vmatmul.bf16.gmra.mxu0 %v2919
        %v3023 = vpop.f32.mrf.mxu0
        %v3024 = vadd.f32 %v3010, %v3023
        %v3025 = vpop.f32.mrf.mxu0
        %v3026 = vadd.f32 %v3012, %v3025
        %3027 = vdwg.mxu0
        %3028 = vmatpush.bf16.msra.mxu0 %v1285
        %3029 = vmatpush.bf16.msra.mxu0 %v1283
        %3030 = vmatpush.bf16.msra.mxu0 %v1281
        %3031 = vmatpush.bf16.msra.mxu0 %v1279
        %3032 = vmatpush.bf16.msra.mxu0 %v1277
        %3033 = vmatpush.bf16.msra.mxu0 %v1275
        %3034 = vmatpush.bf16.msra.mxu0 %v1273
        %3035 = vmatpush.bf16.msra.mxu0 %v1271
        %3036 = vmatmul.bf16.gmra.mxu0 %v2920
        %v3037 = vpop.f32.mrf.mxu0
        %v3038 = vadd.f32 %v3024, %v3037
        %v3039 = vpop.f32.mrf.mxu0
        %v3040 = vadd.f32 %v3026, %v3039
        %3041 = vdwg.mxu0
        %3042 = vmatpush.bf16.msra.mxu0 %v1301
        %3043 = vmatpush.bf16.msra.mxu0 %v1299
        %3044 = vmatpush.bf16.msra.mxu0 %v1297
        %3045 = vmatpush.bf16.msra.mxu0 %v1295
        %3046 = vmatpush.bf16.msra.mxu0 %v1293
        %3047 = vmatpush.bf16.msra.mxu0 %v1291
        %3048 = vmatpush.bf16.msra.mxu0 %v1289
        %3049 = vmatpush.bf16.msra.mxu0 %v1287
        %3050 = vmatmul.bf16.gmra.mxu0 %v2921
        %v3051 = vpop.f32.mrf.mxu0
        %v3052 = vadd.f32 %v3038, %v3051
        %v3053 = vpop.f32.mrf.mxu0
        %v3054 = vadd.f32 %v3040, %v3053
        %3055 = vdwg.mxu0
        %3056 = vmatpush.bf16.msra.mxu0 0
        %3057 = vmatpush.bf16.msra.mxu0 0
        %3058 = vmatpush.bf16.msra.mxu0 0
        %3059 = vmatpush.bf16.msra.mxu0 0
        %3060 = vmatpush.bf16.msra.mxu0 %v1309
        %3061 = vmatpush.bf16.msra.mxu0 %v1307
        %3062 = vmatpush.bf16.msra.mxu0 %v1305
        %3063 = vmatpush.bf16.msra.mxu0 %v1303
        %3064 = vmatmul.bf16.gmra.mxu0 %v2928
        %v3065 = vpop.f32.mrf.mxu0
        %v3066 = vadd.f32 %v3052, %v3065
        %v3067 = vpop.f32.mrf.mxu0
        %v3068 = vadd.f32 %v3054, %v3067
        %3069 = vdwg.mxu0
        %v3070 = vld [vmem:[%s6 + $0x10] sm:$0xff]
        %v3071 = vld [vmem:[%s6 + $0x18] sm:$0xff]
        %v3072 = vld [vmem:[%s7 + $0x10] sm:$0xff]
        %v3073 = vld [vmem:[%s7 + $0x18] sm:$0xff]
        %3075 = vset.pattern.permute.xlu0 0
        %3076 = vperm.xlu0 %3075, %v3070
        %v3077 = vpop.permute.xlu0 %3076
        %3080 = vset.pattern.permute.xlu0 0
        %3081 = vperm.xlu0 %3080, %v3071
        %v3082 = vpop.permute.xlu0 %3081
        %v3084 = vmul.f32 %v2996, %v3077
        %v3085 = vmul.f32 %v3066, %v3077
        %v3086 = vmul.f32 %v2998, %v3082
        %v3087 = vmul.f32 %v3068, %v3082
        %3089 = vset.pattern.permute.xlu0 0
        %3090 = vperm.xlu0 %3089, %v3072
        %v3091 = vpop.permute.xlu0 %3090
        %3094 = vset.pattern.permute.xlu0 0
        %3095 = vperm.xlu0 %3094, %v3073
        %v3096 = vpop.permute.xlu0 %3095
        %v3098 = vadd.f32 %v3084, %v3091
        %v3099 = vadd.f32 %v3085, %v3091
        %v3100 = vadd.f32 %v3086, %v3096
        %v3101 = vadd.f32 %v3087, %v3096
        %v3102 = vmax.f32 %v3098, 0.0
        %v3103 = vmax.f32 %v3099, 0.0
        %v3104 = vmax.f32 %v3100, 0.0
        %v3105 = vmax.f32 %v3101, 0.0
        %3106 = vmatpush.xpose.msra.mxu0 0.0
        %3107 = vmatpush.xpose.msra.mxu0 0.0
        %3108 = vmatpush.xpose.msra.mxu0 0.0
        %3109 = vmatpush.xpose.msra.mxu0 0.0
        %3110 = vmatpush.xpose.msra.mxu0 0.0
        %3111 = vmatpush.xpose.msra.mxu0 0.0
        %3112 = vmatpush.xpose.msra.mxu0 0.0
        %3113 = vmatpush.xpose.msra.mxu0 0.0
        %3114 = vmatpush.xpose.msra.mxu0 0.0
        %3115 = vmatpush.xpose.msra.mxu0 0.0
        %3116 = vmatpush.xpose.msra.mxu0 0.0
        %3117 = vmatpush.xpose.msra.mxu0 0.0
        %3118 = vmatpush.xpose.msra.mxu0 0.0
        %3119 = vmatpush.xpose.msra.mxu0 0.0
        %3120 = vmatpush.xpose.msra.mxu0 %v3104
        %3121 = vmatpush.xpose.msra.mxu0 %v3102
        %3122 = vmatmul.f32.gmra.mxu0 %v3102
        %v3123 = vpop.f32.mrf.mxu0
        %v3124 = vadd.f32 0.0, %v3123
        %3125 = vmatmul.f32.gmra.mxu0 %v3104
        %v3126 = vpop.f32.mrf.mxu0
        %v3127 = vadd.f32 0.0, %v3126
        %3128 = vdwg.mxu0
        %3129 = vmatpush.xpose.msra.mxu0 0.0
        %3130 = vmatpush.xpose.msra.mxu0 0.0
        %3131 = vmatpush.xpose.msra.mxu0 0.0
        %3132 = vmatpush.xpose.msra.mxu0 0.0
        %3133 = vmatpush.xpose.msra.mxu0 0.0
        %3134 = vmatpush.xpose.msra.mxu0 0.0
        %3135 = vmatpush.xpose.msra.mxu0 0.0
        %3136 = vmatpush.xpose.msra.mxu0 0.0
        %3137 = vmatpush.xpose.msra.mxu0 0.0
        %3138 = vmatpush.xpose.msra.mxu0 0.0
        %3139 = vmatpush.xpose.msra.mxu0 0.0
        %3140 = vmatpush.xpose.msra.mxu0 0.0
        %3141 = vmatpush.xpose.msra.mxu0 0.0
        %3142 = vmatpush.xpose.msra.mxu0 0.0
        %3143 = vmatpush.xpose.msra.mxu0 %v3105
        %3144 = vmatpush.xpose.msra.mxu0 %v3103
        %3145 = vmatmul.f32.gmra.mxu0 %v3103
        %v3146 = vpop.f32.mrf.mxu0
        %v3147 = vadd.f32 %v3124, %v3146
        %3148 = vmatmul.f32.gmra.mxu0 %v3105
        %v3149 = vpop.f32.mrf.mxu0
        %v3150 = vadd.f32 %v3127, %v3149
        %3151 = vdwg.mxu0
        %v3152 = vsel %vm623, %v3147, -inf
        %3153 = vmax.xlane.f32.xlu0 %v3152
        %v3154 = vpop.xlane.xlu0 %3153
        %v3155 = vsel %vm623, %v3150, -inf
        %3156 = vmax.xlane.f32.xlu0 %v3155
        %v3157 = vpop.xlane.xlu0 %3156
        %v3158 = vsub.f32 %v3154, %v3147
        %v3159 = vsub.f32 %v3157, %v3150
        %v3160 = vsel %vm623, %v3158, -inf
        %3161 = vmax.xlane.f32.xlu0 %v3160
        %v3162 = vpop.xlane.xlu0 %3161
        %v3163 = vsel %vm623, %v3159, -inf
        %3164 = vmax.xlane.f32.xlu0 %v3163
        %v3165 = vpop.xlane.xlu0 %3164
        %v3166 = vsub.f32 %v3158, %v3162
        %v3167 = vsub.f32 %v3159, %v3165
        %v3168 = vmul.f32 %v3166, 1.442695
        %v3169 = vpow.pop %v3168
        %v3170 = vmul.f32 %v3167, 1.442695
        %v3171 = vpow.pop %v3170
        %v3172 = vsel %vm623, %v3169, 0.0
        %3173 = vadd.xlane.f32.xlu0 %v3172
        %v3174 = vpop.xlane.xlu0 %3173
        %v3175 = vsel %vm623, %v3171, 0.0
        %3176 = vadd.xlane.f32.xlu0 %v3175
        %v3177 = vpop.xlane.xlu0 %3176
        %v3178 = vrcp.pop %v3174
        %v3179 = vrcp.pop %v3177
        %v3180 = vmul.f32 %v3169, %v3178
        %v3181 = vmul.f32 %v3171, %v3179
        %v3183 = vsel %vm623, %v3180, 0
        %v3186 = vsel %vm623, %v3181, 0
        %3188 = vmatpush.msra.mxu0 0.0
        %3189 = vmatpush.msra.mxu0 0.0
        %3190 = vmatpush.msra.mxu0 0.0
        %3191 = vmatpush.msra.mxu0 0.0
        %3192 = vmatpush.msra.mxu0 0.0
        %3193 = vmatpush.msra.mxu0 0.0
        %3194 = vmatpush.msra.mxu0 0.0
        %3195 = vmatpush.msra.mxu0 0.0
        %3196 = vmatpush.msra.mxu0 0.0
        %3197 = vmatpush.msra.mxu0 0.0
        %3198 = vmatpush.msra.mxu0 0.0
        %3199 = vmatpush.msra.mxu0 0.0
        %3200 = vmatpush.msra.mxu0 0.0
        %3201 = vmatpush.msra.mxu0 0.0
        %3202 = vmatpush.msra.mxu0 %v3104
        %3203 = vmatpush.msra.mxu0 %v3102
        %3204 = vmatmul.f32.gmra.mxu0 %v3183
        %v3205 = vpop.f32.mrf.mxu0
        %v3206 = vadd.f32 0.0, %v3205
        %3207 = vmatmul.f32.gmra.mxu0 %v3186
        %v3208 = vpop.f32.mrf.mxu0
        %v3209 = vadd.f32 0.0, %v3208
        %3210 = vdwg.mxu0
        %3211 = vmatpush.msra.mxu0 0.0
        %3212 = vmatpush.msra.mxu0 0.0
        %3213 = vmatpush.msra.mxu0 0.0
        %3214 = vmatpush.msra.mxu0 0.0
        %3215 = vmatpush.msra.mxu0 0.0
        %3216 = vmatpush.msra.mxu0 0.0
        %3217 = vmatpush.msra.mxu0 0.0
        %3218 = vmatpush.msra.mxu0 0.0
        %3219 = vmatpush.msra.mxu0 0.0
        %3220 = vmatpush.msra.mxu0 0.0
        %3221 = vmatpush.msra.mxu0 0.0
        %3222 = vmatpush.msra.mxu0 0.0
        %3223 = vmatpush.msra.mxu0 0.0
        %3224 = vmatpush.msra.mxu0 0.0
        %3225 = vmatpush.msra.mxu0 %v3105
        %3226 = vmatpush.msra.mxu0 %v3103
        %3227 = vmatmul.f32.gmra.mxu0 %v3183
        %v3228 = vpop.f32.mrf.mxu0
        %v3229 = vadd.f32 0.0, %v3228
        %3230 = vmatmul.f32.gmra.mxu0 %v3186
        %v3231 = vpop.f32.mrf.mxu0
        %v3232 = vadd.f32 0.0, %v3231
        %3233 = vdwg.mxu0
        %s3234 = sld [smem:[#allocation2 + $0x1]]
        %v3235 = vstv %s3234
        %v3236 = vmul.f32 %v3235, %v3206
        %v3237 = vmul.f32 %v3235, %v3229
        %v3238 = vmul.f32 %v3235, %v3209
        %v3239 = vmul.f32 %v3235, %v3232
        %v3240 = vadd.f32 %v3236, %v3102
        %v3241 = vadd.f32 %v3237, %v3103
        %v3242 = vadd.f32 %v3238, %v3104
        %v3243 = vadd.f32 %v3239, %v3105
        %3246 = vrot.lane.b32.xlu0 %v3241, 17
        %v3247 = vpop.permute.xlu0 %3246
        %3248 = vrot.lane.b32.xlu0 %v3243, 17
        %v3249 = vpop.permute.xlu0 %3248
        %3254 = vrot.lane.b32.xlu0 %v3240, 17
        %v3255 = vpop.permute.xlu0 %3254
        %3256 = vrot.lane.b32.xlu0 %v3242, 17
        %v3257 = vpop.permute.xlu0 %3256
        %v3258 = vsel %vm532, %v3255, %v3247
        %v3259 = vsel %vm532, %v3257, %v3249
        %v3264 = vsel %vm532, %v3247, %v3255
        %v3265 = vsel %vm532, %v3249, %v3257
        %v3266 = vmul.f32 %v3264, %v565
        %v3267 = vmul.f32 %v3258, %v566
        %v3268 = vmul.f32 %v3265, %v565
        %v3269 = vmul.f32 %v3259, %v566
        %3270 = vrot.lane.b32.xlu0 %v3241, 16
        %v3271 = vpop.permute.xlu0 %3270
        %3272 = vrot.lane.b32.xlu0 %v3243, 16
        %v3273 = vpop.permute.xlu0 %3272
        %3276 = vrot.lane.b32.xlu0 %v3240, 16
        %v3277 = vpop.permute.xlu0 %3276
        %3278 = vrot.lane.b32.xlu0 %v3242, 16
        %v3279 = vpop.permute.xlu0 %3278
        %v3280 = vsel %vm623, %v3277, %v3271
        %v3281 = vsel %vm623, %v3279, %v3273
        %v3286 = vsel %vm623, %v3271, %v3277
        %v3287 = vsel %vm623, %v3273, %v3279
        %v3288 = vmul.f32 %v3286, %v656
        %v3289 = vmul.f32 %v3280, %v657
        %v3290 = vmul.f32 %v3287, %v656
        %v3291 = vmul.f32 %v3281, %v657
        %3292 = vrot.lane.b32.xlu0 %v3241, 15
        %v3293 = vpop.permute.xlu0 %3292
        %3294 = vrot.lane.b32.xlu0 %v3243, 15
        %v3295 = vpop.permute.xlu0 %3294
        %3298 = vrot.lane.b32.xlu0 %v3240, 15
        %v3299 = vpop.permute.xlu0 %3298
        %3300 = vrot.lane.b32.xlu0 %v3242, 15
        %v3301 = vpop.permute.xlu0 %3300
        %v3302 = vsel %vm714, %v3299, %v3293
        %v3303 = vsel %vm714, %v3301, %v3295
        %v3308 = vsel %vm714, %v3293, %v3299
        %v3309 = vsel %vm714, %v3295, %v3301
        %v3310 = vmul.f32 %v3308, %v747
        %v3311 = vmul.f32 %v3302, %v748
        %v3312 = vmul.f32 %v3309, %v747
        %v3313 = vmul.f32 %v3303, %v748
        %3314 = vrot.lane.b32.xlu0 %v3241, 1
        %v3315 = vpop.permute.xlu0 %3314
        %3316 = vrot.lane.b32.xlu0 %v3243, 1
        %v3317 = vpop.permute.xlu0 %3316
        %3320 = vrot.lane.b32.xlu0 %v3240, 1
        %v3321 = vpop.permute.xlu0 %3320
        %3322 = vrot.lane.b32.xlu0 %v3242, 1
        %v3323 = vpop.permute.xlu0 %3322
        %v3324 = vsel %vm805, %v3321, %v3315
        %v3325 = vsel %vm805, %v3323, %v3317
        %v3330 = vsel %vm805, %v3315, %v3321
        %v3331 = vsel %vm805, %v3317, %v3323
        %v3332 = vmul.f32 %v3330, %v838
        %v3333 = vmul.f32 %v3324, %v839
        %v3334 = vmul.f32 %v3331, %v838
        %v3335 = vmul.f32 %v3325, %v839
        %v3336 = vmul.f32 %v3240, %v856
        %v3337 = vmul.f32 %v3241, %v857
        %v3338 = vmul.f32 %v3242, %v856
        %v3339 = vmul.f32 %v3243, %v857
        %3340 = vrot.lane.b32.xlu0 %v3240, 127
        %v3341 = vpop.permute.xlu0 %3340
        %3342 = vrot.lane.b32.xlu0 %v3241, 127
        %v3343 = vpop.permute.xlu0 %3342
        %3344 = vrot.lane.b32.xlu0 %v3242, 127
        %v3345 = vpop.permute.xlu0 %3344
        %3346 = vrot.lane.b32.xlu0 %v3243, 127
        %v3347 = vpop.permute.xlu0 %3346
        %v3348 = vsel %vm906, %v3341, %v3343
        %v3349 = vsel %vm906, %v3345, %v3347
        %v3356 = vsel %vm906, %v3343, %v3341
        %v3357 = vsel %vm906, %v3347, %v3345
        %v3358 = vmul.f32 %v3348, %v947
        %v3359 = vmul.f32 %v3356, %v948
        %v3360 = vmul.f32 %v3349, %v947
        %v3361 = vmul.f32 %v3357, %v948
        %3362 = vrot.lane.b32.xlu0 %v3240, 113
        %v3363 = vpop.permute.xlu0 %3362
        %3364 = vrot.lane.b32.xlu0 %v3241, 113
        %v3365 = vpop.permute.xlu0 %3364
        %3366 = vrot.lane.b32.xlu0 %v3242, 113
        %v3367 = vpop.permute.xlu0 %3366
        %3368 = vrot.lane.b32.xlu0 %v3243, 113
        %v3369 = vpop.permute.xlu0 %3368
        %v3370 = vsel %vm997, %v3363, %v3365
        %v3371 = vsel %vm997, %v3367, %v3369
        %v3378 = vsel %vm997, %v3365, %v3363
        %v3379 = vsel %vm997, %v3369, %v3367
        %v3380 = vmul.f32 %v3370, %v1038
        %v3381 = vmul.f32 %v3378, %v1039
        %v3382 = vmul.f32 %v3371, %v1038
        %v3383 = vmul.f32 %v3379, %v1039
        %3384 = vrot.lane.b32.xlu0 %v3240, 112
        %v3385 = vpop.permute.xlu0 %3384
        %3386 = vrot.lane.b32.xlu0 %v3241, 112
        %v3387 = vpop.permute.xlu0 %3386
        %3388 = vrot.lane.b32.xlu0 %v3242, 112
        %v3389 = vpop.permute.xlu0 %3388
        %3390 = vrot.lane.b32.xlu0 %v3243, 112
        %v3391 = vpop.permute.xlu0 %3390
        %v3392 = vsel %vm1088, %v3385, %v3387
        %v3393 = vsel %vm1088, %v3389, %v3391
        %v3400 = vsel %vm1088, %v3387, %v3385
        %v3401 = vsel %vm1088, %v3391, %v3389
        %v3402 = vmul.f32 %v3392, %v1129
        %v3403 = vmul.f32 %v3400, %v1130
        %v3404 = vmul.f32 %v3393, %v1129
        %v3405 = vmul.f32 %v3401, %v1130
        %3406 = vrot.lane.b32.xlu0 %v3240, 111
        %v3407 = vpop.permute.xlu0 %3406
        %3408 = vrot.lane.b32.xlu0 %v3241, 111
        %v3409 = vpop.permute.xlu0 %3408
        %3410 = vrot.lane.b32.xlu0 %v3242, 111
        %v3411 = vpop.permute.xlu0 %3410
        %3412 = vrot.lane.b32.xlu0 %v3243, 111
        %v3413 = vpop.permute.xlu0 %3412
        %v3414 = vsel %vm1179, %v3407, %v3409
        %v3415 = vsel %vm1179, %v3411, %v3413
        %v3422 = vsel %vm1179, %v3409, %v3407
        %v3423 = vsel %vm1179, %v3413, %v3411
        %v3424 = vmul.f32 %v3414, %v1220
        %v3425 = vmul.f32 %v3422, %v1221
        %v3426 = vmul.f32 %v3415, %v1220
        %v3427 = vmul.f32 %v3423, %v1221
        %v3428 = vpack.c.bf16 %v3268, %v3266
        %v3429 = vpack.c.bf16 %v3269, %v3267
        %v3430 = vpack.c.bf16 %v3290, %v3288
        %v3431 = vpack.c.bf16 %v3291, %v3289
        %v3432 = vpack.c.bf16 %v3312, %v3310
        %v3433 = vpack.c.bf16 %v3313, %v3311
        %v3434 = vpack.c.bf16 %v3334, %v3332
        %v3435 = vpack.c.bf16 %v3335, %v3333
        %v3436 = vpack.c.bf16 %v3338, %v3336
        %v3437 = vpack.c.bf16 %v3339, %v3337
        %v3438 = vpack.c.bf16 %v3360, %v3358
        %v3439 = vpack.c.bf16 %v3361, %v3359
        %v3440 = vpack.c.bf16 %v3382, %v3380
        %v3441 = vpack.c.bf16 %v3383, %v3381
        %v3442 = vpack.c.bf16 %v3404, %v3402
        %v3443 = vpack.c.bf16 %v3405, %v3403
        %v3444 = vpack.c.bf16 %v3426, %v3424
        %v3445 = vpack.c.bf16 %v3427, %v3425
        %v3446 = vld [vmem:[%s5] sm:$0xff]
        %v3447 = vld [vmem:[%s5 + $0x8] sm:$0xff]
        %v3450 = vunpack.c.l.b16 %v3446
        %v3451 = vunpack.c.h.b16 %v3446
        %v3452 = vunpack.c.l.b16 %v3447
        %v3453 = vunpack.c.h.b16 %v3447
        %v3454 = vpack.c.b16 %v3452, %v3450
        %v3455 = vpack.c.b16 %v3453, %v3451
        %v3458 = vsel %vm623, %v3455, 0
        %3460 = vmatpush.bf16.msra.mxu0 %v3442
        %3461 = vmatpush.bf16.msra.mxu0 %v3440
        %3462 = vmatpush.bf16.msra.mxu0 %v3438
        %3463 = vmatpush.bf16.msra.mxu0 %v3436
        %3464 = vmatpush.bf16.msra.mxu0 %v3434
        %3465 = vmatpush.bf16.msra.mxu0 %v3432
        %3466 = vmatpush.bf16.msra.mxu0 %v3430
        %3467 = vmatpush.bf16.msra.mxu0 %v3428
        %3468 = vmatmul.bf16.gmra.mxu0 %v3454
        %v3469 = vpop.f32.mrf.mxu0
        %v3470 = vadd.f32 0.0, %v3469
        %v3471 = vpop.f32.mrf.mxu0
        %v3472 = vadd.f32 0.0, %v3471
        %3473 = vdwg.mxu0
        %3474 = vmatpush.bf16.msra.mxu0 0
        %3475 = vmatpush.bf16.msra.mxu0 0
        %3476 = vmatpush.bf16.msra.mxu0 0
        %3477 = vmatpush.bf16.msra.mxu0 0
        %3478 = vmatpush.bf16.msra.mxu0 0
        %3479 = vmatpush.bf16.msra.mxu0 0
        %3480 = vmatpush.bf16.msra.mxu0 0
        %3481 = vmatpush.bf16.msra.mxu0 %v3444
        %3482 = vmatmul.bf16.gmra.mxu0 %v3458
        %v3483 = vpop.f32.mrf.mxu0
        %v3484 = vadd.f32 %v3470, %v3483
        %v3485 = vpop.f32.mrf.mxu0
        %v3486 = vadd.f32 %v3472, %v3485
        %3487 = vdwg.mxu0
        %3488 = vmatpush.bf16.msra.mxu0 %v3443
        %3489 = vmatpush.bf16.msra.mxu0 %v3441
        %3490 = vmatpush.bf16.msra.mxu0 %v3439
        %3491 = vmatpush.bf16.msra.mxu0 %v3437
        %3492 = vmatpush.bf16.msra.mxu0 %v3435
        %3493 = vmatpush.bf16.msra.mxu0 %v3433
        %3494 = vmatpush.bf16.msra.mxu0 %v3431
        %3495 = vmatpush.bf16.msra.mxu0 %v3429
        %3496 = vmatmul.bf16.gmra.mxu0 %v3454
        %v3497 = vpop.f32.mrf.mxu0
        %v3498 = vadd.f32 0.0, %v3497
        %v3499 = vpop.f32.mrf.mxu0
        %v3500 = vadd.f32 0.0, %v3499
        %3501 = vdwg.mxu0
        %3502 = vmatpush.bf16.msra.mxu0 0
        %3503 = vmatpush.bf16.msra.mxu0 0
        %3504 = vmatpush.bf16.msra.mxu0 0
        %3505 = vmatpush.bf16.msra.mxu0 0
        %3506 = vmatpush.bf16.msra.mxu0 0
        %3507 = vmatpush.bf16.msra.mxu0 0
        %3508 = vmatpush.bf16.msra.mxu0 0
        %3509 = vmatpush.bf16.msra.mxu0 %v3445
        %3510 = vmatmul.bf16.gmra.mxu0 %v3458
        %v3511 = vpop.f32.mrf.mxu0
        %v3512 = vadd.f32 %v3498, %v3511
        %v3513 = vpop.f32.mrf.mxu0
        %v3514 = vadd.f32 %v3500, %v3513
        %3515 = vdwg.mxu0
        %v3516 = vld [vmem:[%s6 + $0x30] sm:$0xff]
        %v3517 = vld [vmem:[%s6 + $0x38] sm:$0xff]
        %v3518 = vld [vmem:[%s7 + $0x30] sm:$0xff]
        %v3519 = vld [vmem:[%s7 + $0x38] sm:$0xff]
        %3521 = vset.pattern.permute.xlu0 0
        %3522 = vperm.xlu0 %3521, %v3516
        %v3523 = vpop.permute.xlu0 %3522
        %3526 = vset.pattern.permute.xlu0 0
        %3527 = vperm.xlu0 %3526, %v3517
        %v3528 = vpop.permute.xlu0 %3527
        %v3530 = vmul.f32 %v3484, %v3523
        %v3531 = vmul.f32 %v3512, %v3523
        %v3532 = vmul.f32 %v3486, %v3528
        %v3533 = vmul.f32 %v3514, %v3528
        %3535 = vset.pattern.permute.xlu0 0
        %3536 = vperm.xlu0 %3535, %v3518
        %v3537 = vpop.permute.xlu0 %3536
        %3540 = vset.pattern.permute.xlu0 0
        %3541 = vperm.xlu0 %3540, %v3519
        %v3542 = vpop.permute.xlu0 %3541
        %v3544 = vadd.f32 %v3530, %v3537
        %v3545 = vadd.f32 %v3531, %v3537
        %v3546 = vadd.f32 %v3532, %v3542
        %v3547 = vadd.f32 %v3533, %v3542
        %v3548 = vmax.f32 %v3544, 0.0
        %v3549 = vmax.f32 %v3545, 0.0
        %v3550 = vmax.f32 %v3546, 0.0
        %v3551 = vmax.f32 %v3547, 0.0
        %v3552 = vadd.f32 %v2892, %v3548
        %v3553 = vadd.f32 %v2893, %v3549
        %v3554 = vadd.f32 %v2894, %v3550
        %v3555 = vadd.f32 %v2895, %v3551
        %v3556 = vld [vmem:[%s10] sm:$0xff]
        %v3557 = vld [vmem:[%s11] sm:$0xff]
        %3559 = vset.pattern.permute.xlu0 0
        %3560 = vperm.xlu0 %3559, %v3557
        %v3561 = vpop.permute.xlu0 %3560
        %v3564 = vsel %vm623, %v3556, 0
        %3566 = vmatpush.msra.mxu0 0.0
        %3567 = vmatpush.msra.mxu0 0.0
        %3568 = vmatpush.msra.mxu0 0.0
        %3569 = vmatpush.msra.mxu0 0.0
        %3570 = vmatpush.msra.mxu0 0.0
        %3571 = vmatpush.msra.mxu0 0.0
        %3572 = vmatpush.msra.mxu0 0.0
        %3573 = vmatpush.msra.mxu0 0.0
        %3574 = vmatpush.msra.mxu0 0.0
        %3575 = vmatpush.msra.mxu0 0.0
        %3576 = vmatpush.msra.mxu0 0.0
        %3577 = vmatpush.msra.mxu0 0.0
        %3578 = vmatpush.msra.mxu0 0.0
        %3579 = vmatpush.msra.mxu0 0.0
        %3580 = vmatpush.msra.mxu0 %v3554
        %3581 = vmatpush.msra.mxu0 %v3552
        %3582 = vmatmul.f32.gmra.mxu0 %v3564
        %v3583 = vpop.f32.mrf.mxu0
        %v3584 = vadd.f32 %v3561, %v3583
        %3585 = vdwg.mxu0
        %3586 = vmatpush.msra.mxu0 0.0
        %3587 = vmatpush.msra.mxu0 0.0
        %3588 = vmatpush.msra.mxu0 0.0
        %3589 = vmatpush.msra.mxu0 0.0
        %3590 = vmatpush.msra.mxu0 0.0
        %3591 = vmatpush.msra.mxu0 0.0
        %3592 = vmatpush.msra.mxu0 0.0
        %3593 = vmatpush.msra.mxu0 0.0
        %3594 = vmatpush.msra.mxu0 0.0
        %3595 = vmatpush.msra.mxu0 0.0
        %3596 = vmatpush.msra.mxu0 0.0
        %3597 = vmatpush.msra.mxu0 0.0
        %3598 = vmatpush.msra.mxu0 0.0
        %3599 = vmatpush.msra.mxu0 0.0
        %3600 = vmatpush.msra.mxu0 %v3555
        %3601 = vmatpush.msra.mxu0 %v3553
        %3602 = vmatmul.f32.gmra.mxu0 %v3564
        %v3603 = vpop.f32.mrf.mxu0
        %v3604 = vadd.f32 %v3561, %v3603
        %3605 = vdwg.mxu0
        %3606 = vst [vmem:[%s454] sm:$0xff] %v3584
        %3607 = vst [vmem:[%s454 + $0x8] sm:$0xff] %v3604
        %p3608 = scmp.lt.s32.totalorder %s25, 1
        %s3609 = scalar_select %p3608, %s25, 1
        %s3610 = smul.addr %s3609, 2
        %s3611 = smul.addr %s3610, 8
        %s3612 = scalar_lea.vmem %s13, %s3611
        // Predicated region
        $region77: #{danet_head_forward.1} parent=71 // pred_check
          %p3613 = pneg %p321
        $region78: #{danet_head_forward.1} parent=71 // pred_check_branch
          %3615 = sbr.rel (%p3613) target = $region80
        $region79: #{danet_head_forward.1} parent=71 // pred_region
          _
        $region80: #{danet_head_forward.1} parent=71 // pred_fallthru
          _
      $region72: #{danet_head_forward.1} parent=5 // pred_fallthru
        _
      %p3616 = scmp.le.s32.totalorder 2, %s20
      // Predicated region
      $region81: #{danet_head_forward.1} parent=5 // pred_check
        %p3617 = pneg %p3616
      $region82: #{danet_head_forward.1} parent=5 // pred_check_branch
        %3619 = sbr.rel (%p3617) target = $region84
      $region83: #{danet_head_forward.1} parent=5 // pred_region
        %s3620 = ssub.s32 %s20, 2
        // Predicated region
        $region85: #{danet_head_forward.1} parent=83 // pred_check
          %p3621 = pneg %p327
        $region86: #{danet_head_forward.1} parent=83 // pred_check_branch
          %3623 = sbr.rel (%p3621) target = $region88
        $region87: #{danet_head_forward.1} parent=83 // pred_region
          %p3624 = scmp.lt.s32.totalorder %s26, 1
          %s3625 = scalar_select %p3624, %s26, 1
          %s3626 = smul.addr %s3625, 2
          %s3627 = smul.addr %s3626, 8
          %s3628 = scalar_lea.vmem %s13, %s3627
        $region88: #{danet_head_forward.1} parent=83 // pred_fallthru
          _
      $region84: #{danet_head_forward.1} parent=5 // pred_fallthru
        _
    $region6: #{danet_head_forward.1} parent=1 // loop_footer
      %s24 = sadd.s32 1, %s20
    $region7: #{danet_head_forward.1} parent=1 // loop_footer_branch
      %19 = sbr.rel target = $region3
    $region8: #{danet_head_forward.1} parent=1 // loop_exit
      _
    %3629 = vsyncpa [#allocation3], 1
    %s3630 = scalar_lea.sflag [#allocation3], 1
    %3631 = vsyncpa %s3630, 1

</llo_original>
